<compile_context>
chip_gen: v6e
topology: v6e:2x2x1
jax: 0.10.0
libtpu: 0.0.40
codegen_flags: <defaults>
</compile_context>

<pallas_src>
import numpy as np
import jax
import jax.numpy as jnp
from jax.experimental import pallas as pl
from jax.experimental.pallas import tpu as pltpu

# ---- model dims (small but TPU-tile aligned) --------------------------------
D_MODEL = 128
NUM_HEAD = 4
D_FF = 256
HEAD_DIM = D_MODEL // NUM_HEAD
BATCH = 2
SEQ = 8
LN_EPS = 1e-5


def _layer_norm(h, gamma, beta):
    mu = jnp.mean(h, axis=-1, keepdims=True)
    var = jnp.mean((h - mu) ** 2, axis=-1, keepdims=True)
    return (h - mu) * jax.lax.rsqrt(var + LN_EPS) * gamma + beta


def make_kernel(batch_block, seq, d_model, num_head, d_ff):
    head_dim = d_model // num_head
    scale = 1.0 / float(np.sqrt(head_dim))

    def kernel(x_ref, wqkv_ref, wo_ref, w1_ref, w2_ref, vd_ref, vff_ref,
               out_ref):
        Bb, S, D = batch_block, seq, d_model
        x = x_ref[...].reshape(Bb * S, D)                    # (Bb*S, D) f32

        # --- unpack packed small vectors -------------------------------------
        vd = vd_ref[...]                                     # (8, D) f32
        bq, bk, bv, bo = vd[0:1], vd[1:2], vd[2:3], vd[3:4]
        g1, be1, g2, be2 = vd[4:5], vd[5:6], vd[6:7], vd[7:8]
        vff = vff_ref[...]                                   # (2, d_ff) f32
        b1 = vff[0:1]                                        # (1, d_ff)
        b2 = vff[1:2, :D]                                    # (1, D)

        # --- fused QKV projection (one weight-stationary MXU pass) -----------
        wqkv = wqkv_ref[...].astype(jnp.float32)             # bf16 -> f32
        qkv = jnp.dot(x, wqkv, preferred_element_type=jnp.float32)  # (Bb*S, 3D)
        q = qkv[:, 0 * D:1 * D] + bq
        k = qkv[:, 1 * D:2 * D] + bk
        v = qkv[:, 2 * D:3 * D] + bv

        wo = wo_ref[...].astype(jnp.float32)                 # (D, D)

        # --- per-(batch, head) attention; accumulate output projection -------
        attn_blocks = []
        for b in range(Bb):                                  # static loops
            rows = slice(b * S, (b + 1) * S)
            acc = jnp.zeros((S, D), jnp.float32)
            for h in range(num_head):
                cols = slice(h * head_dim, (h + 1) * head_dim)
                qh, kh, vh = q[rows, cols], k[rows, cols], v[rows, cols]
                # contract both operands on their last dim (no transpose)
                s = jax.lax.dot_general(
                    qh, kh, (((1,), (1,)), ((), ())),
                    preferred_element_type=jnp.float32) * scale
                # TODO(synk): encoding_mask=None path only; masked attention
                #             not wired.
                s = s - jnp.max(s, axis=-1, keepdims=True)
                p = jnp.exp(s)
                p = p * pl.reciprocal(jnp.sum(p, axis=-1, keepdims=True),
                                      approx=True)
                ho = jnp.dot(p, vh, preferred_element_type=jnp.float32)
                acc = acc + jnp.dot(ho, wo[cols, :],
                                    preferred_element_type=jnp.float32)
            attn_blocks.append(acc)
        attn = (attn_blocks[0] if Bb == 1
                else jnp.concatenate(attn_blocks, axis=0)) + bo

        # --- residual + LayerNorm 1 -------------------------------------------
        h1 = _layer_norm(x + attn, g1, be1)

        # --- position-wise feed-forward (dropout = identity in eval) ----------
        w1 = w1_ref[...].astype(jnp.float32)
        w2 = w2_ref[...].astype(jnp.float32)
        ff = jnp.dot(h1, w1, preferred_element_type=jnp.float32) + b1
        ff = jnp.maximum(ff, 0.0)
        ff = jnp.dot(ff, w2, preferred_element_type=jnp.float32) + b2

        # --- residual + LayerNorm 2 --------------------------------------------
        out = _layer_norm(h1 + ff, g2, be2)
        out_ref[...] = out.reshape(Bb, S, D)

    return kernel


def _default_batch_block(B):
    # v7x has 2 TensorCores/chip: keep the batch as a parallel grid axis so
    # each core takes one batch element.  Single-TC chips (v5e/v6e): collapse
    # the batch grid into one kernel invocation (grid steps are a serial loop).
    try:
        kind = jax.devices()[0].device_kind.lower()
        if ("v7" in kind or "7x" in kind) and B > 1:
            return 1
    except Exception:
        pass
    return B


def encoder_block(x, packed_params, *, batch_block=None):
    B, S, D = x.shape
    if batch_block is None:
        batch_block = _default_batch_block(B)
    assert B % batch_block == 0
    grid = (B // batch_block,)

    kernel = make_kernel(batch_block, S, D, NUM_HEAD, D_FF)

    def full_spec(a):
        nd = a.ndim
        return pl.BlockSpec(a.shape, lambda b, _nd=nd: (0,) * _nd)

    in_specs = [pl.BlockSpec((batch_block, S, D), lambda b: (b, 0, 0))]
    in_specs += [full_spec(p) for p in packed_params]

    return pl.pallas_call(
        kernel,
        out_shape=jax.ShapeDtypeStruct((B, S, D), jnp.float32),
        grid_spec=pltpu.PrefetchScalarGridSpec(
            num_scalar_prefetch=0,
            grid=grid,
            in_specs=in_specs,
            out_specs=pl.BlockSpec((batch_block, S, D), lambda b: (b, 0, 0)),
        ),
        compiler_params=pltpu.CompilerParams(
            dimension_semantics=("parallel",)),
    )(x, *packed_params)


# ---- parameter construction / packing ---------------------------------------
def make_params(key):
    ks = jax.random.split(key, 16)

    def dense(k, fan_in, shape):
        return jax.random.normal(k, shape, jnp.float32) / np.sqrt(fan_in)

    wq = dense(ks[0], D_MODEL, (D_MODEL, D_MODEL))
    bq = 0.01 * jax.random.normal(ks[1], (1, D_MODEL), jnp.float32)
    wk = dense(ks[2], D_MODEL, (D_MODEL, D_MODEL))
    bk = 0.01 * jax.random.normal(ks[3], (1, D_MODEL), jnp.float32)
    wv = dense(ks[4], D_MODEL, (D_MODEL, D_MODEL))
    bv = 0.01 * jax.random.normal(ks[5], (1, D_MODEL), jnp.float32)
    wo = dense(ks[6], D_MODEL, (D_MODEL, D_MODEL))
    bo = 0.01 * jax.random.normal(ks[7], (1, D_MODEL), jnp.float32)
    g1 = 1.0 + 0.05 * jax.random.normal(ks[8], (1, D_MODEL), jnp.float32)
    be1 = 0.05 * jax.random.normal(ks[9], (1, D_MODEL), jnp.float32)
    w1 = dense(ks[10], D_MODEL, (D_MODEL, D_FF))
    b1 = 0.01 * jax.random.normal(ks[11], (1, D_FF), jnp.float32)
    w2 = dense(ks[12], D_FF, (D_FF, D_MODEL))
    b2 = 0.01 * jax.random.normal(ks[13], (1, D_MODEL), jnp.float32)
    g2 = 1.0 + 0.05 * jax.random.normal(ks[14], (1, D_MODEL), jnp.float32)
    be2 = 0.05 * jax.random.normal(ks[15], (1, D_MODEL), jnp.float32)
    return (wq, bq, wk, bk, wv, bv, wo, bo, g1, be1, w1, b1, w2, b2, g2, be2)


def pack_params(raw):
    (wq, bq, wk, bk, wv, bv, wo, bo, g1, be1, w1, b1, w2, b2, g2, be2) = raw
    w_qkv = jnp.concatenate([wq, wk, wv], axis=1).astype(jnp.bfloat16)
    wo_b = wo.astype(jnp.bfloat16)
    w1_b = w1.astype(jnp.bfloat16)
    w2_b = w2.astype(jnp.bfloat16)
    # (8, D_MODEL): rows = [bq, bk, bv, bo, g1, be1, g2, be2]
    vec_d = jnp.concatenate([bq, bk, bv, bo, g1, be1, g2, be2], axis=0)
    # (2, D_FF): row0 = b1, row1 = [b2 | 0]
    b2_pad = jnp.concatenate(
        [b2, jnp.zeros((1, D_FF - D_MODEL), jnp.float32)], axis=1)
    vec_ff = jnp.concatenate([b1, b2_pad], axis=0)
    return (w_qkv, wo_b, w1_b, w2_b, vec_d, vec_ff)


# ---- pure-JAX reference (same math, same bf16-quantized weights) ------------
def encoder_block_ref(x, packed):
    w_qkv, wo, w1, w2, vec_d, vec_ff = packed
    w_qkv = w_qkv.astype(jnp.float32)
    wo = wo.astype(jnp.float32)
    w1 = w1.astype(jnp.float32)
    w2 = w2.astype(jnp.float32)
    bq, bk, bv, bo = vec_d[0:1], vec_d[1:2], vec_d[2:3], vec_d[3:4]
    g1, be1, g2, be2 = vec_d[4:5], vec_d[5:6], vec_d[6:7], vec_d[7:8]
    b1 = vec_ff[0:1]
    b2 = vec_ff[1:2, :D_MODEL]
    wq = w_qkv[:, 0 * D_MODEL:1 * D_MODEL]
    wk = w_qkv[:, 1 * D_MODEL:2 * D_MODEL]
    wv = w_qkv[:, 2 * D_MODEL:3 * D_MODEL]

    def per_batch(xb):
        q = xb @ wq + bq
        k = xb @ wk + bk
        v = xb @ wv + bv
        outs = []
        for h in range(NUM_HEAD):
            sl = slice(h * HEAD_DIM, (h + 1) * HEAD_DIM)
            s = (q[:, sl] @ k[:, sl].T) / np.sqrt(HEAD_DIM)
            p = jax.nn.softmax(s, axis=-1)
            outs.append(p @ v[:, sl])
        attn = jnp.concatenate(outs, axis=-1) @ wo + bo
        h1 = _layer_norm(xb + attn, g1, be1)
        ff = jnp.maximum(h1 @ w1 + b1, 0.0) @ w2 + b2
        return _layer_norm(h1 + ff, g2, be2)

    return jax.vmap(per_batch)(x)


if __name__ == "__main__":
    key = jax.random.PRNGKey(0)
    k_x, k_p = jax.random.split(key)
    x = jax.random.normal(k_x, (BATCH, SEQ, D_MODEL), jnp.float32)
    params = pack_params(make_params(k_p))

    out = jax.block_until_ready(encoder_block(x, params))
    ref = jax.block_until_ready(encoder_block_ref(x, params))
    np.testing.assert_allclose(np.asarray(out), np.asarray(ref),
                               rtol=5e-3, atol=5e-3)
    print("KERNEL_OK")
</pallas_src>

<mosaic_0001>
module attributes {stable_mosaic.version = 11 : i64} {
  func.func @kernel(%arg0: i32, %arg1: memref<2x8x128xf32, #tpu.memory_space<vmem>>, %arg2: memref<128x384xbf16, #tpu.memory_space<vmem>>, %arg3: memref<128x128xbf16, #tpu.memory_space<vmem>>, %arg4: memref<128x256xbf16, #tpu.memory_space<vmem>>, %arg5: memref<256x128xbf16, #tpu.memory_space<vmem>>, %arg6: memref<8x128xf32, #tpu.memory_space<vmem>>, %arg7: memref<2x256xf32, #tpu.memory_space<vmem>>, %arg8: memref<2x8x128xf32, #tpu.memory_space<vmem>>) attributes {dimension_semantics = [#tpu.dimension_semantics<parallel>], iteration_bounds = array<i64: 1>, scalar_prefetch = 0 : i64, scratch_operands = 0 : i64, tpu.core_type = #tpu.core_type<tc>, window_params = [{transform_indices = @transform_0, window_bounds = array<i64: 2, 8, 128>}, {pipeline_mode = #tpu.pipeline_mode<synchronous>, transform_indices = @transform_1, window_bounds = array<i64: 128, 384>}, {pipeline_mode = #tpu.pipeline_mode<synchronous>, transform_indices = @transform_2, window_bounds = array<i64: 128, 128>}, {pipeline_mode = #tpu.pipeline_mode<synchronous>, transform_indices = @transform_3, window_bounds = array<i64: 128, 256>}, {pipeline_mode = #tpu.pipeline_mode<synchronous>, transform_indices = @transform_4, window_bounds = array<i64: 256, 128>}, {pipeline_mode = #tpu.pipeline_mode<synchronous>, transform_indices = @transform_5, window_bounds = array<i64: 8, 128>}, {pipeline_mode = #tpu.pipeline_mode<synchronous>, transform_indices = @transform_6, window_bounds = array<i64: 2, 256>}, {transform_indices = @transform_7, window_bounds = array<i64: 2, 8, 128>}]} {
    %c0 = arith.constant 0 : index
    %c0_0 = arith.constant 0 : index
    %c0_1 = arith.constant 0 : index
    %0 = vector.load %arg1[%c0, %c0_0, %c0_1] : memref<2x8x128xf32, #tpu.memory_space<vmem>>, vector<2x8x128xf32>
    %1 = vector.shape_cast %0 : vector<2x8x128xf32> to vector<16x128xf32>
    %c0_2 = arith.constant 0 : index
    %c0_3 = arith.constant 0 : index
    %2 = vector.load %arg6[%c0_2, %c0_3] : memref<8x128xf32, #tpu.memory_space<vmem>>, vector<8x128xf32>
    %3 = vector.extract_strided_slice %2 {offsets = [0, 0], sizes = [1, 128], strides = [1, 1]} : vector<8x128xf32> to vector<1x128xf32>
    %4 = vector.extract_strided_slice %2 {offsets = [1, 0], sizes = [1, 128], strides = [1, 1]} : vector<8x128xf32> to vector<1x128xf32>
    %5 = vector.extract_strided_slice %2 {offsets = [2, 0], sizes = [1, 128], strides = [1, 1]} : vector<8x128xf32> to vector<1x128xf32>
    %6 = vector.extract_strided_slice %2 {offsets = [3, 0], sizes = [1, 128], strides = [1, 1]} : vector<8x128xf32> to vector<1x128xf32>
    %7 = vector.extract_strided_slice %2 {offsets = [4, 0], sizes = [1, 128], strides = [1, 1]} : vector<8x128xf32> to vector<1x128xf32>
    %8 = vector.extract_strided_slice %2 {offsets = [5, 0], sizes = [1, 128], strides = [1, 1]} : vector<8x128xf32> to vector<1x128xf32>
    %9 = vector.extract_strided_slice %2 {offsets = [6, 0], sizes = [1, 128], strides = [1, 1]} : vector<8x128xf32> to vector<1x128xf32>
    %10 = vector.extract_strided_slice %2 {offsets = [7, 0], sizes = [1, 128], strides = [1, 1]} : vector<8x128xf32> to vector<1x128xf32>
    %c0_4 = arith.constant 0 : index
    %c0_5 = arith.constant 0 : index
    %11 = vector.load %arg7[%c0_4, %c0_5] : memref<2x256xf32, #tpu.memory_space<vmem>>, vector<2x256xf32>
    %12 = vector.extract_strided_slice %11 {offsets = [0, 0], sizes = [1, 256], strides = [1, 1]} : vector<2x256xf32> to vector<1x256xf32>
    %13 = vector.extract_strided_slice %11 {offsets = [1, 0], sizes = [1, 128], strides = [1, 1]} : vector<2x256xf32> to vector<1x128xf32>
    %c0_6 = arith.constant 0 : index
    %c0_7 = arith.constant 0 : index
    %14 = vector.load %arg2[%c0_6, %c0_7] : memref<128x384xbf16, #tpu.memory_space<vmem>>, vector<128x384xbf16>
    %15 = arith.extf %14 : vector<128x384xbf16> to vector<128x384xf32>
    %cst = arith.constant dense<0.000000e+00> : vector<16x384xf32>
    %16 = tpu.matmul %1, %15, %cst {dimension_numbers = #tpu.dot_dimension_numbers<[1], [0], [0], [1], [0, 0, 1, 1], [], []>} : vector<16x128xf32>, vector<128x384xf32>, vector<16x384xf32> -> vector<16x384xf32>
    %17 = vector.extract_strided_slice %16 {offsets = [0, 0], sizes = [16, 128], strides = [1, 1]} : vector<16x384xf32> to vector<16x128xf32>
    %18 = vector.broadcast %3 : vector<1x128xf32> to vector<16x128xf32>
    %19 = arith.addf %17, %18 : vector<16x128xf32>
    %20 = vector.extract_strided_slice %16 {offsets = [0, 128], sizes = [16, 128], strides = [1, 1]} : vector<16x384xf32> to vector<16x128xf32>
    %21 = vector.broadcast %4 : vector<1x128xf32> to vector<16x128xf32>
    %22 = arith.addf %20, %21 : vector<16x128xf32>
    %23 = vector.extract_strided_slice %16 {offsets = [0, 256], sizes = [16, 128], strides = [1, 1]} : vector<16x384xf32> to vector<16x128xf32>
    %24 = vector.broadcast %5 : vector<1x128xf32> to vector<16x128xf32>
    %25 = arith.addf %23, %24 : vector<16x128xf32>
    %c0_8 = arith.constant 0 : index
    %c0_9 = arith.constant 0 : index
    %26 = vector.load %arg3[%c0_8, %c0_9] : memref<128x128xbf16, #tpu.memory_space<vmem>>, vector<128x128xbf16>
    %27 = arith.extf %26 : vector<128x128xbf16> to vector<128x128xf32>
    %cst_10 = arith.constant 0.000000e+00 : f32
    %28 = vector.broadcast %cst_10 : f32 to vector<8x128xf32>
    %29 = vector.extract_strided_slice %19 {offsets = [0, 0], sizes = [8, 32], strides = [1, 1]} : vector<16x128xf32> to vector<8x32xf32>
    %30 = vector.extract_strided_slice %22 {offsets = [0, 0], sizes = [8, 32], strides = [1, 1]} : vector<16x128xf32> to vector<8x32xf32>
    %31 = vector.extract_strided_slice %25 {offsets = [0, 0], sizes = [8, 32], strides = [1, 1]} : vector<16x128xf32> to vector<8x32xf32>
    %cst_11 = arith.constant dense<0.000000e+00> : vector<8x8xf32>
    %32 = tpu.matmul %29, %30, %cst_11 {dimension_numbers = #tpu.dot_dimension_numbers<[1], [1], [0], [0], [0, 0, 1, 0], [], []>} : vector<8x32xf32>, vector<8x32xf32>, vector<8x8xf32> -> vector<8x8xf32>
    %cst_12 = arith.constant 0.176776692 : f32
    %33 = vector.broadcast %cst_12 : f32 to vector<8x8xf32>
    %34 = arith.mulf %32, %33 : vector<8x8xf32>
    %cst_13 = arith.constant dense<0xFF800000> : vector<8xf32>
    %35 = vector.multi_reduction <maximumf>, %34, %cst_13 [1] : vector<8x8xf32> to vector<8xf32>
    %36 = vector.shape_cast %35 : vector<8xf32> to vector<8x1xf32>
    %37 = vector.broadcast %36 : vector<8x1xf32> to vector<8x8xf32>
    %38 = arith.subf %34, %37 : vector<8x8xf32>
    %39 = math.exp %38 : vector<8x8xf32>
    %cst_14 = arith.constant dense<0.000000e+00> : vector<8xf32>
    %40 = vector.multi_reduction <add>, %39, %cst_14 [1] : vector<8x8xf32> to vector<8xf32>
    %41 = vector.shape_cast %40 : vector<8xf32> to vector<8x1xf32>
    %42 = tpu.reciprocal %41 {approx = true} : vector<8x1xf32> -> vector<8x1xf32>
    %43 = vector.broadcast %42 : vector<8x1xf32> to vector<8x8xf32>
    %44 = arith.mulf %39, %43 : vector<8x8xf32>
    %cst_15 = arith.constant dense<0.000000e+00> : vector<8x32xf32>
    %45 = tpu.matmul %44, %31, %cst_15 {dimension_numbers = #tpu.dot_dimension_numbers<[1], [0], [0], [1], [0, 0, 1, 1], [], []>} : vector<8x8xf32>, vector<8x32xf32>, vector<8x32xf32> -> vector<8x32xf32>
    %46 = vector.extract_strided_slice %27 {offsets = [0, 0], sizes = [32, 128], strides = [1, 1]} : vector<128x128xf32> to vector<32x128xf32>
    %cst_16 = arith.constant dense<0.000000e+00> : vector<8x128xf32>
    %47 = tpu.matmul %45, %46, %cst_16 {dimension_numbers = #tpu.dot_dimension_numbers<[1], [0], [0], [1], [0, 0, 1, 1], [], []>} : vector<8x32xf32>, vector<32x128xf32>, vector<8x128xf32> -> vector<8x128xf32>
    %48 = arith.addf %28, %47 : vector<8x128xf32>
    %49 = vector.extract_strided_slice %19 {offsets = [0, 32], sizes = [8, 32], strides = [1, 1]} : vector<16x128xf32> to vector<8x32xf32>
    %50 = vector.extract_strided_slice %22 {offsets = [0, 32], sizes = [8, 32], strides = [1, 1]} : vector<16x128xf32> to vector<8x32xf32>
    %51 = vector.extract_strided_slice %25 {offsets = [0, 32], sizes = [8, 32], strides = [1, 1]} : vector<16x128xf32> to vector<8x32xf32>
    %cst_17 = arith.constant dense<0.000000e+00> : vector<8x8xf32>
    %52 = tpu.matmul %49, %50, %cst_17 {dimension_numbers = #tpu.dot_dimension_numbers<[1], [1], [0], [0], [0, 0, 1, 0], [], []>} : vector<8x32xf32>, vector<8x32xf32>, vector<8x8xf32> -> vector<8x8xf32>
    %cst_18 = arith.constant 0.176776692 : f32
    %53 = vector.broadcast %cst_18 : f32 to vector<8x8xf32>
    %54 = arith.mulf %52, %53 : vector<8x8xf32>
    %cst_19 = arith.constant dense<0xFF800000> : vector<8xf32>
    %55 = vector.multi_reduction <maximumf>, %54, %cst_19 [1] : vector<8x8xf32> to vector<8xf32>
    %56 = vector.shape_cast %55 : vector<8xf32> to vector<8x1xf32>
    %57 = vector.broadcast %56 : vector<8x1xf32> to vector<8x8xf32>
    %58 = arith.subf %54, %57 : vector<8x8xf32>
    %59 = math.exp %58 : vector<8x8xf32>
    %cst_20 = arith.constant dense<0.000000e+00> : vector<8xf32>
    %60 = vector.multi_reduction <add>, %59, %cst_20 [1] : vector<8x8xf32> to vector<8xf32>
    %61 = vector.shape_cast %60 : vector<8xf32> to vector<8x1xf32>
    %62 = tpu.reciprocal %61 {approx = true} : vector<8x1xf32> -> vector<8x1xf32>
    %63 = vector.broadcast %62 : vector<8x1xf32> to vector<8x8xf32>
    %64 = arith.mulf %59, %63 : vector<8x8xf32>
    %cst_21 = arith.constant dense<0.000000e+00> : vector<8x32xf32>
    %65 = tpu.matmul %64, %51, %cst_21 {dimension_numbers = #tpu.dot_dimension_numbers<[1], [0], [0], [1], [0, 0, 1, 1], [], []>} : vector<8x8xf32>, vector<8x32xf32>, vector<8x32xf32> -> vector<8x32xf32>
    %66 = vector.extract_strided_slice %27 {offsets = [32, 0], sizes = [32, 128], strides = [1, 1]} : vector<128x128xf32> to vector<32x128xf32>
    %cst_22 = arith.constant dense<0.000000e+00> : vector<8x128xf32>
    %67 = tpu.matmul %65, %66, %cst_22 {dimension_numbers = #tpu.dot_dimension_numbers<[1], [0], [0], [1], [0, 0, 1, 1], [], []>} : vector<8x32xf32>, vector<32x128xf32>, vector<8x128xf32> -> vector<8x128xf32>
    %68 = arith.addf %48, %67 : vector<8x128xf32>
    %69 = vector.extract_strided_slice %19 {offsets = [0, 64], sizes = [8, 32], strides = [1, 1]} : vector<16x128xf32> to vector<8x32xf32>
    %70 = vector.extract_strided_slice %22 {offsets = [0, 64], sizes = [8, 32], strides = [1, 1]} : vector<16x128xf32> to vector<8x32xf32>
    %71 = vector.extract_strided_slice %25 {offsets = [0, 64], sizes = [8, 32], strides = [1, 1]} : vector<16x128xf32> to vector<8x32xf32>
    %cst_23 = arith.constant dense<0.000000e+00> : vector<8x8xf32>
    %72 = tpu.matmul %69, %70, %cst_23 {dimension_numbers = #tpu.dot_dimension_numbers<[1], [1], [0], [0], [0, 0, 1, 0], [], []>} : vector<8x32xf32>, vector<8x32xf32>, vector<8x8xf32> -> vector<8x8xf32>
    %cst_24 = arith.constant 0.176776692 : f32
    %73 = vector.broadcast %cst_24 : f32 to vector<8x8xf32>
    %74 = arith.mulf %72, %73 : vector<8x8xf32>
    %cst_25 = arith.constant dense<0xFF800000> : vector<8xf32>
    %75 = vector.multi_reduction <maximumf>, %74, %cst_25 [1] : vector<8x8xf32> to vector<8xf32>
    %76 = vector.shape_cast %75 : vector<8xf32> to vector<8x1xf32>
    %77 = vector.broadcast %76 : vector<8x1xf32> to vector<8x8xf32>
    %78 = arith.subf %74, %77 : vector<8x8xf32>
    %79 = math.exp %78 : vector<8x8xf32>
    %cst_26 = arith.constant dense<0.000000e+00> : vector<8xf32>
    %80 = vector.multi_reduction <add>, %79, %cst_26 [1] : vector<8x8xf32> to vector<8xf32>
    %81 = vector.shape_cast %80 : vector<8xf32> to vector<8x1xf32>
    %82 = tpu.reciprocal %81 {approx = true} : vector<8x1xf32> -> vector<8x1xf32>
    %83 = vector.broadcast %82 : vector<8x1xf32> to vector<8x8xf32>
    %84 = arith.mulf %79, %83 : vector<8x8xf32>
    %cst_27 = arith.constant dense<0.000000e+00> : vector<8x32xf32>
    %85 = tpu.matmul %84, %71, %cst_27 {dimension_numbers = #tpu.dot_dimension_numbers<[1], [0], [0], [1], [0, 0, 1, 1], [], []>} : vector<8x8xf32>, vector<8x32xf32>, vector<8x32xf32> -> vector<8x32xf32>
    %86 = vector.extract_strided_slice %27 {offsets = [64, 0], sizes = [32, 128], strides = [1, 1]} : vector<128x128xf32> to vector<32x128xf32>
    %cst_28 = arith.constant dense<0.000000e+00> : vector<8x128xf32>
    %87 = tpu.matmul %85, %86, %cst_28 {dimension_numbers = #tpu.dot_dimension_numbers<[1], [0], [0], [1], [0, 0, 1, 1], [], []>} : vector<8x32xf32>, vector<32x128xf32>, vector<8x128xf32> -> vector<8x128xf32>
    %88 = arith.addf %68, %87 : vector<8x128xf32>
    %89 = vector.extract_strided_slice %19 {offsets = [0, 96], sizes = [8, 32], strides = [1, 1]} : vector<16x128xf32> to vector<8x32xf32>
    %90 = vector.extract_strided_slice %22 {offsets = [0, 96], sizes = [8, 32], strides = [1, 1]} : vector<16x128xf32> to vector<8x32xf32>
    %91 = vector.extract_strided_slice %25 {offsets = [0, 96], sizes = [8, 32], strides = [1, 1]} : vector<16x128xf32> to vector<8x32xf32>
    %cst_29 = arith.constant dense<0.000000e+00> : vector<8x8xf32>
    %92 = tpu.matmul %89, %90, %cst_29 {dimension_numbers = #tpu.dot_dimension_numbers<[1], [1], [0], [0], [0, 0, 1, 0], [], []>} : vector<8x32xf32>, vector<8x32xf32>, vector<8x8xf32> -> vector<8x8xf32>
    %cst_30 = arith.constant 0.176776692 : f32
    %93 = vector.broadcast %cst_30 : f32 to vector<8x8xf32>
    %94 = arith.mulf %92, %93 : vector<8x8xf32>
    %cst_31 = arith.constant dense<0xFF800000> : vector<8xf32>
    %95 = vector.multi_reduction <maximumf>, %94, %cst_31 [1] : vector<8x8xf32> to vector<8xf32>
    %96 = vector.shape_cast %95 : vector<8xf32> to vector<8x1xf32>
    %97 = vector.broadcast %96 : vector<8x1xf32> to vector<8x8xf32>
    %98 = arith.subf %94, %97 : vector<8x8xf32>
    %99 = math.exp %98 : vector<8x8xf32>
    %cst_32 = arith.constant dense<0.000000e+00> : vector<8xf32>
    %100 = vector.multi_reduction <add>, %99, %cst_32 [1] : vector<8x8xf32> to vector<8xf32>
    %101 = vector.shape_cast %100 : vector<8xf32> to vector<8x1xf32>
    %102 = tpu.reciprocal %101 {approx = true} : vector<8x1xf32> -> vector<8x1xf32>
    %103 = vector.broadcast %102 : vector<8x1xf32> to vector<8x8xf32>
    %104 = arith.mulf %99, %103 : vector<8x8xf32>
    %cst_33 = arith.constant dense<0.000000e+00> : vector<8x32xf32>
    %105 = tpu.matmul %104, %91, %cst_33 {dimension_numbers = #tpu.dot_dimension_numbers<[1], [0], [0], [1], [0, 0, 1, 1], [], []>} : vector<8x8xf32>, vector<8x32xf32>, vector<8x32xf32> -> vector<8x32xf32>
    %106 = vector.extract_strided_slice %27 {offsets = [96, 0], sizes = [32, 128], strides = [1, 1]} : vector<128x128xf32> to vector<32x128xf32>
    %cst_34 = arith.constant dense<0.000000e+00> : vector<8x128xf32>
    %107 = tpu.matmul %105, %106, %cst_34 {dimension_numbers = #tpu.dot_dimension_numbers<[1], [0], [0], [1], [0, 0, 1, 1], [], []>} : vector<8x32xf32>, vector<32x128xf32>, vector<8x128xf32> -> vector<8x128xf32>
    %108 = arith.addf %88, %107 : vector<8x128xf32>
    %cst_35 = arith.constant 0.000000e+00 : f32
    %109 = vector.broadcast %cst_35 : f32 to vector<8x128xf32>
    %110 = vector.extract_strided_slice %19 {offsets = [8, 0], sizes = [8, 32], strides = [1, 1]} : vector<16x128xf32> to vector<8x32xf32>
    %111 = vector.extract_strided_slice %22 {offsets = [8, 0], sizes = [8, 32], strides = [1, 1]} : vector<16x128xf32> to vector<8x32xf32>
    %112 = vector.extract_strided_slice %25 {offsets = [8, 0], sizes = [8, 32], strides = [1, 1]} : vector<16x128xf32> to vector<8x32xf32>
    %cst_36 = arith.constant dense<0.000000e+00> : vector<8x8xf32>
    %113 = tpu.matmul %110, %111, %cst_36 {dimension_numbers = #tpu.dot_dimension_numbers<[1], [1], [0], [0], [0, 0, 1, 0], [], []>} : vector<8x32xf32>, vector<8x32xf32>, vector<8x8xf32> -> vector<8x8xf32>
    %cst_37 = arith.constant 0.176776692 : f32
    %114 = vector.broadcast %cst_37 : f32 to vector<8x8xf32>
    %115 = arith.mulf %113, %114 : vector<8x8xf32>
    %cst_38 = arith.constant dense<0xFF800000> : vector<8xf32>
    %116 = vector.multi_reduction <maximumf>, %115, %cst_38 [1] : vector<8x8xf32> to vector<8xf32>
    %117 = vector.shape_cast %116 : vector<8xf32> to vector<8x1xf32>
    %118 = vector.broadcast %117 : vector<8x1xf32> to vector<8x8xf32>
    %119 = arith.subf %115, %118 : vector<8x8xf32>
    %120 = math.exp %119 : vector<8x8xf32>
    %cst_39 = arith.constant dense<0.000000e+00> : vector<8xf32>
    %121 = vector.multi_reduction <add>, %120, %cst_39 [1] : vector<8x8xf32> to vector<8xf32>
    %122 = vector.shape_cast %121 : vector<8xf32> to vector<8x1xf32>
    %123 = tpu.reciprocal %122 {approx = true} : vector<8x1xf32> -> vector<8x1xf32>
    %124 = vector.broadcast %123 : vector<8x1xf32> to vector<8x8xf32>
    %125 = arith.mulf %120, %124 : vector<8x8xf32>
    %cst_40 = arith.constant dense<0.000000e+00> : vector<8x32xf32>
    %126 = tpu.matmul %125, %112, %cst_40 {dimension_numbers = #tpu.dot_dimension_numbers<[1], [0], [0], [1], [0, 0, 1, 1], [], []>} : vector<8x8xf32>, vector<8x32xf32>, vector<8x32xf32> -> vector<8x32xf32>
    %127 = vector.extract_strided_slice %27 {offsets = [0, 0], sizes = [32, 128], strides = [1, 1]} : vector<128x128xf32> to vector<32x128xf32>
    %cst_41 = arith.constant dense<0.000000e+00> : vector<8x128xf32>
    %128 = tpu.matmul %126, %127, %cst_41 {dimension_numbers = #tpu.dot_dimension_numbers<[1], [0], [0], [1], [0, 0, 1, 1], [], []>} : vector<8x32xf32>, vector<32x128xf32>, vector<8x128xf32> -> vector<8x128xf32>
    %129 = arith.addf %109, %128 : vector<8x128xf32>
    %130 = vector.extract_strided_slice %19 {offsets = [8, 32], sizes = [8, 32], strides = [1, 1]} : vector<16x128xf32> to vector<8x32xf32>
    %131 = vector.extract_strided_slice %22 {offsets = [8, 32], sizes = [8, 32], strides = [1, 1]} : vector<16x128xf32> to vector<8x32xf32>
    %132 = vector.extract_strided_slice %25 {offsets = [8, 32], sizes = [8, 32], strides = [1, 1]} : vector<16x128xf32> to vector<8x32xf32>
    %cst_42 = arith.constant dense<0.000000e+00> : vector<8x8xf32>
    %133 = tpu.matmul %130, %131, %cst_42 {dimension_numbers = #tpu.dot_dimension_numbers<[1], [1], [0], [0], [0, 0, 1, 0], [], []>} : vector<8x32xf32>, vector<8x32xf32>, vector<8x8xf32> -> vector<8x8xf32>
    %cst_43 = arith.constant 0.176776692 : f32
    %134 = vector.broadcast %cst_43 : f32 to vector<8x8xf32>
    %135 = arith.mulf %133, %134 : vector<8x8xf32>
    %cst_44 = arith.constant dense<0xFF800000> : vector<8xf32>
    %136 = vector.multi_reduction <maximumf>, %135, %cst_44 [1] : vector<8x8xf32> to vector<8xf32>
    %137 = vector.shape_cast %136 : vector<8xf32> to vector<8x1xf32>
    %138 = vector.broadcast %137 : vector<8x1xf32> to vector<8x8xf32>
    %139 = arith.subf %135, %138 : vector<8x8xf32>
    %140 = math.exp %139 : vector<8x8xf32>
    %cst_45 = arith.constant dense<0.000000e+00> : vector<8xf32>
    %141 = vector.multi_reduction <add>, %140, %cst_45 [1] : vector<8x8xf32> to vector<8xf32>
    %142 = vector.shape_cast %141 : vector<8xf32> to vector<8x1xf32>
    %143 = tpu.reciprocal %142 {approx = true} : vector<8x1xf32> -> vector<8x1xf32>
    %144 = vector.broadcast %143 : vector<8x1xf32> to vector<8x8xf32>
    %145 = arith.mulf %140, %144 : vector<8x8xf32>
    %cst_46 = arith.constant dense<0.000000e+00> : vector<8x32xf32>
    %146 = tpu.matmul %145, %132, %cst_46 {dimension_numbers = #tpu.dot_dimension_numbers<[1], [0], [0], [1], [0, 0, 1, 1], [], []>} : vector<8x8xf32>, vector<8x32xf32>, vector<8x32xf32> -> vector<8x32xf32>
    %147 = vector.extract_strided_slice %27 {offsets = [32, 0], sizes = [32, 128], strides = [1, 1]} : vector<128x128xf32> to vector<32x128xf32>
    %cst_47 = arith.constant dense<0.000000e+00> : vector<8x128xf32>
    %148 = tpu.matmul %146, %147, %cst_47 {dimension_numbers = #tpu.dot_dimension_numbers<[1], [0], [0], [1], [0, 0, 1, 1], [], []>} : vector<8x32xf32>, vector<32x128xf32>, vector<8x128xf32> -> vector<8x128xf32>
    %149 = arith.addf %129, %148 : vector<8x128xf32>
    %150 = vector.extract_strided_slice %19 {offsets = [8, 64], sizes = [8, 32], strides = [1, 1]} : vector<16x128xf32> to vector<8x32xf32>
    %151 = vector.extract_strided_slice %22 {offsets = [8, 64], sizes = [8, 32], strides = [1, 1]} : vector<16x128xf32> to vector<8x32xf32>
    %152 = vector.extract_strided_slice %25 {offsets = [8, 64], sizes = [8, 32], strides = [1, 1]} : vector<16x128xf32> to vector<8x32xf32>
    %cst_48 = arith.constant dense<0.000000e+00> : vector<8x8xf32>
    %153 = tpu.matmul %150, %151, %cst_48 {dimension_numbers = #tpu.dot_dimension_numbers<[1], [1], [0], [0], [0, 0, 1, 0], [], []>} : vector<8x32xf32>, vector<8x32xf32>, vector<8x8xf32> -> vector<8x8xf32>
    %cst_49 = arith.constant 0.176776692 : f32
    %154 = vector.broadcast %cst_49 : f32 to vector<8x8xf32>
    %155 = arith.mulf %153, %154 : vector<8x8xf32>
    %cst_50 = arith.constant dense<0xFF800000> : vector<8xf32>
    %156 = vector.multi_reduction <maximumf>, %155, %cst_50 [1] : vector<8x8xf32> to vector<8xf32>
    %157 = vector.shape_cast %156 : vector<8xf32> to vector<8x1xf32>
    %158 = vector.broadcast %157 : vector<8x1xf32> to vector<8x8xf32>
    %159 = arith.subf %155, %158 : vector<8x8xf32>
    %160 = math.exp %159 : vector<8x8xf32>
    %cst_51 = arith.constant dense<0.000000e+00> : vector<8xf32>
    %161 = vector.multi_reduction <add>, %160, %cst_51 [1] : vector<8x8xf32> to vector<8xf32>
    %162 = vector.shape_cast %161 : vector<8xf32> to vector<8x1xf32>
    %163 = tpu.reciprocal %162 {approx = true} : vector<8x1xf32> -> vector<8x1xf32>
    %164 = vector.broadcast %163 : vector<8x1xf32> to vector<8x8xf32>
    %165 = arith.mulf %160, %164 : vector<8x8xf32>
    %cst_52 = arith.constant dense<0.000000e+00> : vector<8x32xf32>
    %166 = tpu.matmul %165, %152, %cst_52 {dimension_numbers = #tpu.dot_dimension_numbers<[1], [0], [0], [1], [0, 0, 1, 1], [], []>} : vector<8x8xf32>, vector<8x32xf32>, vector<8x32xf32> -> vector<8x32xf32>
    %167 = vector.extract_strided_slice %27 {offsets = [64, 0], sizes = [32, 128], strides = [1, 1]} : vector<128x128xf32> to vector<32x128xf32>
    %cst_53 = arith.constant dense<0.000000e+00> : vector<8x128xf32>
    %168 = tpu.matmul %166, %167, %cst_53 {dimension_numbers = #tpu.dot_dimension_numbers<[1], [0], [0], [1], [0, 0, 1, 1], [], []>} : vector<8x32xf32>, vector<32x128xf32>, vector<8x128xf32> -> vector<8x128xf32>
    %169 = arith.addf %149, %168 : vector<8x128xf32>
    %170 = vector.extract_strided_slice %19 {offsets = [8, 96], sizes = [8, 32], strides = [1, 1]} : vector<16x128xf32> to vector<8x32xf32>
    %171 = vector.extract_strided_slice %22 {offsets = [8, 96], sizes = [8, 32], strides = [1, 1]} : vector<16x128xf32> to vector<8x32xf32>
    %172 = vector.extract_strided_slice %25 {offsets = [8, 96], sizes = [8, 32], strides = [1, 1]} : vector<16x128xf32> to vector<8x32xf32>
    %cst_54 = arith.constant dense<0.000000e+00> : vector<8x8xf32>
    %173 = tpu.matmul %170, %171, %cst_54 {dimension_numbers = #tpu.dot_dimension_numbers<[1], [1], [0], [0], [0, 0, 1, 0], [], []>} : vector<8x32xf32>, vector<8x32xf32>, vector<8x8xf32> -> vector<8x8xf32>
    %cst_55 = arith.constant 0.176776692 : f32
    %174 = vector.broadcast %cst_55 : f32 to vector<8x8xf32>
    %175 = arith.mulf %173, %174 : vector<8x8xf32>
    %cst_56 = arith.constant dense<0xFF800000> : vector<8xf32>
    %176 = vector.multi_reduction <maximumf>, %175, %cst_56 [1] : vector<8x8xf32> to vector<8xf32>
    %177 = vector.shape_cast %176 : vector<8xf32> to vector<8x1xf32>
    %178 = vector.broadcast %177 : vector<8x1xf32> to vector<8x8xf32>
    %179 = arith.subf %175, %178 : vector<8x8xf32>
    %180 = math.exp %179 : vector<8x8xf32>
    %cst_57 = arith.constant dense<0.000000e+00> : vector<8xf32>
    %181 = vector.multi_reduction <add>, %180, %cst_57 [1] : vector<8x8xf32> to vector<8xf32>
    %182 = vector.shape_cast %181 : vector<8xf32> to vector<8x1xf32>
    %183 = tpu.reciprocal %182 {approx = true} : vector<8x1xf32> -> vector<8x1xf32>
    %184 = vector.broadcast %183 : vector<8x1xf32> to vector<8x8xf32>
    %185 = arith.mulf %180, %184 : vector<8x8xf32>
    %cst_58 = arith.constant dense<0.000000e+00> : vector<8x32xf32>
    %186 = tpu.matmul %185, %172, %cst_58 {dimension_numbers = #tpu.dot_dimension_numbers<[1], [0], [0], [1], [0, 0, 1, 1], [], []>} : vector<8x8xf32>, vector<8x32xf32>, vector<8x32xf32> -> vector<8x32xf32>
    %187 = vector.extract_strided_slice %27 {offsets = [96, 0], sizes = [32, 128], strides = [1, 1]} : vector<128x128xf32> to vector<32x128xf32>
    %cst_59 = arith.constant dense<0.000000e+00> : vector<8x128xf32>
    %188 = tpu.matmul %186, %187, %cst_59 {dimension_numbers = #tpu.dot_dimension_numbers<[1], [0], [0], [1], [0, 0, 1, 1], [], []>} : vector<8x32xf32>, vector<32x128xf32>, vector<8x128xf32> -> vector<8x128xf32>
    %189 = arith.addf %169, %188 : vector<8x128xf32>
    %190 = tpu.concatenate %108, %189 in 0 : vector<8x128xf32>, vector<8x128xf32> -> vector<16x128xf32>
    %191 = vector.broadcast %6 : vector<1x128xf32> to vector<16x128xf32>
    %192 = arith.addf %190, %191 : vector<16x128xf32>
    %193 = arith.addf %1, %192 : vector<16x128xf32>
    %cst_60 = arith.constant dense<0.000000e+00> : vector<16xf32>
    %194 = vector.multi_reduction <add>, %193, %cst_60 [1] : vector<16x128xf32> to vector<16xf32>
    %195 = vector.shape_cast %194 : vector<16xf32> to vector<16x1xf32>
    %cst_61 = arith.constant 1.280000e+02 : f32
    %196 = vector.broadcast %cst_61 : f32 to vector<16x1xf32>
    %197 = arith.divf %195, %196 : vector<16x1xf32>
    %198 = vector.broadcast %197 : vector<16x1xf32> to vector<16x128xf32>
    %199 = arith.subf %193, %198 : vector<16x128xf32>
    %200 = arith.mulf %199, %199 : vector<16x128xf32>
    %cst_62 = arith.constant dense<0.000000e+00> : vector<16xf32>
    %201 = vector.multi_reduction <add>, %200, %cst_62 [1] : vector<16x128xf32> to vector<16xf32>
    %202 = vector.shape_cast %201 : vector<16xf32> to vector<16x1xf32>
    %cst_63 = arith.constant 1.280000e+02 : f32
    %203 = vector.broadcast %cst_63 : f32 to vector<16x1xf32>
    %204 = arith.divf %202, %203 : vector<16x1xf32>
    %205 = vector.broadcast %197 : vector<16x1xf32> to vector<16x128xf32>
    %206 = arith.subf %193, %205 : vector<16x128xf32>
    %cst_64 = arith.constant 9.99999974E-6 : f32
    %207 = vector.broadcast %cst_64 : f32 to vector<16x1xf32>
    %208 = arith.addf %204, %207 : vector<16x1xf32>
    %209 = math.rsqrt %208 : vector<16x1xf32>
    %210 = vector.broadcast %209 : vector<16x1xf32> to vector<16x128xf32>
    %211 = arith.mulf %206, %210 : vector<16x128xf32>
    %212 = vector.broadcast %7 : vector<1x128xf32> to vector<16x128xf32>
    %213 = arith.mulf %211, %212 : vector<16x128xf32>
    %214 = vector.broadcast %8 : vector<1x128xf32> to vector<16x128xf32>
    %215 = arith.addf %213, %214 : vector<16x128xf32>
    %c0_65 = arith.constant 0 : index
    %c0_66 = arith.constant 0 : index
    %216 = vector.load %arg4[%c0_65, %c0_66] : memref<128x256xbf16, #tpu.memory_space<vmem>>, vector<128x256xbf16>
    %217 = arith.extf %216 : vector<128x256xbf16> to vector<128x256xf32>
    %c0_67 = arith.constant 0 : index
    %c0_68 = arith.constant 0 : index
    %218 = vector.load %arg5[%c0_67, %c0_68] : memref<256x128xbf16, #tpu.memory_space<vmem>>, vector<256x128xbf16>
    %219 = arith.extf %218 : vector<256x128xbf16> to vector<256x128xf32>
    %cst_69 = arith.constant dense<0.000000e+00> : vector<16x256xf32>
    %220 = tpu.matmul %215, %217, %cst_69 {dimension_numbers = #tpu.dot_dimension_numbers<[1], [0], [0], [1], [0, 0, 1, 1], [], []>} : vector<16x128xf32>, vector<128x256xf32>, vector<16x256xf32> -> vector<16x256xf32>
    %221 = vector.broadcast %12 : vector<1x256xf32> to vector<16x256xf32>
    %222 = arith.addf %220, %221 : vector<16x256xf32>
    %cst_70 = arith.constant 0.000000e+00 : f32
    %223 = vector.broadcast %cst_70 : f32 to vector<16x256xf32>
    %224 = arith.maximumf %222, %223 : vector<16x256xf32>
    %cst_71 = arith.constant dense<0.000000e+00> : vector<16x128xf32>
    %225 = tpu.matmul %224, %219, %cst_71 {dimension_numbers = #tpu.dot_dimension_numbers<[1], [0], [0], [1], [0, 0, 1, 1], [], []>} : vector<16x256xf32>, vector<256x128xf32>, vector<16x128xf32> -> vector<16x128xf32>
    %226 = vector.broadcast %13 : vector<1x128xf32> to vector<16x128xf32>
    %227 = arith.addf %225, %226 : vector<16x128xf32>
    %228 = arith.addf %215, %227 : vector<16x128xf32>
    %cst_72 = arith.constant dense<0.000000e+00> : vector<16xf32>
    %229 = vector.multi_reduction <add>, %228, %cst_72 [1] : vector<16x128xf32> to vector<16xf32>
    %230 = vector.shape_cast %229 : vector<16xf32> to vector<16x1xf32>
    %cst_73 = arith.constant 1.280000e+02 : f32
    %231 = vector.broadcast %cst_73 : f32 to vector<16x1xf32>
    %232 = arith.divf %230, %231 : vector<16x1xf32>
    %233 = vector.broadcast %232 : vector<16x1xf32> to vector<16x128xf32>
    %234 = arith.subf %228, %233 : vector<16x128xf32>
    %235 = arith.mulf %234, %234 : vector<16x128xf32>
    %cst_74 = arith.constant dense<0.000000e+00> : vector<16xf32>
    %236 = vector.multi_reduction <add>, %235, %cst_74 [1] : vector<16x128xf32> to vector<16xf32>
    %237 = vector.shape_cast %236 : vector<16xf32> to vector<16x1xf32>
    %cst_75 = arith.constant 1.280000e+02 : f32
    %238 = vector.broadcast %cst_75 : f32 to vector<16x1xf32>
    %239 = arith.divf %237, %238 : vector<16x1xf32>
    %240 = vector.broadcast %232 : vector<16x1xf32> to vector<16x128xf32>
    %241 = arith.subf %228, %240 : vector<16x128xf32>
    %cst_76 = arith.constant 9.99999974E-6 : f32
    %242 = vector.broadcast %cst_76 : f32 to vector<16x1xf32>
    %243 = arith.addf %239, %242 : vector<16x1xf32>
    %244 = math.rsqrt %243 : vector<16x1xf32>
    %245 = vector.broadcast %244 : vector<16x1xf32> to vector<16x128xf32>
    %246 = arith.mulf %241, %245 : vector<16x128xf32>
    %247 = vector.broadcast %9 : vector<1x128xf32> to vector<16x128xf32>
    %248 = arith.mulf %246, %247 : vector<16x128xf32>
    %249 = vector.broadcast %10 : vector<1x128xf32> to vector<16x128xf32>
    %250 = arith.addf %248, %249 : vector<16x128xf32>
    %251 = vector.shape_cast %250 : vector<16x128xf32> to vector<2x8x128xf32>
    %c0_77 = arith.constant 0 : index
    %c0_78 = arith.constant 0 : index
    %c0_79 = arith.constant 0 : index
    %252 = vector.load %arg8[%c0_77, %c0_78, %c0_79] : memref<2x8x128xf32, #tpu.memory_space<vmem>>, vector<2x8x128xf32>
    tpu.vector_store %arg8[%c0_77, %c0_78, %c0_79], %251 {strides = array<i32>} : memref<2x8x128xf32, #tpu.memory_space<vmem>>, vector<2x8x128xf32>,
    return
  }
  func.func @transform_0(%arg0: i32) -> (i32, i32, i32) {
    %c0_i32 = arith.constant 0 : i32
    %c0_i32_0 = arith.constant 0 : i32
    %c0_i32_1 = arith.constant 0 : i32
    return %arg0, %c0_i32, %c0_i32_0 : i32, i32, i32
  }
  func.func @transform_1(%arg0: i32) -> (i32, i32) {
    %c0_i32 = arith.constant 0 : i32
    %c0_i32_0 = arith.constant 0 : i32
    %c0_i32_1 = arith.constant 0 : i32
    return %c0_i32, %c0_i32_0 : i32, i32
  }
  func.func @transform_2(%arg0: i32) -> (i32, i32) {
    %c0_i32 = arith.constant 0 : i32
    %c0_i32_0 = arith.constant 0 : i32
    %c0_i32_1 = arith.constant 0 : i32
    return %c0_i32, %c0_i32_0 : i32, i32
  }
  func.func @transform_3(%arg0: i32) -> (i32, i32) {
    %c0_i32 = arith.constant 0 : i32
    %c0_i32_0 = arith.constant 0 : i32
    %c0_i32_1 = arith.constant 0 : i32
    return %c0_i32, %c0_i32_0 : i32, i32
  }
  func.func @transform_4(%arg0: i32) -> (i32, i32) {
    %c0_i32 = arith.constant 0 : i32
    %c0_i32_0 = arith.constant 0 : i32
    %c0_i32_1 = arith.constant 0 : i32
    return %c0_i32, %c0_i32_0 : i32, i32
  }
  func.func @transform_5(%arg0: i32) -> (i32, i32) {
    %c0_i32 = arith.constant 0 : i32
    %c0_i32_0 = arith.constant 0 : i32
    %c0_i32_1 = arith.constant 0 : i32
    return %c0_i32, %c0_i32_0 : i32, i32
  }
  func.func @transform_6(%arg0: i32) -> (i32, i32) {
    %c0_i32 = arith.constant 0 : i32
    %c0_i32_0 = arith.constant 0 : i32
    %c0_i32_1 = arith.constant 0 : i32
    return %c0_i32, %c0_i32_0 : i32, i32
  }
  func.func @transform_7(%arg0: i32) -> (i32, i32, i32) {
    %c0_i32 = arith.constant 0 : i32
    %c0_i32_0 = arith.constant 0 : i32
    %c0_i32_1 = arith.constant 0 : i32
    return %arg0, %c0_i32, %c0_i32_0 : i32, i32, i32
  }
}

</mosaic_0001>

<llo_original>
// kernel: tpu_custom_call.1
$region0: #{tpu_custom_call.1}
  #allocation0 [shape = 'u32[]', space=smem, size = 0x4, offset = 0x4, fixed_abs, tag = 'smem constant byte address 0x4 - core index']
  #allocation1 [shape = 'u32[144,128]{1,0:T(1,128)}', space=vmem, size = 0x12000, scoped, tag = 'internal scratch']
  %s0 = inlined_call_operand.hbm [shape: f32[2,8,128], index: 0, kind: input, shape index: {}]
  %s1 = inlined_call_operand.hbm [shape: bf16[128,384], index: 1, kind: input, shape index: {}]
  %s2 = inlined_call_operand.hbm [shape: bf16[128,128], index: 2, kind: input, shape index: {}]
  %s3 = inlined_call_operand.hbm [shape: bf16[128,256], index: 3, kind: input, shape index: {}]
  %s4 = inlined_call_operand.hbm [shape: bf16[256,128], index: 4, kind: input, shape index: {}]
  %s5 = inlined_call_operand.vmem [shape: f32[8,128], index: 5, kind: input, shape index: {}]
  %s6 = inlined_call_operand.hbm [shape: f32[2,256], index: 6, kind: input, shape index: {}]
  %s7 = inlined_call_operand.hbm [shape: f32[2,8,128], index: 7, kind: output, shape index: {}]
  %s8 = sld [smem:[#allocation0]]
  $region62: #{tpu_custom_call.1} parent=0
    _
  %s10 = ssub.s32 1, %s8
  %s11 = scalar_select 0, %s10, %s8
  $region1: #{tpu_custom_call.1} parent=0
    #allocation2 [shape = 'u8[8192]{0}', space=vmem, size = 0x2000, scoped, tag = 'input window, operand 0, single buffered']
    #allocation3 [shape = 's32[1]{0}', space=sflag, size = 0x4, scoped, tag = 'scoped memory for tpu_custom_call.1']
    #allocation4 [shape = 's32[1]{0}', space=sflag, size = 0x4, scoped, tag = 'scoped memory for tpu_custom_call.1']
    #allocation5 [shape = 'u8[98304]{0}', space=vmem, size = 0x18000, scoped, tag = 'input window, operand 1, single buffered']
    #allocation6 [shape = 's32[1]{0}', space=sflag, size = 0x4, scoped, tag = 'scoped memory for tpu_custom_call.1']
    #allocation7 [shape = 'u8[32768]{0}', space=vmem, size = 0x8000, scoped, tag = 'input window, operand 2, single buffered']
    #allocation8 [shape = 'u8[65536]{0}', space=vmem, size = 0x10000, scoped, tag = 'input window, operand 3, single buffered']
    #allocation9 [shape = 's32[1]{0}', space=sflag, size = 0x4, scoped, tag = 'scoped memory for tpu_custom_call.1']
    #allocation10 [shape = 'u8[65536]{0}', space=vmem, size = 0x10000, scoped, tag = 'input window, operand 4, single buffered']
    #allocation11 [shape = 'u8[2048]{0}', space=vmem, size = 0x800, scoped, tag = 'input window, operand 6, single buffered']
    #allocation12 [shape = 's32[1]{0}', space=sflag, size = 0x4, scoped, tag = 'scoped memory for tpu_custom_call.1']
    #allocation13 [shape = 'u8[8192]{0}', space=vmem, size = 0x2000, scoped, tag = 'output window, operand 0, single buffered']
    %12 = vsyncpa [#allocation3], 0
    %13 = vsyncpa [#allocation6], 0
    %14 = vsyncpa [#allocation9], 0
    %15 = vsyncpa [#allocation12], 0
    %16 = vsyncpa [#allocation4], 0
    // Predicated region
    $region2: #{tpu_custom_call.1} parent=1 // pred_check
      _
    $region3: #{tpu_custom_call.1} parent=1 // pred_check_branch
      %18 = sbr.rel (0) target = $region5
    $region4: #{tpu_custom_call.1} parent=1 // pred_region
      %s20 = ssub.s32 256, 256
      %21 = vsyncadd [#allocation3], %s20
      %s22 = sshll.u32 [#allocation2], 4
      %s23 = int_to_ptr.vmem [resolvable:$true] %s22
      %28 = dma.hbm_to_vmem [thread:$0]  %s0, 256, %s23, [#allocation3], 128, 128, 8
    $region5: #{tpu_custom_call.1} parent=1 // pred_fallthru
      _
    // Predicated region
    $region6: #{tpu_custom_call.1} parent=1 // pred_check
      _
    $region7: #{tpu_custom_call.1} parent=1 // pred_check_branch
      %30 = sbr.rel (0) target = $region9
    $region8: #{tpu_custom_call.1} parent=1 // pred_region
      %s32 = ssub.s32 3072, 3072
      %33 = vsyncadd [#allocation6], %s32
      %s34 = sshll.u32 [#allocation5], 4
      %s35 = int_to_ptr.vmem [resolvable:$true] %s34
      %40 = dma.hbm_to_vmem [thread:$0]  %s1, 3072, %s35, [#allocation6], 192, 192, 12
    $region9: #{tpu_custom_call.1} parent=1 // pred_fallthru
      _
    // Predicated region
    $region10: #{tpu_custom_call.1} parent=1 // pred_check
      _
    $region11: #{tpu_custom_call.1} parent=1 // pred_check_branch
      %42 = sbr.rel (0) target = $region13
    $region12: #{tpu_custom_call.1} parent=1 // pred_region
      %s44 = ssub.s32 1024, 1024
      %45 = vsyncadd [#allocation6], %s44
      %s46 = sshll.u32 [#allocation7], 4
      %s47 = int_to_ptr.vmem [resolvable:$true] %s46
      %52 = dma.hbm_to_vmem [thread:$0]  %s2, 1024, %s47, [#allocation6], 64, 64, 4
    $region13: #{tpu_custom_call.1} parent=1 // pred_fallthru
      _
    // Predicated region
    $region14: #{tpu_custom_call.1} parent=1 // pred_check
      _
    $region15: #{tpu_custom_call.1} parent=1 // pred_check_branch
      %54 = sbr.rel (0) target = $region17
    $region16: #{tpu_custom_call.1} parent=1 // pred_region
      %s56 = ssub.s32 2048, 2048
      %57 = vsyncadd [#allocation9], %s56
      %s58 = sshll.u32 [#allocation8], 4
      %s59 = int_to_ptr.vmem [resolvable:$true] %s58
      %64 = dma.hbm_to_vmem [thread:$0]  %s3, 2048, %s59, [#allocation9], 128, 128, 8
    $region17: #{tpu_custom_call.1} parent=1 // pred_fallthru
      _
    // Predicated region
    $region18: #{tpu_custom_call.1} parent=1 // pred_check
      _
    $region19: #{tpu_custom_call.1} parent=1 // pred_check_branch
      %66 = sbr.rel (0) target = $region21
    $region20: #{tpu_custom_call.1} parent=1 // pred_region
      %s68 = ssub.s32 2048, 2048
      %69 = vsyncadd [#allocation9], %s68
      %s70 = sshll.u32 [#allocation10], 4
      %s71 = int_to_ptr.vmem [resolvable:$true] %s70
      %76 = dma.hbm_to_vmem [thread:$0]  %s4, 2048, %s71, [#allocation9], 64, 64, 4
    $region21: #{tpu_custom_call.1} parent=1 // pred_fallthru
      _
    // Predicated region
    $region22: #{tpu_custom_call.1} parent=1 // pred_check
      _
    $region23: #{tpu_custom_call.1} parent=1 // pred_check_branch
      %78 = sbr.rel (0) target = $region25
    $region24: #{tpu_custom_call.1} parent=1 // pred_region
      _
    $region25: #{tpu_custom_call.1} parent=1 // pred_fallthru
      _
    // Predicated region
    $region26: #{tpu_custom_call.1} parent=1 // pred_check
      _
    $region27: #{tpu_custom_call.1} parent=1 // pred_check_branch
      %80 = sbr.rel (0) target = $region29
    $region28: #{tpu_custom_call.1} parent=1 // pred_region
      %s82 = ssub.s32 64, 64
      %83 = vsyncadd [#allocation12], %s82
      %s85 = sshll.u32 [#allocation11], 4
      %s86 = int_to_ptr.vmem [resolvable:$true] %s85
      %88 = dma.hbm_to_vmem [thread:$0]  %s6, 64, %s86, [#allocation12]
    $region29: #{tpu_custom_call.1} parent=1 // pred_fallthru
      _
    // Predicated region
    $region30: #{tpu_custom_call.1} parent=1 // pred_check
      _
    $region31: #{tpu_custom_call.1} parent=1 // pred_check_branch
      %90 = sbr.rel (0) target = $region33
    $region32: #{tpu_custom_call.1} parent=1 // pred_region
      %91 = dma.done [#allocation3], 256
    $region33: #{tpu_custom_call.1} parent=1 // pred_fallthru
      _
    // Predicated region
    $region34: #{tpu_custom_call.1} parent=1 // pred_check
      _
    $region35: #{tpu_custom_call.1} parent=1 // pred_check_branch
      %93 = sbr.rel (0) target = $region37
    $region36: #{tpu_custom_call.1} parent=1 // pred_region
      %94 = dma.done [#allocation6], 3072
    $region37: #{tpu_custom_call.1} parent=1 // pred_fallthru
      _
    // Predicated region
    $region38: #{tpu_custom_call.1} parent=1 // pred_check
      _
    $region39: #{tpu_custom_call.1} parent=1 // pred_check_branch
      %96 = sbr.rel (0) target = $region41
    $region40: #{tpu_custom_call.1} parent=1 // pred_region
      %97 = dma.done [#allocation6], 1024
    $region41: #{tpu_custom_call.1} parent=1 // pred_fallthru
      _
    // Predicated region
    $region42: #{tpu_custom_call.1} parent=1 // pred_check
      _
    $region43: #{tpu_custom_call.1} parent=1 // pred_check_branch
      %99 = sbr.rel (0) target = $region45
    $region44: #{tpu_custom_call.1} parent=1 // pred_region
      %100 = dma.done [#allocation9], 2048
    $region45: #{tpu_custom_call.1} parent=1 // pred_fallthru
      _
    // Predicated region
    $region46: #{tpu_custom_call.1} parent=1 // pred_check
      _
    $region47: #{tpu_custom_call.1} parent=1 // pred_check_branch
      %102 = sbr.rel (0) target = $region49
    $region48: #{tpu_custom_call.1} parent=1 // pred_region
      %103 = dma.done [#allocation9], 2048
    $region49: #{tpu_custom_call.1} parent=1 // pred_fallthru
      _
    // Predicated region
    $region50: #{tpu_custom_call.1} parent=1 // pred_check
      _
    $region51: #{tpu_custom_call.1} parent=1 // pred_check_branch
      %105 = sbr.rel (0) target = $region53
    $region52: #{tpu_custom_call.1} parent=1 // pred_region
      %106 = dma.done [#allocation12], 64
    $region53: #{tpu_custom_call.1} parent=1 // pred_fallthru
      _
    %v107 = vld [vmem:[#allocation2] sm:$0xff]
    %v108 = vld [vmem:[#allocation2 + $0x8] sm:$0xff]
    %v109 = vld [vmem:[%s5] sm:$0xff]
    %v110 = vld [vmem:[#allocation11] sm:$0xf]
    %v111 = vld [vmem:[#allocation5] sm:$0xff]
    %v112 = vld [vmem:[#allocation5 + $0x8] sm:$0xf]
    %v113 = vld [vmem:[#allocation5 + $0xc] sm:$0xff]
    %v114 = vld [vmem:[#allocation5 + $0x14] sm:$0xf]
    %v115 = vld [vmem:[#allocation5 + $0x18] sm:$0xff]
    %v116 = vld [vmem:[#allocation5 + $0x20] sm:$0xf]
    %v117 = vld [vmem:[#allocation5 + $0x24] sm:$0xff]
    %v118 = vld [vmem:[#allocation5 + $0x2c] sm:$0xf]
    %v119 = vld [vmem:[#allocation5 + $0x30] sm:$0xff]
    %v120 = vld [vmem:[#allocation5 + $0x38] sm:$0xf]
    %v121 = vld [vmem:[#allocation5 + $0x3c] sm:$0xff]
    %v122 = vld [vmem:[#allocation5 + $0x44] sm:$0xf]
    %v123 = vld [vmem:[#allocation5 + $0x48] sm:$0xff]
    %v124 = vld [vmem:[#allocation5 + $0x50] sm:$0xf]
    %v125 = vld [vmem:[#allocation5 + $0x54] sm:$0xff]
    %v126 = vld [vmem:[#allocation5 + $0x5c] sm:$0xf]
    %v127 = vld [vmem:[#allocation5 + $0x60] sm:$0xff]
    %v128 = vld [vmem:[#allocation5 + $0x68] sm:$0xf]
    %v129 = vld [vmem:[#allocation5 + $0x6c] sm:$0xff]
    %v130 = vld [vmem:[#allocation5 + $0x74] sm:$0xf]
    %v131 = vld [vmem:[#allocation5 + $0x78] sm:$0xff]
    %v132 = vld [vmem:[#allocation5 + $0x80] sm:$0xf]
    %v133 = vld [vmem:[#allocation5 + $0x84] sm:$0xff]
    %v134 = vld [vmem:[#allocation5 + $0x8c] sm:$0xf]
    %v135 = vld [vmem:[#allocation5 + $0x90] sm:$0xff]
    %v136 = vld [vmem:[#allocation5 + $0x98] sm:$0xf]
    %v137 = vld [vmem:[#allocation5 + $0x9c] sm:$0xff]
    %v138 = vld [vmem:[#allocation5 + $0xa4] sm:$0xf]
    %v139 = vld [vmem:[#allocation5 + $0xa8] sm:$0xff]
    %v140 = vld [vmem:[#allocation5 + $0xb0] sm:$0xf]
    %v141 = vld [vmem:[#allocation5 + $0xb4] sm:$0xff]
    %v142 = vld [vmem:[#allocation5 + $0xbc] sm:$0xf]
    %v143 = vunpack.c.l.bf16 %v111
    %v144 = vunpack.c.h.bf16 %v111
    %v145 = vunpack.c.l.bf16 %v112
    %v146 = vunpack.c.l.bf16 %v113
    %v147 = vunpack.c.h.bf16 %v113
    %v148 = vunpack.c.l.bf16 %v114
    %v149 = vunpack.c.l.bf16 %v115
    %v150 = vunpack.c.h.bf16 %v115
    %v151 = vunpack.c.l.bf16 %v116
    %v152 = vunpack.c.l.bf16 %v117
    %v153 = vunpack.c.h.bf16 %v117
    %v154 = vunpack.c.l.bf16 %v118
    %v155 = vunpack.c.l.bf16 %v119
    %v156 = vunpack.c.h.bf16 %v119
    %v157 = vunpack.c.l.bf16 %v120
    %v158 = vunpack.c.l.bf16 %v121
    %v159 = vunpack.c.h.bf16 %v121
    %v160 = vunpack.c.l.bf16 %v122
    %v161 = vunpack.c.l.bf16 %v123
    %v162 = vunpack.c.h.bf16 %v123
    %v163 = vunpack.c.l.bf16 %v124
    %v164 = vunpack.c.l.bf16 %v125
    %v165 = vunpack.c.h.bf16 %v125
    %v166 = vunpack.c.l.bf16 %v126
    %v167 = vunpack.c.l.bf16 %v127
    %v168 = vunpack.c.h.bf16 %v127
    %v169 = vunpack.c.l.bf16 %v128
    %v170 = vunpack.c.l.bf16 %v129
    %v171 = vunpack.c.h.bf16 %v129
    %v172 = vunpack.c.l.bf16 %v130
    %v173 = vunpack.c.l.bf16 %v131
    %v174 = vunpack.c.h.bf16 %v131
    %v175 = vunpack.c.l.bf16 %v132
    %v176 = vunpack.c.l.bf16 %v133
    %v177 = vunpack.c.h.bf16 %v133
    %v178 = vunpack.c.l.bf16 %v134
    %v179 = vunpack.c.l.bf16 %v135
    %v180 = vunpack.c.h.bf16 %v135
    %v181 = vunpack.c.l.bf16 %v136
    %v182 = vunpack.c.l.bf16 %v137
    %v183 = vunpack.c.h.bf16 %v137
    %v184 = vunpack.c.l.bf16 %v138
    %v185 = vunpack.c.l.bf16 %v139
    %v186 = vunpack.c.h.bf16 %v139
    %v187 = vunpack.c.l.bf16 %v140
    %v188 = vunpack.c.l.bf16 %v141
    %v189 = vunpack.c.h.bf16 %v141
    %v190 = vunpack.c.l.bf16 %v142
    %191 = vmatprep.subr.mxu0 %v189
    %192 = vmatpush1.msra.mxu0 %v188
    %193 = vmatprep.subr.mxu0 %v186
    %194 = vmatpush1.msra.mxu0 %v185
    %195 = vmatprep.subr.mxu0 %v183
    %196 = vmatpush1.msra.mxu0 %v182
    %197 = vmatprep.subr.mxu0 %v180
    %198 = vmatpush1.msra.mxu0 %v179
    %199 = vmatprep.subr.mxu0 %v177
    %200 = vmatpush1.msra.mxu0 %v176
    %201 = vmatprep.subr.mxu0 %v174
    %202 = vmatpush1.msra.mxu0 %v173
    %203 = vmatprep.subr.mxu0 %v171
    %204 = vmatpush1.msra.mxu0 %v170
    %205 = vmatprep.subr.mxu0 %v168
    %206 = vmatpush1.msra.mxu0 %v167
    %207 = vmatprep.subr.mxu0 %v165
    %208 = vmatpush1.msra.mxu0 %v164
    %209 = vmatprep.subr.mxu0 %v162
    %210 = vmatpush1.msra.mxu0 %v161
    %211 = vmatprep.subr.mxu0 %v159
    %212 = vmatpush1.msra.mxu0 %v158
    %213 = vmatprep.subr.mxu0 %v156
    %214 = vmatpush1.msra.mxu0 %v155
    %215 = vmatprep.subr.mxu0 %v153
    %216 = vmatpush1.msra.mxu0 %v152
    %217 = vmatprep.subr.mxu0 %v150
    %218 = vmatpush1.msra.mxu0 %v149
    %219 = vmatprep.subr.mxu0 %v147
    %220 = vmatpush1.msra.mxu0 %v146
    %221 = vmatprep.subr.mxu0 %v144
    %222 = vmatpush1.msra.mxu0 %v143
    %223 = vmatprep.subr.mxu0 0.0
    %224 = vmatpush2.msra.mxu0 0.0
    %225 = vmatprep.subr.mxu0 0.0
    %226 = vmatpush2.msra.mxu0 0.0
    %227 = vmatprep.subr.mxu0 0.0
    %228 = vmatpush2.msra.mxu0 0.0
    %229 = vmatprep.subr.mxu0 0.0
    %230 = vmatpush2.msra.mxu0 0.0
    %231 = vmatprep.subr.mxu0 0.0
    %232 = vmatpush2.msra.mxu0 0.0
    %233 = vmatprep.subr.mxu0 0.0
    %234 = vmatpush2.msra.mxu0 0.0
    %235 = vmatprep.subr.mxu0 0.0
    %236 = vmatpush2.msra.mxu0 0.0
    %237 = vmatprep.subr.mxu0 0.0
    %238 = vmatpush2.msra.mxu0 0.0
    %239 = vmatprep.subr.mxu0 0.0
    %240 = vmatpush2.msra.mxu0 0.0
    %241 = vmatprep.subr.mxu0 0.0
    %242 = vmatpush2.msra.mxu0 0.0
    %243 = vmatprep.subr.mxu0 0.0
    %244 = vmatpush2.msra.mxu0 0.0
    %245 = vmatprep.subr.mxu0 0.0
    %246 = vmatpush2.msra.mxu0 0.0
    %247 = vmatprep.subr.mxu0 0.0
    %248 = vmatpush2.msra.mxu0 0.0
    %249 = vmatprep.subr.mxu0 0.0
    %250 = vmatpush2.msra.mxu0 0.0
    %251 = vmatprep.subr.mxu0 0.0
    %252 = vmatpush2.msra.mxu0 0.0
    %253 = vmatprep.subr.mxu0 0.0
    %254 = vmatpush2.msra.mxu0 0.0
    %255 = vmatprep.mubr.f32.mxu0 0.0
    %256 = vmatmul.mubr.f32.gmra.mxu0 %v107
    %v257 = vpop.f32.mrf.mxu0
    %v258 = vadd.f32 0.0, %v257
    %v259 = vpop.f32.mrf.mxu0
    %v260 = vadd.f32 0.0, %v259
    %261 = vmatprep.mubr.f32.mxu0 0.0
    %262 = vmatmul.mubr.f32.gmra.mxu0 %v108
    %v263 = vpop.f32.mrf.mxu0
    %v264 = vadd.f32 0.0, %v263
    %v265 = vpop.f32.mrf.mxu0
    %v266 = vadd.f32 0.0, %v265
    %267 = vdwg.mxu0
    %268 = vmatprep.subr.mxu0 0.0
    %269 = vmatpush1.msra.mxu0 %v190
    %270 = vmatprep.subr.mxu0 0.0
    %271 = vmatpush1.msra.mxu0 %v187
    %272 = vmatprep.subr.mxu0 0.0
    %273 = vmatpush1.msra.mxu0 %v184
    %274 = vmatprep.subr.mxu0 0.0
    %275 = vmatpush1.msra.mxu0 %v181
    %276 = vmatprep.subr.mxu0 0.0
    %277 = vmatpush1.msra.mxu0 %v178
    %278 = vmatprep.subr.mxu0 0.0
    %279 = vmatpush1.msra.mxu0 %v175
    %280 = vmatprep.subr.mxu0 0.0
    %281 = vmatpush1.msra.mxu0 %v172
    %282 = vmatprep.subr.mxu0 0.0
    %283 = vmatpush1.msra.mxu0 %v169
    %284 = vmatprep.subr.mxu0 0.0
    %285 = vmatpush1.msra.mxu0 %v166
    %286 = vmatprep.subr.mxu0 0.0
    %287 = vmatpush1.msra.mxu0 %v163
    %288 = vmatprep.subr.mxu0 0.0
    %289 = vmatpush1.msra.mxu0 %v160
    %290 = vmatprep.subr.mxu0 0.0
    %291 = vmatpush1.msra.mxu0 %v157
    %292 = vmatprep.subr.mxu0 0.0
    %293 = vmatpush1.msra.mxu0 %v154
    %294 = vmatprep.subr.mxu0 0.0
    %295 = vmatpush1.msra.mxu0 %v151
    %296 = vmatprep.subr.mxu0 0.0
    %297 = vmatpush1.msra.mxu0 %v148
    %298 = vmatprep.subr.mxu0 0.0
    %299 = vmatpush1.msra.mxu0 %v145
    %300 = vmatprep.subr.mxu0 0.0
    %301 = vmatpush2.msra.mxu0 0.0
    %302 = vmatprep.subr.mxu0 0.0
    %303 = vmatpush2.msra.mxu0 0.0
    %304 = vmatprep.subr.mxu0 0.0
    %305 = vmatpush2.msra.mxu0 0.0
    %306 = vmatprep.subr.mxu0 0.0
    %307 = vmatpush2.msra.mxu0 0.0
    %308 = vmatprep.subr.mxu0 0.0
    %309 = vmatpush2.msra.mxu0 0.0
    %310 = vmatprep.subr.mxu0 0.0
    %311 = vmatpush2.msra.mxu0 0.0
    %312 = vmatprep.subr.mxu0 0.0
    %313 = vmatpush2.msra.mxu0 0.0
    %314 = vmatprep.subr.mxu0 0.0
    %315 = vmatpush2.msra.mxu0 0.0
    %316 = vmatprep.subr.mxu0 0.0
    %317 = vmatpush2.msra.mxu0 0.0
    %318 = vmatprep.subr.mxu0 0.0
    %319 = vmatpush2.msra.mxu0 0.0
    %320 = vmatprep.subr.mxu0 0.0
    %321 = vmatpush2.msra.mxu0 0.0
    %322 = vmatprep.subr.mxu0 0.0
    %323 = vmatpush2.msra.mxu0 0.0
    %324 = vmatprep.subr.mxu0 0.0
    %325 = vmatpush2.msra.mxu0 0.0
    %326 = vmatprep.subr.mxu0 0.0
    %327 = vmatpush2.msra.mxu0 0.0
    %328 = vmatprep.subr.mxu0 0.0
    %329 = vmatpush2.msra.mxu0 0.0
    %330 = vmatprep.subr.mxu0 0.0
    %331 = vmatpush2.msra.mxu0 0.0
    %332 = vmatprep.mubr.f32.mxu0 0.0
    %333 = vmatmul.mubr.f32.gmra.mxu0 %v107
    %v334 = vpop.f32.mrf.mxu0
    %v335 = vadd.f32 0.0, %v334
    %v336 = vpop.f32.mrf.mxu0
    %337 = vmatprep.mubr.f32.mxu0 0.0
    %338 = vmatmul.mubr.f32.gmra.mxu0 %v108
    %v339 = vpop.f32.mrf.mxu0
    %v340 = vadd.f32 0.0, %v339
    %v341 = vpop.f32.mrf.mxu0
    %342 = vdwg.mxu0
    %v343 = vlaneseq
    %v344 = vshrl.u32 %v343, 7
    %v345 = vsub.s32 0, %v344
    %v346 = vrot.slane %v109, %v345
    %v347 = vadd.f32 %v258, %v346
    %v348 = vadd.f32 %v264, %v346
    %v349 = vlaneseq
    %v350 = vshrl.u32 %v349, 7
    %v351 = vsub.s32 1, %v350
    %v352 = vrot.slane %v109, %v351
    %v353 = vadd.f32 %v260, %v352
    %v354 = vadd.f32 %v266, %v352
    %v355 = vlaneseq
    %v356 = vshrl.u32 %v355, 7
    %v357 = vsub.s32 2, %v356
    %v358 = vrot.slane %v109, %v357
    %v359 = vadd.f32 %v335, %v358
    %v360 = vadd.f32 %v340, %v358
    %v361 = vld [vmem:[#allocation7] sm:$0xf]
    %v362 = vld [vmem:[#allocation7 + $0x4] sm:$0xf]
    %v363 = vld [vmem:[#allocation7 + $0x8] sm:$0xf]
    %v364 = vld [vmem:[#allocation7 + $0xc] sm:$0xf]
    %v365 = vld [vmem:[#allocation7 + $0x10] sm:$0xf]
    %v366 = vld [vmem:[#allocation7 + $0x14] sm:$0xf]
    %v367 = vld [vmem:[#allocation7 + $0x18] sm:$0xf]
    %v368 = vld [vmem:[#allocation7 + $0x1c] sm:$0xf]
    %v369 = vld [vmem:[#allocation7 + $0x20] sm:$0xf]
    %v370 = vld [vmem:[#allocation7 + $0x24] sm:$0xf]
    %v371 = vld [vmem:[#allocation7 + $0x28] sm:$0xf]
    %v372 = vld [vmem:[#allocation7 + $0x2c] sm:$0xf]
    %v373 = vld [vmem:[#allocation7 + $0x30] sm:$0xf]
    %v374 = vld [vmem:[#allocation7 + $0x34] sm:$0xf]
    %v375 = vld [vmem:[#allocation7 + $0x38] sm:$0xf]
    %v376 = vld [vmem:[#allocation7 + $0x3c] sm:$0xf]
    %v377 = vunpack.c.l.bf16 %v361
    %v378 = vunpack.c.l.bf16 %v362
    %v379 = vunpack.c.l.bf16 %v363
    %v380 = vunpack.c.l.bf16 %v364
    %v381 = vunpack.c.l.bf16 %v365
    %v382 = vunpack.c.l.bf16 %v366
    %v383 = vunpack.c.l.bf16 %v367
    %v384 = vunpack.c.l.bf16 %v368
    %v385 = vunpack.c.l.bf16 %v369
    %v386 = vunpack.c.l.bf16 %v370
    %v387 = vunpack.c.l.bf16 %v371
    %v388 = vunpack.c.l.bf16 %v372
    %v389 = vunpack.c.l.bf16 %v373
    %v390 = vunpack.c.l.bf16 %v374
    %v391 = vunpack.c.l.bf16 %v375
    %v392 = vunpack.c.l.bf16 %v376
    %vm393 = vcmask 261120
    %v395 = vsel %vm393, %v347, 0
    %v398 = vsel %vm393, %v353, 0
    %400 = vmatprep.subr.mxu0 0.0
    %401 = vmatpush1.xpose.msra.mxu0 0.0
    %402 = vmatprep.subr.mxu0 0.0
    %403 = vmatpush1.xpose.msra.mxu0 0.0
    %404 = vmatprep.subr.mxu0 0.0
    %405 = vmatpush1.xpose.msra.mxu0 0.0
    %406 = vmatprep.subr.mxu0 0.0
    %407 = vmatpush1.xpose.msra.mxu0 0.0
    %408 = vmatprep.subr.mxu0 0.0
    %409 = vmatpush1.xpose.msra.mxu0 0.0
    %410 = vmatprep.subr.mxu0 0.0
    %411 = vmatpush1.xpose.msra.mxu0 0.0
    %412 = vmatprep.subr.mxu0 0.0
    %413 = vmatpush1.xpose.msra.mxu0 0.0
    %414 = vmatprep.subr.mxu0 0.0
    %415 = vmatpush1.xpose.msra.mxu0 0.0
    %416 = vmatprep.subr.mxu0 0.0
    %417 = vmatpush1.xpose.msra.mxu0 0.0
    %418 = vmatprep.subr.mxu0 0.0
    %419 = vmatpush1.xpose.msra.mxu0 0.0
    %420 = vmatprep.subr.mxu0 0.0
    %421 = vmatpush1.xpose.msra.mxu0 0.0
    %422 = vmatprep.subr.mxu0 0.0
    %423 = vmatpush1.xpose.msra.mxu0 0.0
    %424 = vmatprep.subr.mxu0 0.0
    %425 = vmatpush1.xpose.msra.mxu0 0.0
    %426 = vmatprep.subr.mxu0 0.0
    %427 = vmatpush1.xpose.msra.mxu0 0.0
    %428 = vmatprep.subr.mxu0 0.0
    %429 = vmatpush1.xpose.msra.mxu0 0.0
    %430 = vmatprep.subr.mxu0 0.0
    %431 = vmatpush1.xpose.msra.mxu0 %v398
    %432 = vmatprep.subr.mxu0 0.0
    %433 = vmatpush2.xpose.msra.mxu0 0.0
    %434 = vmatprep.subr.mxu0 0.0
    %435 = vmatpush2.xpose.msra.mxu0 0.0
    %436 = vmatprep.subr.mxu0 0.0
    %437 = vmatpush2.xpose.msra.mxu0 0.0
    %438 = vmatprep.subr.mxu0 0.0
    %439 = vmatpush2.xpose.msra.mxu0 0.0
    %440 = vmatprep.subr.mxu0 0.0
    %441 = vmatpush2.xpose.msra.mxu0 0.0
    %442 = vmatprep.subr.mxu0 0.0
    %443 = vmatpush2.xpose.msra.mxu0 0.0
    %444 = vmatprep.subr.mxu0 0.0
    %445 = vmatpush2.xpose.msra.mxu0 0.0
    %446 = vmatprep.subr.mxu0 0.0
    %447 = vmatpush2.xpose.msra.mxu0 0.0
    %448 = vmatprep.subr.mxu0 0.0
    %449 = vmatpush2.xpose.msra.mxu0 0.0
    %450 = vmatprep.subr.mxu0 0.0
    %451 = vmatpush2.xpose.msra.mxu0 0.0
    %452 = vmatprep.subr.mxu0 0.0
    %453 = vmatpush2.xpose.msra.mxu0 0.0
    %454 = vmatprep.subr.mxu0 0.0
    %455 = vmatpush2.xpose.msra.mxu0 0.0
    %456 = vmatprep.subr.mxu0 0.0
    %457 = vmatpush2.xpose.msra.mxu0 0.0
    %458 = vmatprep.subr.mxu0 0.0
    %459 = vmatpush2.xpose.msra.mxu0 0.0
    %460 = vmatprep.subr.mxu0 0.0
    %461 = vmatpush2.xpose.msra.mxu0 0.0
    %462 = vmatprep.subr.mxu0 0.0
    %463 = vmatpush2.xpose.msra.mxu0 0.0
    %464 = vmatprep.mubr.f32.mxu0 0.0
    %465 = vmatmul.mubr.f32.gmra.mxu0 %v395
    %v466 = vpop.f32.mrf.mxu0
    %v467 = vadd.f32 0.0, %v466
    %v468 = vpop.f32.mrf.mxu0
    %469 = vdwg.mxu0
    %v470 = vmul.f32 %v467, 0.17677669
    %vm471 = vcmask 64512
    %v472 = vsel %vm471, %v470, -inf
    %473 = vmax.xlane.f32.xlu0 %v472
    %v474 = vpop.xlane.xlu0 %473
    %v475 = vsub.f32 %v470, %v474
    %v476 = vmul.f32 %v475, 1.442695
    %v477 = vpow.pop %v476
    %v478 = vsel %vm471, %v477, 0.0
    %479 = vadd.xlane.f32.xlu0 %v478
    %v480 = vpop.xlane.xlu0 %479
    %v481 = vrcp.pop %v480
    %v482 = vmul.f32 %v477, %v481
    %v484 = vsel %vm471, %v482, 0
    %486 = vmatprep.subr.mxu0 0.0
    %487 = vmatpush1.msra.mxu0 0.0
    %488 = vmatprep.subr.mxu0 0.0
    %489 = vmatpush1.msra.mxu0 0.0
    %490 = vmatprep.subr.mxu0 0.0
    %491 = vmatpush1.msra.mxu0 0.0
    %492 = vmatprep.subr.mxu0 0.0
    %493 = vmatpush1.msra.mxu0 0.0
    %494 = vmatprep.subr.mxu0 0.0
    %495 = vmatpush1.msra.mxu0 0.0
    %496 = vmatprep.subr.mxu0 0.0
    %497 = vmatpush1.msra.mxu0 0.0
    %498 = vmatprep.subr.mxu0 0.0
    %499 = vmatpush1.msra.mxu0 0.0
    %500 = vmatprep.subr.mxu0 0.0
    %501 = vmatpush1.msra.mxu0 0.0
    %502 = vmatprep.subr.mxu0 0.0
    %503 = vmatpush1.msra.mxu0 0.0
    %504 = vmatprep.subr.mxu0 0.0
    %505 = vmatpush1.msra.mxu0 0.0
    %506 = vmatprep.subr.mxu0 0.0
    %507 = vmatpush1.msra.mxu0 0.0
    %508 = vmatprep.subr.mxu0 0.0
    %509 = vmatpush1.msra.mxu0 0.0
    %510 = vmatprep.subr.mxu0 0.0
    %511 = vmatpush1.msra.mxu0 0.0
    %512 = vmatprep.subr.mxu0 0.0
    %513 = vmatpush1.msra.mxu0 0.0
    %514 = vmatprep.subr.mxu0 0.0
    %515 = vmatpush1.msra.mxu0 0.0
    %516 = vmatprep.subr.mxu0 0.0
    %517 = vmatpush1.msra.mxu0 %v359
    %518 = vmatprep.subr.mxu0 0.0
    %519 = vmatpush2.msra.mxu0 0.0
    %520 = vmatprep.subr.mxu0 0.0
    %521 = vmatpush2.msra.mxu0 0.0
    %522 = vmatprep.subr.mxu0 0.0
    %523 = vmatpush2.msra.mxu0 0.0
    %524 = vmatprep.subr.mxu0 0.0
    %525 = vmatpush2.msra.mxu0 0.0
    %526 = vmatprep.subr.mxu0 0.0
    %527 = vmatpush2.msra.mxu0 0.0
    %528 = vmatprep.subr.mxu0 0.0
    %529 = vmatpush2.msra.mxu0 0.0
    %530 = vmatprep.subr.mxu0 0.0
    %531 = vmatpush2.msra.mxu0 0.0
    %532 = vmatprep.subr.mxu0 0.0
    %533 = vmatpush2.msra.mxu0 0.0
    %534 = vmatprep.subr.mxu0 0.0
    %535 = vmatpush2.msra.mxu0 0.0
    %536 = vmatprep.subr.mxu0 0.0
    %537 = vmatpush2.msra.mxu0 0.0
    %538 = vmatprep.subr.mxu0 0.0
    %539 = vmatpush2.msra.mxu0 0.0
    %540 = vmatprep.subr.mxu0 0.0
    %541 = vmatpush2.msra.mxu0 0.0
    %542 = vmatprep.subr.mxu0 0.0
    %543 = vmatpush2.msra.mxu0 0.0
    %544 = vmatprep.subr.mxu0 0.0
    %545 = vmatpush2.msra.mxu0 0.0
    %546 = vmatprep.subr.mxu0 0.0
    %547 = vmatpush2.msra.mxu0 0.0
    %548 = vmatprep.subr.mxu0 0.0
    %549 = vmatpush2.msra.mxu0 0.0
    %550 = vmatprep.mubr.f32.mxu0 0.0
    %551 = vmatmul.mubr.f32.gmra.mxu0 %v484
    %v552 = vpop.f32.mrf.mxu0
    %v553 = vadd.f32 0.0, %v552
    %v554 = vpop.f32.mrf.mxu0
    %555 = vdwg.mxu0
    %556 = vrot.lane.b32.xlu0 %v347, 96
    %v557 = vpop.permute.xlu0 %556
    %558 = vrot.lane.b32.xlu0 %v353, 96
    %v559 = vpop.permute.xlu0 %558
    %v560 = vsel %vm393, %v557, 0
    %v562 = vsel %vm393, %v559, 0
    %564 = vmatprep.subr.mxu0 0.0
    %565 = vmatpush1.xpose.msra.mxu0 0.0
    %566 = vmatprep.subr.mxu0 0.0
    %567 = vmatpush1.xpose.msra.mxu0 0.0
    %568 = vmatprep.subr.mxu0 0.0
    %569 = vmatpush1.xpose.msra.mxu0 0.0
    %570 = vmatprep.subr.mxu0 0.0
    %571 = vmatpush1.xpose.msra.mxu0 0.0
    %572 = vmatprep.subr.mxu0 0.0
    %573 = vmatpush1.xpose.msra.mxu0 0.0
    %574 = vmatprep.subr.mxu0 0.0
    %575 = vmatpush1.xpose.msra.mxu0 0.0
    %576 = vmatprep.subr.mxu0 0.0
    %577 = vmatpush1.xpose.msra.mxu0 0.0
    %578 = vmatprep.subr.mxu0 0.0
    %579 = vmatpush1.xpose.msra.mxu0 0.0
    %580 = vmatprep.subr.mxu0 0.0
    %581 = vmatpush1.xpose.msra.mxu0 0.0
    %582 = vmatprep.subr.mxu0 0.0
    %583 = vmatpush1.xpose.msra.mxu0 0.0
    %584 = vmatprep.subr.mxu0 0.0
    %585 = vmatpush1.xpose.msra.mxu0 0.0
    %586 = vmatprep.subr.mxu0 0.0
    %587 = vmatpush1.xpose.msra.mxu0 0.0
    %588 = vmatprep.subr.mxu0 0.0
    %589 = vmatpush1.xpose.msra.mxu0 0.0
    %590 = vmatprep.subr.mxu0 0.0
    %591 = vmatpush1.xpose.msra.mxu0 0.0
    %592 = vmatprep.subr.mxu0 0.0
    %593 = vmatpush1.xpose.msra.mxu0 0.0
    %594 = vmatprep.subr.mxu0 0.0
    %595 = vmatpush1.xpose.msra.mxu0 %v562
    %596 = vmatprep.subr.mxu0 0.0
    %597 = vmatpush2.xpose.msra.mxu0 0.0
    %598 = vmatprep.subr.mxu0 0.0
    %599 = vmatpush2.xpose.msra.mxu0 0.0
    %600 = vmatprep.subr.mxu0 0.0
    %601 = vmatpush2.xpose.msra.mxu0 0.0
    %602 = vmatprep.subr.mxu0 0.0
    %603 = vmatpush2.xpose.msra.mxu0 0.0
    %604 = vmatprep.subr.mxu0 0.0
    %605 = vmatpush2.xpose.msra.mxu0 0.0
    %606 = vmatprep.subr.mxu0 0.0
    %607 = vmatpush2.xpose.msra.mxu0 0.0
    %608 = vmatprep.subr.mxu0 0.0
    %609 = vmatpush2.xpose.msra.mxu0 0.0
    %610 = vmatprep.subr.mxu0 0.0
    %611 = vmatpush2.xpose.msra.mxu0 0.0
    %612 = vmatprep.subr.mxu0 0.0
    %613 = vmatpush2.xpose.msra.mxu0 0.0
    %614 = vmatprep.subr.mxu0 0.0
    %615 = vmatpush2.xpose.msra.mxu0 0.0
    %616 = vmatprep.subr.mxu0 0.0
    %617 = vmatpush2.xpose.msra.mxu0 0.0
    %618 = vmatprep.subr.mxu0 0.0
    %619 = vmatpush2.xpose.msra.mxu0 0.0
    %620 = vmatprep.subr.mxu0 0.0
    %621 = vmatpush2.xpose.msra.mxu0 0.0
    %622 = vmatprep.subr.mxu0 0.0
    %623 = vmatpush2.xpose.msra.mxu0 0.0
    %624 = vmatprep.subr.mxu0 0.0
    %625 = vmatpush2.xpose.msra.mxu0 0.0
    %626 = vmatprep.subr.mxu0 0.0
    %627 = vmatpush2.xpose.msra.mxu0 0.0
    %628 = vmatprep.mubr.f32.mxu0 0.0
    %629 = vmatmul.mubr.f32.gmra.mxu0 %v560
    %v630 = vpop.f32.mrf.mxu0
    %v631 = vadd.f32 0.0, %v630
    %v632 = vpop.f32.mrf.mxu0
    %633 = vdwg.mxu0
    %v634 = vmul.f32 %v631, 0.17677669
    %v635 = vsel %vm471, %v634, -inf
    %636 = vmax.xlane.f32.xlu0 %v635
    %v637 = vpop.xlane.xlu0 %636
    %v638 = vsub.f32 %v634, %v637
    %v639 = vmul.f32 %v638, 1.442695
    %v640 = vpow.pop %v639
    %v641 = vsel %vm471, %v640, 0.0
    %642 = vadd.xlane.f32.xlu0 %v641
    %v643 = vpop.xlane.xlu0 %642
    %v644 = vrcp.pop %v643
    %v645 = vmul.f32 %v640, %v644
    %647 = vrot.lane.b32.xlu0 %v359, 96
    %v648 = vpop.permute.xlu0 %647
    %v651 = vsel %vm471, %v645, 0
    %653 = vmatprep.subr.mxu0 0.0
    %654 = vmatpush1.msra.mxu0 0.0
    %655 = vmatprep.subr.mxu0 0.0
    %656 = vmatpush1.msra.mxu0 0.0
    %657 = vmatprep.subr.mxu0 0.0
    %658 = vmatpush1.msra.mxu0 0.0
    %659 = vmatprep.subr.mxu0 0.0
    %660 = vmatpush1.msra.mxu0 0.0
    %661 = vmatprep.subr.mxu0 0.0
    %662 = vmatpush1.msra.mxu0 0.0
    %663 = vmatprep.subr.mxu0 0.0
    %664 = vmatpush1.msra.mxu0 0.0
    %665 = vmatprep.subr.mxu0 0.0
    %666 = vmatpush1.msra.mxu0 0.0
    %667 = vmatprep.subr.mxu0 0.0
    %668 = vmatpush1.msra.mxu0 0.0
    %669 = vmatprep.subr.mxu0 0.0
    %670 = vmatpush1.msra.mxu0 0.0
    %671 = vmatprep.subr.mxu0 0.0
    %672 = vmatpush1.msra.mxu0 0.0
    %673 = vmatprep.subr.mxu0 0.0
    %674 = vmatpush1.msra.mxu0 0.0
    %675 = vmatprep.subr.mxu0 0.0
    %676 = vmatpush1.msra.mxu0 0.0
    %677 = vmatprep.subr.mxu0 0.0
    %678 = vmatpush1.msra.mxu0 0.0
    %679 = vmatprep.subr.mxu0 0.0
    %680 = vmatpush1.msra.mxu0 0.0
    %681 = vmatprep.subr.mxu0 0.0
    %682 = vmatpush1.msra.mxu0 0.0
    %683 = vmatprep.subr.mxu0 0.0
    %684 = vmatpush1.msra.mxu0 %v648
    %685 = vmatprep.subr.mxu0 0.0
    %686 = vmatpush2.msra.mxu0 0.0
    %687 = vmatprep.subr.mxu0 0.0
    %688 = vmatpush2.msra.mxu0 0.0
    %689 = vmatprep.subr.mxu0 0.0
    %690 = vmatpush2.msra.mxu0 0.0
    %691 = vmatprep.subr.mxu0 0.0
    %692 = vmatpush2.msra.mxu0 0.0
    %693 = vmatprep.subr.mxu0 0.0
    %694 = vmatpush2.msra.mxu0 0.0
    %695 = vmatprep.subr.mxu0 0.0
    %696 = vmatpush2.msra.mxu0 0.0
    %697 = vmatprep.subr.mxu0 0.0
    %698 = vmatpush2.msra.mxu0 0.0
    %699 = vmatprep.subr.mxu0 0.0
    %700 = vmatpush2.msra.mxu0 0.0
    %701 = vmatprep.subr.mxu0 0.0
    %702 = vmatpush2.msra.mxu0 0.0
    %703 = vmatprep.subr.mxu0 0.0
    %704 = vmatpush2.msra.mxu0 0.0
    %705 = vmatprep.subr.mxu0 0.0
    %706 = vmatpush2.msra.mxu0 0.0
    %707 = vmatprep.subr.mxu0 0.0
    %708 = vmatpush2.msra.mxu0 0.0
    %709 = vmatprep.subr.mxu0 0.0
    %710 = vmatpush2.msra.mxu0 0.0
    %711 = vmatprep.subr.mxu0 0.0
    %712 = vmatpush2.msra.mxu0 0.0
    %713 = vmatprep.subr.mxu0 0.0
    %714 = vmatpush2.msra.mxu0 0.0
    %715 = vmatprep.subr.mxu0 0.0
    %716 = vmatpush2.msra.mxu0 0.0
    %717 = vmatprep.mubr.f32.mxu0 0.0
    %718 = vmatmul.mubr.f32.gmra.mxu0 %v651
    %v719 = vpop.f32.mrf.mxu0
    %v720 = vadd.f32 0.0, %v719
    %v721 = vpop.f32.mrf.mxu0
    %722 = vdwg.mxu0
    %v724 = vsel %vm393, %v720, 0
    %726 = vmatprep.subr.mxu0 0.0
    %727 = vmatpush1.msra.mxu0 0.0
    %728 = vmatprep.subr.mxu0 0.0
    %729 = vmatpush1.msra.mxu0 0.0
    %730 = vmatprep.subr.mxu0 0.0
    %731 = vmatpush1.msra.mxu0 0.0
    %732 = vmatprep.subr.mxu0 0.0
    %733 = vmatpush1.msra.mxu0 0.0
    %734 = vmatprep.subr.mxu0 0.0
    %735 = vmatpush1.msra.mxu0 0.0
    %736 = vmatprep.subr.mxu0 0.0
    %737 = vmatpush1.msra.mxu0 0.0
    %738 = vmatprep.subr.mxu0 0.0
    %739 = vmatpush1.msra.mxu0 0.0
    %740 = vmatprep.subr.mxu0 0.0
    %741 = vmatpush1.msra.mxu0 0.0
    %742 = vmatprep.subr.mxu0 0.0
    %743 = vmatpush1.msra.mxu0 0.0
    %744 = vmatprep.subr.mxu0 0.0
    %745 = vmatpush1.msra.mxu0 0.0
    %746 = vmatprep.subr.mxu0 0.0
    %747 = vmatpush1.msra.mxu0 0.0
    %748 = vmatprep.subr.mxu0 0.0
    %749 = vmatpush1.msra.mxu0 0.0
    %750 = vmatprep.subr.mxu0 0.0
    %751 = vmatpush1.msra.mxu0 %v384
    %752 = vmatprep.subr.mxu0 0.0
    %753 = vmatpush1.msra.mxu0 %v383
    %754 = vmatprep.subr.mxu0 0.0
    %755 = vmatpush1.msra.mxu0 %v382
    %756 = vmatprep.subr.mxu0 0.0
    %757 = vmatpush1.msra.mxu0 %v381
    %758 = vmatprep.subr.mxu0 0.0
    %759 = vmatpush2.msra.mxu0 0.0
    %760 = vmatprep.subr.mxu0 0.0
    %761 = vmatpush2.msra.mxu0 0.0
    %762 = vmatprep.subr.mxu0 0.0
    %763 = vmatpush2.msra.mxu0 0.0
    %764 = vmatprep.subr.mxu0 0.0
    %765 = vmatpush2.msra.mxu0 0.0
    %766 = vmatprep.subr.mxu0 0.0
    %767 = vmatpush2.msra.mxu0 0.0
    %768 = vmatprep.subr.mxu0 0.0
    %769 = vmatpush2.msra.mxu0 0.0
    %770 = vmatprep.subr.mxu0 0.0
    %771 = vmatpush2.msra.mxu0 0.0
    %772 = vmatprep.subr.mxu0 0.0
    %773 = vmatpush2.msra.mxu0 0.0
    %774 = vmatprep.subr.mxu0 0.0
    %775 = vmatpush2.msra.mxu0 0.0
    %776 = vmatprep.subr.mxu0 0.0
    %777 = vmatpush2.msra.mxu0 0.0
    %778 = vmatprep.subr.mxu0 0.0
    %779 = vmatpush2.msra.mxu0 0.0
    %780 = vmatprep.subr.mxu0 0.0
    %781 = vmatpush2.msra.mxu0 0.0
    %782 = vmatprep.subr.mxu0 0.0
    %783 = vmatpush2.msra.mxu0 0.0
    %784 = vmatprep.subr.mxu0 0.0
    %785 = vmatpush2.msra.mxu0 0.0
    %786 = vmatprep.subr.mxu0 0.0
    %787 = vmatpush2.msra.mxu0 0.0
    %788 = vmatprep.subr.mxu0 0.0
    %789 = vmatpush2.msra.mxu0 0.0
    %790 = vmatprep.mubr.f32.mxu0 0.0
    %791 = vmatmul.mubr.f32.gmra.mxu0 %v724
    %v792 = vpop.f32.mrf.mxu0
    %v793 = vadd.f32 0.0, %v792
    %v794 = vpop.f32.mrf.mxu0
    %795 = vdwg.mxu0
    %v797 = vsel %vm393, %v553, 0
    %799 = vmatprep.subr.mxu0 0.0
    %800 = vmatpush1.msra.mxu0 0.0
    %801 = vmatprep.subr.mxu0 0.0
    %802 = vmatpush1.msra.mxu0 0.0
    %803 = vmatprep.subr.mxu0 0.0
    %804 = vmatpush1.msra.mxu0 0.0
    %805 = vmatprep.subr.mxu0 0.0
    %806 = vmatpush1.msra.mxu0 0.0
    %807 = vmatprep.subr.mxu0 0.0
    %808 = vmatpush1.msra.mxu0 0.0
    %809 = vmatprep.subr.mxu0 0.0
    %810 = vmatpush1.msra.mxu0 0.0
    %811 = vmatprep.subr.mxu0 0.0
    %812 = vmatpush1.msra.mxu0 0.0
    %813 = vmatprep.subr.mxu0 0.0
    %814 = vmatpush1.msra.mxu0 0.0
    %815 = vmatprep.subr.mxu0 0.0
    %816 = vmatpush1.msra.mxu0 0.0
    %817 = vmatprep.subr.mxu0 0.0
    %818 = vmatpush1.msra.mxu0 0.0
    %819 = vmatprep.subr.mxu0 0.0
    %820 = vmatpush1.msra.mxu0 0.0
    %821 = vmatprep.subr.mxu0 0.0
    %822 = vmatpush1.msra.mxu0 0.0
    %823 = vmatprep.subr.mxu0 0.0
    %824 = vmatpush1.msra.mxu0 %v380
    %825 = vmatprep.subr.mxu0 0.0
    %826 = vmatpush1.msra.mxu0 %v379
    %827 = vmatprep.subr.mxu0 0.0
    %828 = vmatpush1.msra.mxu0 %v378
    %829 = vmatprep.subr.mxu0 0.0
    %830 = vmatpush1.msra.mxu0 %v377
    %831 = vmatprep.subr.mxu0 0.0
    %832 = vmatpush2.msra.mxu0 0.0
    %833 = vmatprep.subr.mxu0 0.0
    %834 = vmatpush2.msra.mxu0 0.0
    %835 = vmatprep.subr.mxu0 0.0
    %836 = vmatpush2.msra.mxu0 0.0
    %837 = vmatprep.subr.mxu0 0.0
    %838 = vmatpush2.msra.mxu0 0.0
    %839 = vmatprep.subr.mxu0 0.0
    %840 = vmatpush2.msra.mxu0 0.0
    %841 = vmatprep.subr.mxu0 0.0
    %842 = vmatpush2.msra.mxu0 0.0
    %843 = vmatprep.subr.mxu0 0.0
    %844 = vmatpush2.msra.mxu0 0.0
    %845 = vmatprep.subr.mxu0 0.0
    %846 = vmatpush2.msra.mxu0 0.0
    %847 = vmatprep.subr.mxu0 0.0
    %848 = vmatpush2.msra.mxu0 0.0
    %849 = vmatprep.subr.mxu0 0.0
    %850 = vmatpush2.msra.mxu0 0.0
    %851 = vmatprep.subr.mxu0 0.0
    %852 = vmatpush2.msra.mxu0 0.0
    %853 = vmatprep.subr.mxu0 0.0
    %854 = vmatpush2.msra.mxu0 0.0
    %855 = vmatprep.subr.mxu0 0.0
    %856 = vmatpush2.msra.mxu0 0.0
    %857 = vmatprep.subr.mxu0 0.0
    %858 = vmatpush2.msra.mxu0 0.0
    %859 = vmatprep.subr.mxu0 0.0
    %860 = vmatpush2.msra.mxu0 0.0
    %861 = vmatprep.subr.mxu0 0.0
    %862 = vmatpush2.msra.mxu0 0.0
    %863 = vmatprep.mubr.f32.mxu0 0.0
    %864 = vmatmul.mubr.f32.gmra.mxu0 %v797
    %v865 = vpop.f32.mrf.mxu0
    %v866 = vadd.f32 %v793, %v865
    %v867 = vpop.f32.mrf.mxu0
    %868 = vdwg.mxu0
    %869 = vrot.lane.b32.xlu0 %v347, 64
    %v870 = vpop.permute.xlu0 %869
    %871 = vrot.lane.b32.xlu0 %v353, 64
    %v872 = vpop.permute.xlu0 %871
    %v873 = vsel %vm393, %v870, 0
    %v875 = vsel %vm393, %v872, 0
    %877 = vmatprep.subr.mxu0 0.0
    %878 = vmatpush1.xpose.msra.mxu0 0.0
    %879 = vmatprep.subr.mxu0 0.0
    %880 = vmatpush1.xpose.msra.mxu0 0.0
    %881 = vmatprep.subr.mxu0 0.0
    %882 = vmatpush1.xpose.msra.mxu0 0.0
    %883 = vmatprep.subr.mxu0 0.0
    %884 = vmatpush1.xpose.msra.mxu0 0.0
    %885 = vmatprep.subr.mxu0 0.0
    %886 = vmatpush1.xpose.msra.mxu0 0.0
    %887 = vmatprep.subr.mxu0 0.0
    %888 = vmatpush1.xpose.msra.mxu0 0.0
    %889 = vmatprep.subr.mxu0 0.0
    %890 = vmatpush1.xpose.msra.mxu0 0.0
    %891 = vmatprep.subr.mxu0 0.0
    %892 = vmatpush1.xpose.msra.mxu0 0.0
    %893 = vmatprep.subr.mxu0 0.0
    %894 = vmatpush1.xpose.msra.mxu0 0.0
    %895 = vmatprep.subr.mxu0 0.0
    %896 = vmatpush1.xpose.msra.mxu0 0.0
    %897 = vmatprep.subr.mxu0 0.0
    %898 = vmatpush1.xpose.msra.mxu0 0.0
    %899 = vmatprep.subr.mxu0 0.0
    %900 = vmatpush1.xpose.msra.mxu0 0.0
    %901 = vmatprep.subr.mxu0 0.0
    %902 = vmatpush1.xpose.msra.mxu0 0.0
    %903 = vmatprep.subr.mxu0 0.0
    %904 = vmatpush1.xpose.msra.mxu0 0.0
    %905 = vmatprep.subr.mxu0 0.0
    %906 = vmatpush1.xpose.msra.mxu0 0.0
    %907 = vmatprep.subr.mxu0 0.0
    %908 = vmatpush1.xpose.msra.mxu0 %v875
    %909 = vmatprep.subr.mxu0 0.0
    %910 = vmatpush2.xpose.msra.mxu0 0.0
    %911 = vmatprep.subr.mxu0 0.0
    %912 = vmatpush2.xpose.msra.mxu0 0.0
    %913 = vmatprep.subr.mxu0 0.0
    %914 = vmatpush2.xpose.msra.mxu0 0.0
    %915 = vmatprep.subr.mxu0 0.0
    %916 = vmatpush2.xpose.msra.mxu0 0.0
    %917 = vmatprep.subr.mxu0 0.0
    %918 = vmatpush2.xpose.msra.mxu0 0.0
    %919 = vmatprep.subr.mxu0 0.0
    %920 = vmatpush2.xpose.msra.mxu0 0.0
    %921 = vmatprep.subr.mxu0 0.0
    %922 = vmatpush2.xpose.msra.mxu0 0.0
    %923 = vmatprep.subr.mxu0 0.0
    %924 = vmatpush2.xpose.msra.mxu0 0.0
    %925 = vmatprep.subr.mxu0 0.0
    %926 = vmatpush2.xpose.msra.mxu0 0.0
    %927 = vmatprep.subr.mxu0 0.0
    %928 = vmatpush2.xpose.msra.mxu0 0.0
    %929 = vmatprep.subr.mxu0 0.0
    %930 = vmatpush2.xpose.msra.mxu0 0.0
    %931 = vmatprep.subr.mxu0 0.0
    %932 = vmatpush2.xpose.msra.mxu0 0.0
    %933 = vmatprep.subr.mxu0 0.0
    %934 = vmatpush2.xpose.msra.mxu0 0.0
    %935 = vmatprep.subr.mxu0 0.0
    %936 = vmatpush2.xpose.msra.mxu0 0.0
    %937 = vmatprep.subr.mxu0 0.0
    %938 = vmatpush2.xpose.msra.mxu0 0.0
    %939 = vmatprep.subr.mxu0 0.0
    %940 = vmatpush2.xpose.msra.mxu0 0.0
    %941 = vmatprep.mubr.f32.mxu0 0.0
    %942 = vmatmul.mubr.f32.gmra.mxu0 %v873
    %v943 = vpop.f32.mrf.mxu0
    %v944 = vadd.f32 0.0, %v943
    %v945 = vpop.f32.mrf.mxu0
    %946 = vdwg.mxu0
    %v947 = vmul.f32 %v944, 0.17677669
    %v948 = vsel %vm471, %v947, -inf
    %949 = vmax.xlane.f32.xlu0 %v948
    %v950 = vpop.xlane.xlu0 %949
    %v951 = vsub.f32 %v947, %v950
    %v952 = vmul.f32 %v951, 1.442695
    %v953 = vpow.pop %v952
    %v954 = vsel %vm471, %v953, 0.0
    %955 = vadd.xlane.f32.xlu0 %v954
    %v956 = vpop.xlane.xlu0 %955
    %v957 = vrcp.pop %v956
    %v958 = vmul.f32 %v953, %v957
    %959 = vrot.lane.b32.xlu0 %v359, 64
    %v960 = vpop.permute.xlu0 %959
    %v963 = vsel %vm471, %v958, 0
    %965 = vmatprep.subr.mxu0 0.0
    %966 = vmatpush1.msra.mxu0 0.0
    %967 = vmatprep.subr.mxu0 0.0
    %968 = vmatpush1.msra.mxu0 0.0
    %969 = vmatprep.subr.mxu0 0.0
    %970 = vmatpush1.msra.mxu0 0.0
    %971 = vmatprep.subr.mxu0 0.0
    %972 = vmatpush1.msra.mxu0 0.0
    %973 = vmatprep.subr.mxu0 0.0
    %974 = vmatpush1.msra.mxu0 0.0
    %975 = vmatprep.subr.mxu0 0.0
    %976 = vmatpush1.msra.mxu0 0.0
    %977 = vmatprep.subr.mxu0 0.0
    %978 = vmatpush1.msra.mxu0 0.0
    %979 = vmatprep.subr.mxu0 0.0
    %980 = vmatpush1.msra.mxu0 0.0
    %981 = vmatprep.subr.mxu0 0.0
    %982 = vmatpush1.msra.mxu0 0.0
    %983 = vmatprep.subr.mxu0 0.0
    %984 = vmatpush1.msra.mxu0 0.0
    %985 = vmatprep.subr.mxu0 0.0
    %986 = vmatpush1.msra.mxu0 0.0
    %987 = vmatprep.subr.mxu0 0.0
    %988 = vmatpush1.msra.mxu0 0.0
    %989 = vmatprep.subr.mxu0 0.0
    %990 = vmatpush1.msra.mxu0 0.0
    %991 = vmatprep.subr.mxu0 0.0
    %992 = vmatpush1.msra.mxu0 0.0
    %993 = vmatprep.subr.mxu0 0.0
    %994 = vmatpush1.msra.mxu0 0.0
    %995 = vmatprep.subr.mxu0 0.0
    %996 = vmatpush1.msra.mxu0 %v960
    %997 = vmatprep.subr.mxu0 0.0
    %998 = vmatpush2.msra.mxu0 0.0
    %999 = vmatprep.subr.mxu0 0.0
    %1000 = vmatpush2.msra.mxu0 0.0
    %1001 = vmatprep.subr.mxu0 0.0
    %1002 = vmatpush2.msra.mxu0 0.0
    %1003 = vmatprep.subr.mxu0 0.0
    %1004 = vmatpush2.msra.mxu0 0.0
    %1005 = vmatprep.subr.mxu0 0.0
    %1006 = vmatpush2.msra.mxu0 0.0
    %1007 = vmatprep.subr.mxu0 0.0
    %1008 = vmatpush2.msra.mxu0 0.0
    %1009 = vmatprep.subr.mxu0 0.0
    %1010 = vmatpush2.msra.mxu0 0.0
    %1011 = vmatprep.subr.mxu0 0.0
    %1012 = vmatpush2.msra.mxu0 0.0
    %1013 = vmatprep.subr.mxu0 0.0
    %1014 = vmatpush2.msra.mxu0 0.0
    %1015 = vmatprep.subr.mxu0 0.0
    %1016 = vmatpush2.msra.mxu0 0.0
    %1017 = vmatprep.subr.mxu0 0.0
    %1018 = vmatpush2.msra.mxu0 0.0
    %1019 = vmatprep.subr.mxu0 0.0
    %1020 = vmatpush2.msra.mxu0 0.0
    %1021 = vmatprep.subr.mxu0 0.0
    %1022 = vmatpush2.msra.mxu0 0.0
    %1023 = vmatprep.subr.mxu0 0.0
    %1024 = vmatpush2.msra.mxu0 0.0
    %1025 = vmatprep.subr.mxu0 0.0
    %1026 = vmatpush2.msra.mxu0 0.0
    %1027 = vmatprep.subr.mxu0 0.0
    %1028 = vmatpush2.msra.mxu0 0.0
    %1029 = vmatprep.mubr.f32.mxu0 0.0
    %1030 = vmatmul.mubr.f32.gmra.mxu0 %v963
    %v1031 = vpop.f32.mrf.mxu0
    %v1032 = vadd.f32 0.0, %v1031
    %v1033 = vpop.f32.mrf.mxu0
    %1034 = vdwg.mxu0
    %v1036 = vsel %vm393, %v1032, 0
    %1038 = vmatprep.subr.mxu0 0.0
    %1039 = vmatpush1.msra.mxu0 0.0
    %1040 = vmatprep.subr.mxu0 0.0
    %1041 = vmatpush1.msra.mxu0 0.0
    %1042 = vmatprep.subr.mxu0 0.0
    %1043 = vmatpush1.msra.mxu0 0.0
    %1044 = vmatprep.subr.mxu0 0.0
    %1045 = vmatpush1.msra.mxu0 0.0
    %1046 = vmatprep.subr.mxu0 0.0
    %1047 = vmatpush1.msra.mxu0 0.0
    %1048 = vmatprep.subr.mxu0 0.0
    %1049 = vmatpush1.msra.mxu0 0.0
    %1050 = vmatprep.subr.mxu0 0.0
    %1051 = vmatpush1.msra.mxu0 0.0
    %1052 = vmatprep.subr.mxu0 0.0
    %1053 = vmatpush1.msra.mxu0 0.0
    %1054 = vmatprep.subr.mxu0 0.0
    %1055 = vmatpush1.msra.mxu0 0.0
    %1056 = vmatprep.subr.mxu0 0.0
    %1057 = vmatpush1.msra.mxu0 0.0
    %1058 = vmatprep.subr.mxu0 0.0
    %1059 = vmatpush1.msra.mxu0 0.0
    %1060 = vmatprep.subr.mxu0 0.0
    %1061 = vmatpush1.msra.mxu0 0.0
    %1062 = vmatprep.subr.mxu0 0.0
    %1063 = vmatpush1.msra.mxu0 %v388
    %1064 = vmatprep.subr.mxu0 0.0
    %1065 = vmatpush1.msra.mxu0 %v387
    %1066 = vmatprep.subr.mxu0 0.0
    %1067 = vmatpush1.msra.mxu0 %v386
    %1068 = vmatprep.subr.mxu0 0.0
    %1069 = vmatpush1.msra.mxu0 %v385
    %1070 = vmatprep.subr.mxu0 0.0
    %1071 = vmatpush2.msra.mxu0 0.0
    %1072 = vmatprep.subr.mxu0 0.0
    %1073 = vmatpush2.msra.mxu0 0.0
    %1074 = vmatprep.subr.mxu0 0.0
    %1075 = vmatpush2.msra.mxu0 0.0
    %1076 = vmatprep.subr.mxu0 0.0
    %1077 = vmatpush2.msra.mxu0 0.0
    %1078 = vmatprep.subr.mxu0 0.0
    %1079 = vmatpush2.msra.mxu0 0.0
    %1080 = vmatprep.subr.mxu0 0.0
    %1081 = vmatpush2.msra.mxu0 0.0
    %1082 = vmatprep.subr.mxu0 0.0
    %1083 = vmatpush2.msra.mxu0 0.0
    %1084 = vmatprep.subr.mxu0 0.0
    %1085 = vmatpush2.msra.mxu0 0.0
    %1086 = vmatprep.subr.mxu0 0.0
    %1087 = vmatpush2.msra.mxu0 0.0
    %1088 = vmatprep.subr.mxu0 0.0
    %1089 = vmatpush2.msra.mxu0 0.0
    %1090 = vmatprep.subr.mxu0 0.0
    %1091 = vmatpush2.msra.mxu0 0.0
    %1092 = vmatprep.subr.mxu0 0.0
    %1093 = vmatpush2.msra.mxu0 0.0
    %1094 = vmatprep.subr.mxu0 0.0
    %1095 = vmatpush2.msra.mxu0 0.0
    %1096 = vmatprep.subr.mxu0 0.0
    %1097 = vmatpush2.msra.mxu0 0.0
    %1098 = vmatprep.subr.mxu0 0.0
    %1099 = vmatpush2.msra.mxu0 0.0
    %1100 = vmatprep.subr.mxu0 0.0
    %1101 = vmatpush2.msra.mxu0 0.0
    %1102 = vmatprep.mubr.f32.mxu0 0.0
    %1103 = vmatmul.mubr.f32.gmra.mxu0 %v1036
    %v1104 = vpop.f32.mrf.mxu0
    %v1105 = vadd.f32 0.0, %v1104
    %v1106 = vpop.f32.mrf.mxu0
    %1107 = vdwg.mxu0
    %v1108 = vadd.f32 %v866, %v1105
    %1109 = vrot.lane.b32.xlu0 %v347, 32
    %v1110 = vpop.permute.xlu0 %1109
    %1111 = vrot.lane.b32.xlu0 %v353, 32
    %v1112 = vpop.permute.xlu0 %1111
    %v1113 = vsel %vm393, %v1110, 0
    %v1115 = vsel %vm393, %v1112, 0
    %1117 = vmatprep.subr.mxu0 0.0
    %1118 = vmatpush1.xpose.msra.mxu0 0.0
    %1119 = vmatprep.subr.mxu0 0.0
    %1120 = vmatpush1.xpose.msra.mxu0 0.0
    %1121 = vmatprep.subr.mxu0 0.0
    %1122 = vmatpush1.xpose.msra.mxu0 0.0
    %1123 = vmatprep.subr.mxu0 0.0
    %1124 = vmatpush1.xpose.msra.mxu0 0.0
    %1125 = vmatprep.subr.mxu0 0.0
    %1126 = vmatpush1.xpose.msra.mxu0 0.0
    %1127 = vmatprep.subr.mxu0 0.0
    %1128 = vmatpush1.xpose.msra.mxu0 0.0
    %1129 = vmatprep.subr.mxu0 0.0
    %1130 = vmatpush1.xpose.msra.mxu0 0.0
    %1131 = vmatprep.subr.mxu0 0.0
    %1132 = vmatpush1.xpose.msra.mxu0 0.0
    %1133 = vmatprep.subr.mxu0 0.0
    %1134 = vmatpush1.xpose.msra.mxu0 0.0
    %1135 = vmatprep.subr.mxu0 0.0
    %1136 = vmatpush1.xpose.msra.mxu0 0.0
    %1137 = vmatprep.subr.mxu0 0.0
    %1138 = vmatpush1.xpose.msra.mxu0 0.0
    %1139 = vmatprep.subr.mxu0 0.0
    %1140 = vmatpush1.xpose.msra.mxu0 0.0
    %1141 = vmatprep.subr.mxu0 0.0
    %1142 = vmatpush1.xpose.msra.mxu0 0.0
    %1143 = vmatprep.subr.mxu0 0.0
    %1144 = vmatpush1.xpose.msra.mxu0 0.0
    %1145 = vmatprep.subr.mxu0 0.0
    %1146 = vmatpush1.xpose.msra.mxu0 0.0
    %1147 = vmatprep.subr.mxu0 0.0
    %1148 = vmatpush1.xpose.msra.mxu0 %v1115
    %1149 = vmatprep.subr.mxu0 0.0
    %1150 = vmatpush2.xpose.msra.mxu0 0.0
    %1151 = vmatprep.subr.mxu0 0.0
    %1152 = vmatpush2.xpose.msra.mxu0 0.0
    %1153 = vmatprep.subr.mxu0 0.0
    %1154 = vmatpush2.xpose.msra.mxu0 0.0
    %1155 = vmatprep.subr.mxu0 0.0
    %1156 = vmatpush2.xpose.msra.mxu0 0.0
    %1157 = vmatprep.subr.mxu0 0.0
    %1158 = vmatpush2.xpose.msra.mxu0 0.0
    %1159 = vmatprep.subr.mxu0 0.0
    %1160 = vmatpush2.xpose.msra.mxu0 0.0
    %1161 = vmatprep.subr.mxu0 0.0
    %1162 = vmatpush2.xpose.msra.mxu0 0.0
    %1163 = vmatprep.subr.mxu0 0.0
    %1164 = vmatpush2.xpose.msra.mxu0 0.0
    %1165 = vmatprep.subr.mxu0 0.0
    %1166 = vmatpush2.xpose.msra.mxu0 0.0
    %1167 = vmatprep.subr.mxu0 0.0
    %1168 = vmatpush2.xpose.msra.mxu0 0.0
    %1169 = vmatprep.subr.mxu0 0.0
    %1170 = vmatpush2.xpose.msra.mxu0 0.0
    %1171 = vmatprep.subr.mxu0 0.0
    %1172 = vmatpush2.xpose.msra.mxu0 0.0
    %1173 = vmatprep.subr.mxu0 0.0
    %1174 = vmatpush2.xpose.msra.mxu0 0.0
    %1175 = vmatprep.subr.mxu0 0.0
    %1176 = vmatpush2.xpose.msra.mxu0 0.0
    %1177 = vmatprep.subr.mxu0 0.0
    %1178 = vmatpush2.xpose.msra.mxu0 0.0
    %1179 = vmatprep.subr.mxu0 0.0
    %1180 = vmatpush2.xpose.msra.mxu0 0.0
    %1181 = vmatprep.mubr.f32.mxu0 0.0
    %1182 = vmatmul.mubr.f32.gmra.mxu0 %v1113
    %v1183 = vpop.f32.mrf.mxu0
    %v1184 = vadd.f32 0.0, %v1183
    %v1185 = vpop.f32.mrf.mxu0
    %1186 = vdwg.mxu0
    %v1187 = vmul.f32 %v1184, 0.17677669
    %v1188 = vsel %vm471, %v1187, -inf
    %1189 = vmax.xlane.f32.xlu0 %v1188
    %v1190 = vpop.xlane.xlu0 %1189
    %v1191 = vsub.f32 %v1187, %v1190
    %v1192 = vmul.f32 %v1191, 1.442695
    %v1193 = vpow.pop %v1192
    %v1194 = vsel %vm471, %v1193, 0.0
    %1195 = vadd.xlane.f32.xlu0 %v1194
    %v1196 = vpop.xlane.xlu0 %1195
    %v1197 = vrcp.pop %v1196
    %v1198 = vmul.f32 %v1193, %v1197
    %1199 = vrot.lane.b32.xlu0 %v359, 32
    %v1200 = vpop.permute.xlu0 %1199
    %v1203 = vsel %vm471, %v1198, 0
    %1205 = vmatprep.subr.mxu0 0.0
    %1206 = vmatpush1.msra.mxu0 0.0
    %1207 = vmatprep.subr.mxu0 0.0
    %1208 = vmatpush1.msra.mxu0 0.0
    %1209 = vmatprep.subr.mxu0 0.0
    %1210 = vmatpush1.msra.mxu0 0.0
    %1211 = vmatprep.subr.mxu0 0.0
    %1212 = vmatpush1.msra.mxu0 0.0
    %1213 = vmatprep.subr.mxu0 0.0
    %1214 = vmatpush1.msra.mxu0 0.0
    %1215 = vmatprep.subr.mxu0 0.0
    %1216 = vmatpush1.msra.mxu0 0.0
    %1217 = vmatprep.subr.mxu0 0.0
    %1218 = vmatpush1.msra.mxu0 0.0
    %1219 = vmatprep.subr.mxu0 0.0
    %1220 = vmatpush1.msra.mxu0 0.0
    %1221 = vmatprep.subr.mxu0 0.0
    %1222 = vmatpush1.msra.mxu0 0.0
    %1223 = vmatprep.subr.mxu0 0.0
    %1224 = vmatpush1.msra.mxu0 0.0
    %1225 = vmatprep.subr.mxu0 0.0
    %1226 = vmatpush1.msra.mxu0 0.0
    %1227 = vmatprep.subr.mxu0 0.0
    %1228 = vmatpush1.msra.mxu0 0.0
    %1229 = vmatprep.subr.mxu0 0.0
    %1230 = vmatpush1.msra.mxu0 0.0
    %1231 = vmatprep.subr.mxu0 0.0
    %1232 = vmatpush1.msra.mxu0 0.0
    %1233 = vmatprep.subr.mxu0 0.0
    %1234 = vmatpush1.msra.mxu0 0.0
    %1235 = vmatprep.subr.mxu0 0.0
    %1236 = vmatpush1.msra.mxu0 %v1200
    %1237 = vmatprep.subr.mxu0 0.0
    %1238 = vmatpush2.msra.mxu0 0.0
    %1239 = vmatprep.subr.mxu0 0.0
    %1240 = vmatpush2.msra.mxu0 0.0
    %1241 = vmatprep.subr.mxu0 0.0
    %1242 = vmatpush2.msra.mxu0 0.0
    %1243 = vmatprep.subr.mxu0 0.0
    %1244 = vmatpush2.msra.mxu0 0.0
    %1245 = vmatprep.subr.mxu0 0.0
    %1246 = vmatpush2.msra.mxu0 0.0
    %1247 = vmatprep.subr.mxu0 0.0
    %1248 = vmatpush2.msra.mxu0 0.0
    %1249 = vmatprep.subr.mxu0 0.0
    %1250 = vmatpush2.msra.mxu0 0.0
    %1251 = vmatprep.subr.mxu0 0.0
    %1252 = vmatpush2.msra.mxu0 0.0
    %1253 = vmatprep.subr.mxu0 0.0
    %1254 = vmatpush2.msra.mxu0 0.0
    %1255 = vmatprep.subr.mxu0 0.0
    %1256 = vmatpush2.msra.mxu0 0.0
    %1257 = vmatprep.subr.mxu0 0.0
    %1258 = vmatpush2.msra.mxu0 0.0
    %1259 = vmatprep.subr.mxu0 0.0
    %1260 = vmatpush2.msra.mxu0 0.0
    %1261 = vmatprep.subr.mxu0 0.0
    %1262 = vmatpush2.msra.mxu0 0.0
    %1263 = vmatprep.subr.mxu0 0.0
    %1264 = vmatpush2.msra.mxu0 0.0
    %1265 = vmatprep.subr.mxu0 0.0
    %1266 = vmatpush2.msra.mxu0 0.0
    %1267 = vmatprep.subr.mxu0 0.0
    %1268 = vmatpush2.msra.mxu0 0.0
    %1269 = vmatprep.mubr.f32.mxu0 0.0
    %1270 = vmatmul.mubr.f32.gmra.mxu0 %v1203
    %v1271 = vpop.f32.mrf.mxu0
    %v1272 = vadd.f32 0.0, %v1271
    %v1273 = vpop.f32.mrf.mxu0
    %1274 = vdwg.mxu0
    %v1276 = vsel %vm393, %v1272, 0
    %1278 = vmatprep.subr.mxu0 0.0
    %1279 = vmatpush1.msra.mxu0 0.0
    %1280 = vmatprep.subr.mxu0 0.0
    %1281 = vmatpush1.msra.mxu0 0.0
    %1282 = vmatprep.subr.mxu0 0.0
    %1283 = vmatpush1.msra.mxu0 0.0
    %1284 = vmatprep.subr.mxu0 0.0
    %1285 = vmatpush1.msra.mxu0 0.0
    %1286 = vmatprep.subr.mxu0 0.0
    %1287 = vmatpush1.msra.mxu0 0.0
    %1288 = vmatprep.subr.mxu0 0.0
    %1289 = vmatpush1.msra.mxu0 0.0
    %1290 = vmatprep.subr.mxu0 0.0
    %1291 = vmatpush1.msra.mxu0 0.0
    %1292 = vmatprep.subr.mxu0 0.0
    %1293 = vmatpush1.msra.mxu0 0.0
    %1294 = vmatprep.subr.mxu0 0.0
    %1295 = vmatpush1.msra.mxu0 0.0
    %1296 = vmatprep.subr.mxu0 0.0
    %1297 = vmatpush1.msra.mxu0 0.0
    %1298 = vmatprep.subr.mxu0 0.0
    %1299 = vmatpush1.msra.mxu0 0.0
    %1300 = vmatprep.subr.mxu0 0.0
    %1301 = vmatpush1.msra.mxu0 0.0
    %1302 = vmatprep.subr.mxu0 0.0
    %1303 = vmatpush1.msra.mxu0 %v392
    %1304 = vmatprep.subr.mxu0 0.0
    %1305 = vmatpush1.msra.mxu0 %v391
    %1306 = vmatprep.subr.mxu0 0.0
    %1307 = vmatpush1.msra.mxu0 %v390
    %1308 = vmatprep.subr.mxu0 0.0
    %1309 = vmatpush1.msra.mxu0 %v389
    %1310 = vmatprep.subr.mxu0 0.0
    %1311 = vmatpush2.msra.mxu0 0.0
    %1312 = vmatprep.subr.mxu0 0.0
    %1313 = vmatpush2.msra.mxu0 0.0
    %1314 = vmatprep.subr.mxu0 0.0
    %1315 = vmatpush2.msra.mxu0 0.0
    %1316 = vmatprep.subr.mxu0 0.0
    %1317 = vmatpush2.msra.mxu0 0.0
    %1318 = vmatprep.subr.mxu0 0.0
    %1319 = vmatpush2.msra.mxu0 0.0
    %1320 = vmatprep.subr.mxu0 0.0
    %1321 = vmatpush2.msra.mxu0 0.0
    %1322 = vmatprep.subr.mxu0 0.0
    %1323 = vmatpush2.msra.mxu0 0.0
    %1324 = vmatprep.subr.mxu0 0.0
    %1325 = vmatpush2.msra.mxu0 0.0
    %1326 = vmatprep.subr.mxu0 0.0
    %1327 = vmatpush2.msra.mxu0 0.0
    %1328 = vmatprep.subr.mxu0 0.0
    %1329 = vmatpush2.msra.mxu0 0.0
    %1330 = vmatprep.subr.mxu0 0.0
    %1331 = vmatpush2.msra.mxu0 0.0
    %1332 = vmatprep.subr.mxu0 0.0
    %1333 = vmatpush2.msra.mxu0 0.0
    %1334 = vmatprep.subr.mxu0 0.0
    %1335 = vmatpush2.msra.mxu0 0.0
    %1336 = vmatprep.subr.mxu0 0.0
    %1337 = vmatpush2.msra.mxu0 0.0
    %1338 = vmatprep.subr.mxu0 0.0
    %1339 = vmatpush2.msra.mxu0 0.0
    %1340 = vmatprep.subr.mxu0 0.0
    %1341 = vmatpush2.msra.mxu0 0.0
    %1342 = vmatprep.mubr.f32.mxu0 0.0
    %1343 = vmatmul.mubr.f32.gmra.mxu0 %v1276
    %v1344 = vpop.f32.mrf.mxu0
    %v1345 = vadd.f32 0.0, %v1344
    %v1346 = vpop.f32.mrf.mxu0
    %1347 = vdwg.mxu0
    %v1348 = vadd.f32 %v1108, %v1345
    %v1350 = vsel %vm393, %v348, 0
    %v1353 = vsel %vm393, %v354, 0
    %1355 = vmatprep.subr.mxu0 0.0
    %1356 = vmatpush1.xpose.msra.mxu0 0.0
    %1357 = vmatprep.subr.mxu0 0.0
    %1358 = vmatpush1.xpose.msra.mxu0 0.0
    %1359 = vmatprep.subr.mxu0 0.0
    %1360 = vmatpush1.xpose.msra.mxu0 0.0
    %1361 = vmatprep.subr.mxu0 0.0
    %1362 = vmatpush1.xpose.msra.mxu0 0.0
    %1363 = vmatprep.subr.mxu0 0.0
    %1364 = vmatpush1.xpose.msra.mxu0 0.0
    %1365 = vmatprep.subr.mxu0 0.0
    %1366 = vmatpush1.xpose.msra.mxu0 0.0
    %1367 = vmatprep.subr.mxu0 0.0
    %1368 = vmatpush1.xpose.msra.mxu0 0.0
    %1369 = vmatprep.subr.mxu0 0.0
    %1370 = vmatpush1.xpose.msra.mxu0 0.0
    %1371 = vmatprep.subr.mxu0 0.0
    %1372 = vmatpush1.xpose.msra.mxu0 0.0
    %1373 = vmatprep.subr.mxu0 0.0
    %1374 = vmatpush1.xpose.msra.mxu0 0.0
    %1375 = vmatprep.subr.mxu0 0.0
    %1376 = vmatpush1.xpose.msra.mxu0 0.0
    %1377 = vmatprep.subr.mxu0 0.0
    %1378 = vmatpush1.xpose.msra.mxu0 0.0
    %1379 = vmatprep.subr.mxu0 0.0
    %1380 = vmatpush1.xpose.msra.mxu0 0.0
    %1381 = vmatprep.subr.mxu0 0.0
    %1382 = vmatpush1.xpose.msra.mxu0 0.0
    %1383 = vmatprep.subr.mxu0 0.0
    %1384 = vmatpush1.xpose.msra.mxu0 0.0
    %1385 = vmatprep.subr.mxu0 0.0
    %1386 = vmatpush1.xpose.msra.mxu0 %v1353
    %1387 = vmatprep.subr.mxu0 0.0
    %1388 = vmatpush2.xpose.msra.mxu0 0.0
    %1389 = vmatprep.subr.mxu0 0.0
    %1390 = vmatpush2.xpose.msra.mxu0 0.0
    %1391 = vmatprep.subr.mxu0 0.0
    %1392 = vmatpush2.xpose.msra.mxu0 0.0
    %1393 = vmatprep.subr.mxu0 0.0
    %1394 = vmatpush2.xpose.msra.mxu0 0.0
    %1395 = vmatprep.subr.mxu0 0.0
    %1396 = vmatpush2.xpose.msra.mxu0 0.0
    %1397 = vmatprep.subr.mxu0 0.0
    %1398 = vmatpush2.xpose.msra.mxu0 0.0
    %1399 = vmatprep.subr.mxu0 0.0
    %1400 = vmatpush2.xpose.msra.mxu0 0.0
    %1401 = vmatprep.subr.mxu0 0.0
    %1402 = vmatpush2.xpose.msra.mxu0 0.0
    %1403 = vmatprep.subr.mxu0 0.0
    %1404 = vmatpush2.xpose.msra.mxu0 0.0
    %1405 = vmatprep.subr.mxu0 0.0
    %1406 = vmatpush2.xpose.msra.mxu0 0.0
    %1407 = vmatprep.subr.mxu0 0.0
    %1408 = vmatpush2.xpose.msra.mxu0 0.0
    %1409 = vmatprep.subr.mxu0 0.0
    %1410 = vmatpush2.xpose.msra.mxu0 0.0
    %1411 = vmatprep.subr.mxu0 0.0
    %1412 = vmatpush2.xpose.msra.mxu0 0.0
    %1413 = vmatprep.subr.mxu0 0.0
    %1414 = vmatpush2.xpose.msra.mxu0 0.0
    %1415 = vmatprep.subr.mxu0 0.0
    %1416 = vmatpush2.xpose.msra.mxu0 0.0
    %1417 = vmatprep.subr.mxu0 0.0
    %1418 = vmatpush2.xpose.msra.mxu0 0.0
    %1419 = vmatprep.mubr.f32.mxu0 0.0
    %1420 = vmatmul.mubr.f32.gmra.mxu0 %v1350
    %v1421 = vpop.f32.mrf.mxu0
    %v1422 = vadd.f32 0.0, %v1421
    %v1423 = vpop.f32.mrf.mxu0
    %1424 = vdwg.mxu0
    %v1425 = vmul.f32 %v1422, 0.17677669
    %v1426 = vsel %vm471, %v1425, -inf
    %1427 = vmax.xlane.f32.xlu0 %v1426
    %v1428 = vpop.xlane.xlu0 %1427
    %v1429 = vsub.f32 %v1425, %v1428
    %v1430 = vmul.f32 %v1429, 1.442695
    %v1431 = vpow.pop %v1430
    %v1432 = vsel %vm471, %v1431, 0.0
    %1433 = vadd.xlane.f32.xlu0 %v1432
    %v1434 = vpop.xlane.xlu0 %1433
    %v1435 = vrcp.pop %v1434
    %v1436 = vmul.f32 %v1431, %v1435
    %v1438 = vsel %vm471, %v1436, 0
    %1440 = vmatprep.subr.mxu0 0.0
    %1441 = vmatpush1.msra.mxu0 0.0
    %1442 = vmatprep.subr.mxu0 0.0
    %1443 = vmatpush1.msra.mxu0 0.0
    %1444 = vmatprep.subr.mxu0 0.0
    %1445 = vmatpush1.msra.mxu0 0.0
    %1446 = vmatprep.subr.mxu0 0.0
    %1447 = vmatpush1.msra.mxu0 0.0
    %1448 = vmatprep.subr.mxu0 0.0
    %1449 = vmatpush1.msra.mxu0 0.0
    %1450 = vmatprep.subr.mxu0 0.0
    %1451 = vmatpush1.msra.mxu0 0.0
    %1452 = vmatprep.subr.mxu0 0.0
    %1453 = vmatpush1.msra.mxu0 0.0
    %1454 = vmatprep.subr.mxu0 0.0
    %1455 = vmatpush1.msra.mxu0 0.0
    %1456 = vmatprep.subr.mxu0 0.0
    %1457 = vmatpush1.msra.mxu0 0.0
    %1458 = vmatprep.subr.mxu0 0.0
    %1459 = vmatpush1.msra.mxu0 0.0
    %1460 = vmatprep.subr.mxu0 0.0
    %1461 = vmatpush1.msra.mxu0 0.0
    %1462 = vmatprep.subr.mxu0 0.0
    %1463 = vmatpush1.msra.mxu0 0.0
    %1464 = vmatprep.subr.mxu0 0.0
    %1465 = vmatpush1.msra.mxu0 0.0
    %1466 = vmatprep.subr.mxu0 0.0
    %1467 = vmatpush1.msra.mxu0 0.0
    %1468 = vmatprep.subr.mxu0 0.0
    %1469 = vmatpush1.msra.mxu0 0.0
    %1470 = vmatprep.subr.mxu0 0.0
    %1471 = vmatpush1.msra.mxu0 %v360
    %1472 = vmatprep.subr.mxu0 0.0
    %1473 = vmatpush2.msra.mxu0 0.0
    %1474 = vmatprep.subr.mxu0 0.0
    %1475 = vmatpush2.msra.mxu0 0.0
    %1476 = vmatprep.subr.mxu0 0.0
    %1477 = vmatpush2.msra.mxu0 0.0
    %1478 = vmatprep.subr.mxu0 0.0
    %1479 = vmatpush2.msra.mxu0 0.0
    %1480 = vmatprep.subr.mxu0 0.0
    %1481 = vmatpush2.msra.mxu0 0.0
    %1482 = vmatprep.subr.mxu0 0.0
    %1483 = vmatpush2.msra.mxu0 0.0
    %1484 = vmatprep.subr.mxu0 0.0
    %1485 = vmatpush2.msra.mxu0 0.0
    %1486 = vmatprep.subr.mxu0 0.0
    %1487 = vmatpush2.msra.mxu0 0.0
    %1488 = vmatprep.subr.mxu0 0.0
    %1489 = vmatpush2.msra.mxu0 0.0
    %1490 = vmatprep.subr.mxu0 0.0
    %1491 = vmatpush2.msra.mxu0 0.0
    %1492 = vmatprep.subr.mxu0 0.0
    %1493 = vmatpush2.msra.mxu0 0.0
    %1494 = vmatprep.subr.mxu0 0.0
    %1495 = vmatpush2.msra.mxu0 0.0
    %1496 = vmatprep.subr.mxu0 0.0
    %1497 = vmatpush2.msra.mxu0 0.0
    %1498 = vmatprep.subr.mxu0 0.0
    %1499 = vmatpush2.msra.mxu0 0.0
    %1500 = vmatprep.subr.mxu0 0.0
    %1501 = vmatpush2.msra.mxu0 0.0
    %1502 = vmatprep.subr.mxu0 0.0
    %1503 = vmatpush2.msra.mxu0 0.0
    %1504 = vmatprep.mubr.f32.mxu0 0.0
    %1505 = vmatmul.mubr.f32.gmra.mxu0 %v1438
    %v1506 = vpop.f32.mrf.mxu0
    %v1507 = vadd.f32 0.0, %v1506
    %v1508 = vpop.f32.mrf.mxu0
    %1509 = vdwg.mxu0
    %1510 = vrot.lane.b32.xlu0 %v348, 96
    %v1511 = vpop.permute.xlu0 %1510
    %1512 = vrot.lane.b32.xlu0 %v354, 96
    %v1513 = vpop.permute.xlu0 %1512
    %v1514 = vsel %vm393, %v1511, 0
    %v1516 = vsel %vm393, %v1513, 0
    %1518 = vmatprep.subr.mxu0 0.0
    %1519 = vmatpush1.xpose.msra.mxu0 0.0
    %1520 = vmatprep.subr.mxu0 0.0
    %1521 = vmatpush1.xpose.msra.mxu0 0.0
    %1522 = vmatprep.subr.mxu0 0.0
    %1523 = vmatpush1.xpose.msra.mxu0 0.0
    %1524 = vmatprep.subr.mxu0 0.0
    %1525 = vmatpush1.xpose.msra.mxu0 0.0
    %1526 = vmatprep.subr.mxu0 0.0
    %1527 = vmatpush1.xpose.msra.mxu0 0.0
    %1528 = vmatprep.subr.mxu0 0.0
    %1529 = vmatpush1.xpose.msra.mxu0 0.0
    %1530 = vmatprep.subr.mxu0 0.0
    %1531 = vmatpush1.xpose.msra.mxu0 0.0
    %1532 = vmatprep.subr.mxu0 0.0
    %1533 = vmatpush1.xpose.msra.mxu0 0.0
    %1534 = vmatprep.subr.mxu0 0.0
    %1535 = vmatpush1.xpose.msra.mxu0 0.0
    %1536 = vmatprep.subr.mxu0 0.0
    %1537 = vmatpush1.xpose.msra.mxu0 0.0
    %1538 = vmatprep.subr.mxu0 0.0
    %1539 = vmatpush1.xpose.msra.mxu0 0.0
    %1540 = vmatprep.subr.mxu0 0.0
    %1541 = vmatpush1.xpose.msra.mxu0 0.0
    %1542 = vmatprep.subr.mxu0 0.0
    %1543 = vmatpush1.xpose.msra.mxu0 0.0
    %1544 = vmatprep.subr.mxu0 0.0
    %1545 = vmatpush1.xpose.msra.mxu0 0.0
    %1546 = vmatprep.subr.mxu0 0.0
    %1547 = vmatpush1.xpose.msra.mxu0 0.0
    %1548 = vmatprep.subr.mxu0 0.0
    %1549 = vmatpush1.xpose.msra.mxu0 %v1516
    %1550 = vmatprep.subr.mxu0 0.0
    %1551 = vmatpush2.xpose.msra.mxu0 0.0
    %1552 = vmatprep.subr.mxu0 0.0
    %1553 = vmatpush2.xpose.msra.mxu0 0.0
    %1554 = vmatprep.subr.mxu0 0.0
    %1555 = vmatpush2.xpose.msra.mxu0 0.0
    %1556 = vmatprep.subr.mxu0 0.0
    %1557 = vmatpush2.xpose.msra.mxu0 0.0
    %1558 = vmatprep.subr.mxu0 0.0
    %1559 = vmatpush2.xpose.msra.mxu0 0.0
    %1560 = vmatprep.subr.mxu0 0.0
    %1561 = vmatpush2.xpose.msra.mxu0 0.0
    %1562 = vmatprep.subr.mxu0 0.0
    %1563 = vmatpush2.xpose.msra.mxu0 0.0
    %1564 = vmatprep.subr.mxu0 0.0
    %1565 = vmatpush2.xpose.msra.mxu0 0.0
    %1566 = vmatprep.subr.mxu0 0.0
    %1567 = vmatpush2.xpose.msra.mxu0 0.0
    %1568 = vmatprep.subr.mxu0 0.0
    %1569 = vmatpush2.xpose.msra.mxu0 0.0
    %1570 = vmatprep.subr.mxu0 0.0
    %1571 = vmatpush2.xpose.msra.mxu0 0.0
    %1572 = vmatprep.subr.mxu0 0.0
    %1573 = vmatpush2.xpose.msra.mxu0 0.0
    %1574 = vmatprep.subr.mxu0 0.0
    %1575 = vmatpush2.xpose.msra.mxu0 0.0
    %1576 = vmatprep.subr.mxu0 0.0
    %1577 = vmatpush2.xpose.msra.mxu0 0.0
    %1578 = vmatprep.subr.mxu0 0.0
    %1579 = vmatpush2.xpose.msra.mxu0 0.0
    %1580 = vmatprep.subr.mxu0 0.0
    %1581 = vmatpush2.xpose.msra.mxu0 0.0
    %1582 = vmatprep.mubr.f32.mxu0 0.0
    %1583 = vmatmul.mubr.f32.gmra.mxu0 %v1514
    %v1584 = vpop.f32.mrf.mxu0
    %v1585 = vadd.f32 0.0, %v1584
    %v1586 = vpop.f32.mrf.mxu0
    %1587 = vdwg.mxu0
    %v1588 = vmul.f32 %v1585, 0.17677669
    %v1589 = vsel %vm471, %v1588, -inf
    %1590 = vmax.xlane.f32.xlu0 %v1589
    %v1591 = vpop.xlane.xlu0 %1590
    %v1592 = vsub.f32 %v1588, %v1591
    %v1593 = vmul.f32 %v1592, 1.442695
    %v1594 = vpow.pop %v1593
    %v1595 = vsel %vm471, %v1594, 0.0
    %1596 = vadd.xlane.f32.xlu0 %v1595
    %v1597 = vpop.xlane.xlu0 %1596
    %v1598 = vrcp.pop %v1597
    %v1599 = vmul.f32 %v1594, %v1598
    %1601 = vrot.lane.b32.xlu0 %v360, 96
    %v1602 = vpop.permute.xlu0 %1601
    %v1605 = vsel %vm471, %v1599, 0
    %1607 = vmatprep.subr.mxu0 0.0
    %1608 = vmatpush1.msra.mxu0 0.0
    %1609 = vmatprep.subr.mxu0 0.0
    %1610 = vmatpush1.msra.mxu0 0.0
    %1611 = vmatprep.subr.mxu0 0.0
    %1612 = vmatpush1.msra.mxu0 0.0
    %1613 = vmatprep.subr.mxu0 0.0
    %1614 = vmatpush1.msra.mxu0 0.0
    %1615 = vmatprep.subr.mxu0 0.0
    %1616 = vmatpush1.msra.mxu0 0.0
    %1617 = vmatprep.subr.mxu0 0.0
    %1618 = vmatpush1.msra.mxu0 0.0
    %1619 = vmatprep.subr.mxu0 0.0
    %1620 = vmatpush1.msra.mxu0 0.0
    %1621 = vmatprep.subr.mxu0 0.0
    %1622 = vmatpush1.msra.mxu0 0.0
    %1623 = vmatprep.subr.mxu0 0.0
    %1624 = vmatpush1.msra.mxu0 0.0
    %1625 = vmatprep.subr.mxu0 0.0
    %1626 = vmatpush1.msra.mxu0 0.0
    %1627 = vmatprep.subr.mxu0 0.0
    %1628 = vmatpush1.msra.mxu0 0.0
    %1629 = vmatprep.subr.mxu0 0.0
    %1630 = vmatpush1.msra.mxu0 0.0
    %1631 = vmatprep.subr.mxu0 0.0
    %1632 = vmatpush1.msra.mxu0 0.0
    %1633 = vmatprep.subr.mxu0 0.0
    %1634 = vmatpush1.msra.mxu0 0.0
    %1635 = vmatprep.subr.mxu0 0.0
    %1636 = vmatpush1.msra.mxu0 0.0
    %1637 = vmatprep.subr.mxu0 0.0
    %1638 = vmatpush1.msra.mxu0 %v1602
    %1639 = vmatprep.subr.mxu0 0.0
    %1640 = vmatpush2.msra.mxu0 0.0
    %1641 = vmatprep.subr.mxu0 0.0
    %1642 = vmatpush2.msra.mxu0 0.0
    %1643 = vmatprep.subr.mxu0 0.0
    %1644 = vmatpush2.msra.mxu0 0.0
    %1645 = vmatprep.subr.mxu0 0.0
    %1646 = vmatpush2.msra.mxu0 0.0
    %1647 = vmatprep.subr.mxu0 0.0
    %1648 = vmatpush2.msra.mxu0 0.0
    %1649 = vmatprep.subr.mxu0 0.0
    %1650 = vmatpush2.msra.mxu0 0.0
    %1651 = vmatprep.subr.mxu0 0.0
    %1652 = vmatpush2.msra.mxu0 0.0
    %1653 = vmatprep.subr.mxu0 0.0
    %1654 = vmatpush2.msra.mxu0 0.0
    %1655 = vmatprep.subr.mxu0 0.0
    %1656 = vmatpush2.msra.mxu0 0.0
    %1657 = vmatprep.subr.mxu0 0.0
    %1658 = vmatpush2.msra.mxu0 0.0
    %1659 = vmatprep.subr.mxu0 0.0
    %1660 = vmatpush2.msra.mxu0 0.0
    %1661 = vmatprep.subr.mxu0 0.0
    %1662 = vmatpush2.msra.mxu0 0.0
    %1663 = vmatprep.subr.mxu0 0.0
    %1664 = vmatpush2.msra.mxu0 0.0
    %1665 = vmatprep.subr.mxu0 0.0
    %1666 = vmatpush2.msra.mxu0 0.0
    %1667 = vmatprep.subr.mxu0 0.0
    %1668 = vmatpush2.msra.mxu0 0.0
    %1669 = vmatprep.subr.mxu0 0.0
    %1670 = vmatpush2.msra.mxu0 0.0
    %1671 = vmatprep.mubr.f32.mxu0 0.0
    %1672 = vmatmul.mubr.f32.gmra.mxu0 %v1605
    %v1673 = vpop.f32.mrf.mxu0
    %v1674 = vadd.f32 0.0, %v1673
    %v1675 = vpop.f32.mrf.mxu0
    %1676 = vdwg.mxu0
    %v1678 = vsel %vm393, %v1674, 0
    %1680 = vmatprep.subr.mxu0 0.0
    %1681 = vmatpush1.msra.mxu0 0.0
    %1682 = vmatprep.subr.mxu0 0.0
    %1683 = vmatpush1.msra.mxu0 0.0
    %1684 = vmatprep.subr.mxu0 0.0
    %1685 = vmatpush1.msra.mxu0 0.0
    %1686 = vmatprep.subr.mxu0 0.0
    %1687 = vmatpush1.msra.mxu0 0.0
    %1688 = vmatprep.subr.mxu0 0.0
    %1689 = vmatpush1.msra.mxu0 0.0
    %1690 = vmatprep.subr.mxu0 0.0
    %1691 = vmatpush1.msra.mxu0 0.0
    %1692 = vmatprep.subr.mxu0 0.0
    %1693 = vmatpush1.msra.mxu0 0.0
    %1694 = vmatprep.subr.mxu0 0.0
    %1695 = vmatpush1.msra.mxu0 0.0
    %1696 = vmatprep.subr.mxu0 0.0
    %1697 = vmatpush1.msra.mxu0 0.0
    %1698 = vmatprep.subr.mxu0 0.0
    %1699 = vmatpush1.msra.mxu0 0.0
    %1700 = vmatprep.subr.mxu0 0.0
    %1701 = vmatpush1.msra.mxu0 0.0
    %1702 = vmatprep.subr.mxu0 0.0
    %1703 = vmatpush1.msra.mxu0 0.0
    %1704 = vmatprep.subr.mxu0 0.0
    %1705 = vmatpush1.msra.mxu0 %v384
    %1706 = vmatprep.subr.mxu0 0.0
    %1707 = vmatpush1.msra.mxu0 %v383
    %1708 = vmatprep.subr.mxu0 0.0
    %1709 = vmatpush1.msra.mxu0 %v382
    %1710 = vmatprep.subr.mxu0 0.0
    %1711 = vmatpush1.msra.mxu0 %v381
    %1712 = vmatprep.subr.mxu0 0.0
    %1713 = vmatpush2.msra.mxu0 0.0
    %1714 = vmatprep.subr.mxu0 0.0
    %1715 = vmatpush2.msra.mxu0 0.0
    %1716 = vmatprep.subr.mxu0 0.0
    %1717 = vmatpush2.msra.mxu0 0.0
    %1718 = vmatprep.subr.mxu0 0.0
    %1719 = vmatpush2.msra.mxu0 0.0
    %1720 = vmatprep.subr.mxu0 0.0
    %1721 = vmatpush2.msra.mxu0 0.0
    %1722 = vmatprep.subr.mxu0 0.0
    %1723 = vmatpush2.msra.mxu0 0.0
    %1724 = vmatprep.subr.mxu0 0.0
    %1725 = vmatpush2.msra.mxu0 0.0
    %1726 = vmatprep.subr.mxu0 0.0
    %1727 = vmatpush2.msra.mxu0 0.0
    %1728 = vmatprep.subr.mxu0 0.0
    %1729 = vmatpush2.msra.mxu0 0.0
    %1730 = vmatprep.subr.mxu0 0.0
    %1731 = vmatpush2.msra.mxu0 0.0
    %1732 = vmatprep.subr.mxu0 0.0
    %1733 = vmatpush2.msra.mxu0 0.0
    %1734 = vmatprep.subr.mxu0 0.0
    %1735 = vmatpush2.msra.mxu0 0.0
    %1736 = vmatprep.subr.mxu0 0.0
    %1737 = vmatpush2.msra.mxu0 0.0
    %1738 = vmatprep.subr.mxu0 0.0
    %1739 = vmatpush2.msra.mxu0 0.0
    %1740 = vmatprep.subr.mxu0 0.0
    %1741 = vmatpush2.msra.mxu0 0.0
    %1742 = vmatprep.subr.mxu0 0.0
    %1743 = vmatpush2.msra.mxu0 0.0
    %1744 = vmatprep.mubr.f32.mxu0 0.0
    %1745 = vmatmul.mubr.f32.gmra.mxu0 %v1678
    %v1746 = vpop.f32.mrf.mxu0
    %v1747 = vadd.f32 0.0, %v1746
    %v1748 = vpop.f32.mrf.mxu0
    %1749 = vdwg.mxu0
    %v1751 = vsel %vm393, %v1507, 0
    %1753 = vmatprep.subr.mxu0 0.0
    %1754 = vmatpush1.msra.mxu0 0.0
    %1755 = vmatprep.subr.mxu0 0.0
    %1756 = vmatpush1.msra.mxu0 0.0
    %1757 = vmatprep.subr.mxu0 0.0
    %1758 = vmatpush1.msra.mxu0 0.0
    %1759 = vmatprep.subr.mxu0 0.0
    %1760 = vmatpush1.msra.mxu0 0.0
    %1761 = vmatprep.subr.mxu0 0.0
    %1762 = vmatpush1.msra.mxu0 0.0
    %1763 = vmatprep.subr.mxu0 0.0
    %1764 = vmatpush1.msra.mxu0 0.0
    %1765 = vmatprep.subr.mxu0 0.0
    %1766 = vmatpush1.msra.mxu0 0.0
    %1767 = vmatprep.subr.mxu0 0.0
    %1768 = vmatpush1.msra.mxu0 0.0
    %1769 = vmatprep.subr.mxu0 0.0
    %1770 = vmatpush1.msra.mxu0 0.0
    %1771 = vmatprep.subr.mxu0 0.0
    %1772 = vmatpush1.msra.mxu0 0.0
    %1773 = vmatprep.subr.mxu0 0.0
    %1774 = vmatpush1.msra.mxu0 0.0
    %1775 = vmatprep.subr.mxu0 0.0
    %1776 = vmatpush1.msra.mxu0 0.0
    %1777 = vmatprep.subr.mxu0 0.0
    %1778 = vmatpush1.msra.mxu0 %v380
    %1779 = vmatprep.subr.mxu0 0.0
    %1780 = vmatpush1.msra.mxu0 %v379
    %1781 = vmatprep.subr.mxu0 0.0
    %1782 = vmatpush1.msra.mxu0 %v378
    %1783 = vmatprep.subr.mxu0 0.0
    %1784 = vmatpush1.msra.mxu0 %v377
    %1785 = vmatprep.subr.mxu0 0.0
    %1786 = vmatpush2.msra.mxu0 0.0
    %1787 = vmatprep.subr.mxu0 0.0
    %1788 = vmatpush2.msra.mxu0 0.0
    %1789 = vmatprep.subr.mxu0 0.0
    %1790 = vmatpush2.msra.mxu0 0.0
    %1791 = vmatprep.subr.mxu0 0.0
    %1792 = vmatpush2.msra.mxu0 0.0
    %1793 = vmatprep.subr.mxu0 0.0
    %1794 = vmatpush2.msra.mxu0 0.0
    %1795 = vmatprep.subr.mxu0 0.0
    %1796 = vmatpush2.msra.mxu0 0.0
    %1797 = vmatprep.subr.mxu0 0.0
    %1798 = vmatpush2.msra.mxu0 0.0
    %1799 = vmatprep.subr.mxu0 0.0
    %1800 = vmatpush2.msra.mxu0 0.0
    %1801 = vmatprep.subr.mxu0 0.0
    %1802 = vmatpush2.msra.mxu0 0.0
    %1803 = vmatprep.subr.mxu0 0.0
    %1804 = vmatpush2.msra.mxu0 0.0
    %1805 = vmatprep.subr.mxu0 0.0
    %1806 = vmatpush2.msra.mxu0 0.0
    %1807 = vmatprep.subr.mxu0 0.0
    %1808 = vmatpush2.msra.mxu0 0.0
    %1809 = vmatprep.subr.mxu0 0.0
    %1810 = vmatpush2.msra.mxu0 0.0
    %1811 = vmatprep.subr.mxu0 0.0
    %1812 = vmatpush2.msra.mxu0 0.0
    %1813 = vmatprep.subr.mxu0 0.0
    %1814 = vmatpush2.msra.mxu0 0.0
    %1815 = vmatprep.subr.mxu0 0.0
    %1816 = vmatpush2.msra.mxu0 0.0
    %1817 = vmatprep.mubr.f32.mxu0 0.0
    %1818 = vmatmul.mubr.f32.gmra.mxu0 %v1751
    %v1819 = vpop.f32.mrf.mxu0
    %v1820 = vadd.f32 %v1747, %v1819
    %v1821 = vpop.f32.mrf.mxu0
    %1822 = vdwg.mxu0
    %1823 = vrot.lane.b32.xlu0 %v348, 64
    %v1824 = vpop.permute.xlu0 %1823
    %1825 = vrot.lane.b32.xlu0 %v354, 64
    %v1826 = vpop.permute.xlu0 %1825
    %v1827 = vsel %vm393, %v1824, 0
    %v1829 = vsel %vm393, %v1826, 0
    %1831 = vmatprep.subr.mxu0 0.0
    %1832 = vmatpush1.xpose.msra.mxu0 0.0
    %1833 = vmatprep.subr.mxu0 0.0
    %1834 = vmatpush1.xpose.msra.mxu0 0.0
    %1835 = vmatprep.subr.mxu0 0.0
    %1836 = vmatpush1.xpose.msra.mxu0 0.0
    %1837 = vmatprep.subr.mxu0 0.0
    %1838 = vmatpush1.xpose.msra.mxu0 0.0
    %1839 = vmatprep.subr.mxu0 0.0
    %1840 = vmatpush1.xpose.msra.mxu0 0.0
    %1841 = vmatprep.subr.mxu0 0.0
    %1842 = vmatpush1.xpose.msra.mxu0 0.0
    %1843 = vmatprep.subr.mxu0 0.0
    %1844 = vmatpush1.xpose.msra.mxu0 0.0
    %1845 = vmatprep.subr.mxu0 0.0
    %1846 = vmatpush1.xpose.msra.mxu0 0.0
    %1847 = vmatprep.subr.mxu0 0.0
    %1848 = vmatpush1.xpose.msra.mxu0 0.0
    %1849 = vmatprep.subr.mxu0 0.0
    %1850 = vmatpush1.xpose.msra.mxu0 0.0
    %1851 = vmatprep.subr.mxu0 0.0
    %1852 = vmatpush1.xpose.msra.mxu0 0.0
    %1853 = vmatprep.subr.mxu0 0.0
    %1854 = vmatpush1.xpose.msra.mxu0 0.0
    %1855 = vmatprep.subr.mxu0 0.0
    %1856 = vmatpush1.xpose.msra.mxu0 0.0
    %1857 = vmatprep.subr.mxu0 0.0
    %1858 = vmatpush1.xpose.msra.mxu0 0.0
    %1859 = vmatprep.subr.mxu0 0.0
    %1860 = vmatpush1.xpose.msra.mxu0 0.0
    %1861 = vmatprep.subr.mxu0 0.0
    %1862 = vmatpush1.xpose.msra.mxu0 %v1829
    %1863 = vmatprep.subr.mxu0 0.0
    %1864 = vmatpush2.xpose.msra.mxu0 0.0
    %1865 = vmatprep.subr.mxu0 0.0
    %1866 = vmatpush2.xpose.msra.mxu0 0.0
    %1867 = vmatprep.subr.mxu0 0.0
    %1868 = vmatpush2.xpose.msra.mxu0 0.0
    %1869 = vmatprep.subr.mxu0 0.0
    %1870 = vmatpush2.xpose.msra.mxu0 0.0
    %1871 = vmatprep.subr.mxu0 0.0
    %1872 = vmatpush2.xpose.msra.mxu0 0.0
    %1873 = vmatprep.subr.mxu0 0.0
    %1874 = vmatpush2.xpose.msra.mxu0 0.0
    %1875 = vmatprep.subr.mxu0 0.0
    %1876 = vmatpush2.xpose.msra.mxu0 0.0
    %1877 = vmatprep.subr.mxu0 0.0
    %1878 = vmatpush2.xpose.msra.mxu0 0.0
    %1879 = vmatprep.subr.mxu0 0.0
    %1880 = vmatpush2.xpose.msra.mxu0 0.0
    %1881 = vmatprep.subr.mxu0 0.0
    %1882 = vmatpush2.xpose.msra.mxu0 0.0
    %1883 = vmatprep.subr.mxu0 0.0
    %1884 = vmatpush2.xpose.msra.mxu0 0.0
    %1885 = vmatprep.subr.mxu0 0.0
    %1886 = vmatpush2.xpose.msra.mxu0 0.0
    %1887 = vmatprep.subr.mxu0 0.0
    %1888 = vmatpush2.xpose.msra.mxu0 0.0
    %1889 = vmatprep.subr.mxu0 0.0
    %1890 = vmatpush2.xpose.msra.mxu0 0.0
    %1891 = vmatprep.subr.mxu0 0.0
    %1892 = vmatpush2.xpose.msra.mxu0 0.0
    %1893 = vmatprep.subr.mxu0 0.0
    %1894 = vmatpush2.xpose.msra.mxu0 0.0
    %1895 = vmatprep.mubr.f32.mxu0 0.0
    %1896 = vmatmul.mubr.f32.gmra.mxu0 %v1827
    %v1897 = vpop.f32.mrf.mxu0
    %v1898 = vadd.f32 0.0, %v1897
    %v1899 = vpop.f32.mrf.mxu0
    %1900 = vdwg.mxu0
    %v1901 = vmul.f32 %v1898, 0.17677669
    %v1902 = vsel %vm471, %v1901, -inf
    %1903 = vmax.xlane.f32.xlu0 %v1902
    %v1904 = vpop.xlane.xlu0 %1903
    %v1905 = vsub.f32 %v1901, %v1904
    %v1906 = vmul.f32 %v1905, 1.442695
    %v1907 = vpow.pop %v1906
    %v1908 = vsel %vm471, %v1907, 0.0
    %1909 = vadd.xlane.f32.xlu0 %v1908
    %v1910 = vpop.xlane.xlu0 %1909
    %v1911 = vrcp.pop %v1910
    %v1912 = vmul.f32 %v1907, %v1911
    %1913 = vrot.lane.b32.xlu0 %v360, 64
    %v1914 = vpop.permute.xlu0 %1913
    %v1917 = vsel %vm471, %v1912, 0
    %1919 = vmatprep.subr.mxu0 0.0
    %1920 = vmatpush1.msra.mxu0 0.0
    %1921 = vmatprep.subr.mxu0 0.0
    %1922 = vmatpush1.msra.mxu0 0.0
    %1923 = vmatprep.subr.mxu0 0.0
    %1924 = vmatpush1.msra.mxu0 0.0
    %1925 = vmatprep.subr.mxu0 0.0
    %1926 = vmatpush1.msra.mxu0 0.0
    %1927 = vmatprep.subr.mxu0 0.0
    %1928 = vmatpush1.msra.mxu0 0.0
    %1929 = vmatprep.subr.mxu0 0.0
    %1930 = vmatpush1.msra.mxu0 0.0
    %1931 = vmatprep.subr.mxu0 0.0
    %1932 = vmatpush1.msra.mxu0 0.0
    %1933 = vmatprep.subr.mxu0 0.0
    %1934 = vmatpush1.msra.mxu0 0.0
    %1935 = vmatprep.subr.mxu0 0.0
    %1936 = vmatpush1.msra.mxu0 0.0
    %1937 = vmatprep.subr.mxu0 0.0
    %1938 = vmatpush1.msra.mxu0 0.0
    %1939 = vmatprep.subr.mxu0 0.0
    %1940 = vmatpush1.msra.mxu0 0.0
    %1941 = vmatprep.subr.mxu0 0.0
    %1942 = vmatpush1.msra.mxu0 0.0
    %1943 = vmatprep.subr.mxu0 0.0
    %1944 = vmatpush1.msra.mxu0 0.0
    %1945 = vmatprep.subr.mxu0 0.0
    %1946 = vmatpush1.msra.mxu0 0.0
    %1947 = vmatprep.subr.mxu0 0.0
    %1948 = vmatpush1.msra.mxu0 0.0
    %1949 = vmatprep.subr.mxu0 0.0
    %1950 = vmatpush1.msra.mxu0 %v1914
    %1951 = vmatprep.subr.mxu0 0.0
    %1952 = vmatpush2.msra.mxu0 0.0
    %1953 = vmatprep.subr.mxu0 0.0
    %1954 = vmatpush2.msra.mxu0 0.0
    %1955 = vmatprep.subr.mxu0 0.0
    %1956 = vmatpush2.msra.mxu0 0.0
    %1957 = vmatprep.subr.mxu0 0.0
    %1958 = vmatpush2.msra.mxu0 0.0
    %1959 = vmatprep.subr.mxu0 0.0
    %1960 = vmatpush2.msra.mxu0 0.0
    %1961 = vmatprep.subr.mxu0 0.0
    %1962 = vmatpush2.msra.mxu0 0.0
    %1963 = vmatprep.subr.mxu0 0.0
    %1964 = vmatpush2.msra.mxu0 0.0
    %1965 = vmatprep.subr.mxu0 0.0
    %1966 = vmatpush2.msra.mxu0 0.0
    %1967 = vmatprep.subr.mxu0 0.0
    %1968 = vmatpush2.msra.mxu0 0.0
    %1969 = vmatprep.subr.mxu0 0.0
    %1970 = vmatpush2.msra.mxu0 0.0
    %1971 = vmatprep.subr.mxu0 0.0
    %1972 = vmatpush2.msra.mxu0 0.0
    %1973 = vmatprep.subr.mxu0 0.0
    %1974 = vmatpush2.msra.mxu0 0.0
    %1975 = vmatprep.subr.mxu0 0.0
    %1976 = vmatpush2.msra.mxu0 0.0
    %1977 = vmatprep.subr.mxu0 0.0
    %1978 = vmatpush2.msra.mxu0 0.0
    %1979 = vmatprep.subr.mxu0 0.0
    %1980 = vmatpush2.msra.mxu0 0.0
    %1981 = vmatprep.subr.mxu0 0.0
    %1982 = vmatpush2.msra.mxu0 0.0
    %1983 = vmatprep.mubr.f32.mxu0 0.0
    %1984 = vmatmul.mubr.f32.gmra.mxu0 %v1917
    %v1985 = vpop.f32.mrf.mxu0
    %v1986 = vadd.f32 0.0, %v1985
    %v1987 = vpop.f32.mrf.mxu0
    %1988 = vdwg.mxu0
    %v1990 = vsel %vm393, %v1986, 0
    %1992 = vmatprep.subr.mxu0 0.0
    %1993 = vmatpush1.msra.mxu0 0.0
    %1994 = vmatprep.subr.mxu0 0.0
    %1995 = vmatpush1.msra.mxu0 0.0
    %1996 = vmatprep.subr.mxu0 0.0
    %1997 = vmatpush1.msra.mxu0 0.0
    %1998 = vmatprep.subr.mxu0 0.0
    %1999 = vmatpush1.msra.mxu0 0.0
    %2000 = vmatprep.subr.mxu0 0.0
    %2001 = vmatpush1.msra.mxu0 0.0
    %2002 = vmatprep.subr.mxu0 0.0
    %2003 = vmatpush1.msra.mxu0 0.0
    %2004 = vmatprep.subr.mxu0 0.0
    %2005 = vmatpush1.msra.mxu0 0.0
    %2006 = vmatprep.subr.mxu0 0.0
    %2007 = vmatpush1.msra.mxu0 0.0
    %2008 = vmatprep.subr.mxu0 0.0
    %2009 = vmatpush1.msra.mxu0 0.0
    %2010 = vmatprep.subr.mxu0 0.0
    %2011 = vmatpush1.msra.mxu0 0.0
    %2012 = vmatprep.subr.mxu0 0.0
    %2013 = vmatpush1.msra.mxu0 0.0
    %2014 = vmatprep.subr.mxu0 0.0
    %2015 = vmatpush1.msra.mxu0 0.0
    %2016 = vmatprep.subr.mxu0 0.0
    %2017 = vmatpush1.msra.mxu0 %v388
    %2018 = vmatprep.subr.mxu0 0.0
    %2019 = vmatpush1.msra.mxu0 %v387
    %2020 = vmatprep.subr.mxu0 0.0
    %2021 = vmatpush1.msra.mxu0 %v386
    %2022 = vmatprep.subr.mxu0 0.0
    %2023 = vmatpush1.msra.mxu0 %v385
    %2024 = vmatprep.subr.mxu0 0.0
    %2025 = vmatpush2.msra.mxu0 0.0
    %2026 = vmatprep.subr.mxu0 0.0
    %2027 = vmatpush2.msra.mxu0 0.0
    %2028 = vmatprep.subr.mxu0 0.0
    %2029 = vmatpush2.msra.mxu0 0.0
    %2030 = vmatprep.subr.mxu0 0.0
    %2031 = vmatpush2.msra.mxu0 0.0
    %2032 = vmatprep.subr.mxu0 0.0
    %2033 = vmatpush2.msra.mxu0 0.0
    %2034 = vmatprep.subr.mxu0 0.0
    %2035 = vmatpush2.msra.mxu0 0.0
    %2036 = vmatprep.subr.mxu0 0.0
    %2037 = vmatpush2.msra.mxu0 0.0
    %2038 = vmatprep.subr.mxu0 0.0
    %2039 = vmatpush2.msra.mxu0 0.0
    %2040 = vmatprep.subr.mxu0 0.0
    %2041 = vmatpush2.msra.mxu0 0.0
    %2042 = vmatprep.subr.mxu0 0.0
    %2043 = vmatpush2.msra.mxu0 0.0
    %2044 = vmatprep.subr.mxu0 0.0
    %2045 = vmatpush2.msra.mxu0 0.0
    %2046 = vmatprep.subr.mxu0 0.0
    %2047 = vmatpush2.msra.mxu0 0.0
    %2048 = vmatprep.subr.mxu0 0.0
    %2049 = vmatpush2.msra.mxu0 0.0
    %2050 = vmatprep.subr.mxu0 0.0
    %2051 = vmatpush2.msra.mxu0 0.0
    %2052 = vmatprep.subr.mxu0 0.0
    %2053 = vmatpush2.msra.mxu0 0.0
    %2054 = vmatprep.subr.mxu0 0.0
    %2055 = vmatpush2.msra.mxu0 0.0
    %2056 = vmatprep.mubr.f32.mxu0 0.0
    %2057 = vmatmul.mubr.f32.gmra.mxu0 %v1990
    %v2058 = vpop.f32.mrf.mxu0
    %v2059 = vadd.f32 0.0, %v2058
    %v2060 = vpop.f32.mrf.mxu0
    %2061 = vdwg.mxu0
    %v2062 = vadd.f32 %v1820, %v2059
    %2063 = vrot.lane.b32.xlu0 %v348, 32
    %v2064 = vpop.permute.xlu0 %2063
    %2065 = vrot.lane.b32.xlu0 %v354, 32
    %v2066 = vpop.permute.xlu0 %2065
    %v2067 = vsel %vm393, %v2064, 0
    %v2069 = vsel %vm393, %v2066, 0
    %2071 = vmatprep.subr.mxu0 0.0
    %2072 = vmatpush1.xpose.msra.mxu0 0.0
    %2073 = vmatprep.subr.mxu0 0.0
    %2074 = vmatpush1.xpose.msra.mxu0 0.0
    %2075 = vmatprep.subr.mxu0 0.0
    %2076 = vmatpush1.xpose.msra.mxu0 0.0
    %2077 = vmatprep.subr.mxu0 0.0
    %2078 = vmatpush1.xpose.msra.mxu0 0.0
    %2079 = vmatprep.subr.mxu0 0.0
    %2080 = vmatpush1.xpose.msra.mxu0 0.0
    %2081 = vmatprep.subr.mxu0 0.0
    %2082 = vmatpush1.xpose.msra.mxu0 0.0
    %2083 = vmatprep.subr.mxu0 0.0
    %2084 = vmatpush1.xpose.msra.mxu0 0.0
    %2085 = vmatprep.subr.mxu0 0.0
    %2086 = vmatpush1.xpose.msra.mxu0 0.0
    %2087 = vmatprep.subr.mxu0 0.0
    %2088 = vmatpush1.xpose.msra.mxu0 0.0
    %2089 = vmatprep.subr.mxu0 0.0
    %2090 = vmatpush1.xpose.msra.mxu0 0.0
    %2091 = vmatprep.subr.mxu0 0.0
    %2092 = vmatpush1.xpose.msra.mxu0 0.0
    %2093 = vmatprep.subr.mxu0 0.0
    %2094 = vmatpush1.xpose.msra.mxu0 0.0
    %2095 = vmatprep.subr.mxu0 0.0
    %2096 = vmatpush1.xpose.msra.mxu0 0.0
    %2097 = vmatprep.subr.mxu0 0.0
    %2098 = vmatpush1.xpose.msra.mxu0 0.0
    %2099 = vmatprep.subr.mxu0 0.0
    %2100 = vmatpush1.xpose.msra.mxu0 0.0
    %2101 = vmatprep.subr.mxu0 0.0
    %2102 = vmatpush1.xpose.msra.mxu0 %v2069
    %2103 = vmatprep.subr.mxu0 0.0
    %2104 = vmatpush2.xpose.msra.mxu0 0.0
    %2105 = vmatprep.subr.mxu0 0.0
    %2106 = vmatpush2.xpose.msra.mxu0 0.0
    %2107 = vmatprep.subr.mxu0 0.0
    %2108 = vmatpush2.xpose.msra.mxu0 0.0
    %2109 = vmatprep.subr.mxu0 0.0
    %2110 = vmatpush2.xpose.msra.mxu0 0.0
    %2111 = vmatprep.subr.mxu0 0.0
    %2112 = vmatpush2.xpose.msra.mxu0 0.0
    %2113 = vmatprep.subr.mxu0 0.0
    %2114 = vmatpush2.xpose.msra.mxu0 0.0
    %2115 = vmatprep.subr.mxu0 0.0
    %2116 = vmatpush2.xpose.msra.mxu0 0.0
    %2117 = vmatprep.subr.mxu0 0.0
    %2118 = vmatpush2.xpose.msra.mxu0 0.0
    %2119 = vmatprep.subr.mxu0 0.0
    %2120 = vmatpush2.xpose.msra.mxu0 0.0
    %2121 = vmatprep.subr.mxu0 0.0
    %2122 = vmatpush2.xpose.msra.mxu0 0.0
    %2123 = vmatprep.subr.mxu0 0.0
    %2124 = vmatpush2.xpose.msra.mxu0 0.0
    %2125 = vmatprep.subr.mxu0 0.0
    %2126 = vmatpush2.xpose.msra.mxu0 0.0
    %2127 = vmatprep.subr.mxu0 0.0
    %2128 = vmatpush2.xpose.msra.mxu0 0.0
    %2129 = vmatprep.subr.mxu0 0.0
    %2130 = vmatpush2.xpose.msra.mxu0 0.0
    %2131 = vmatprep.subr.mxu0 0.0
    %2132 = vmatpush2.xpose.msra.mxu0 0.0
    %2133 = vmatprep.subr.mxu0 0.0
    %2134 = vmatpush2.xpose.msra.mxu0 0.0
    %2135 = vmatprep.mubr.f32.mxu0 0.0
    %2136 = vmatmul.mubr.f32.gmra.mxu0 %v2067
    %v2137 = vpop.f32.mrf.mxu0
    %v2138 = vadd.f32 0.0, %v2137
    %v2139 = vpop.f32.mrf.mxu0
    %2140 = vdwg.mxu0
    %v2141 = vmul.f32 %v2138, 0.17677669
    %v2142 = vsel %vm471, %v2141, -inf
    %2143 = vmax.xlane.f32.xlu0 %v2142
    %v2144 = vpop.xlane.xlu0 %2143
    %v2145 = vsub.f32 %v2141, %v2144
    %v2146 = vmul.f32 %v2145, 1.442695
    %v2147 = vpow.pop %v2146
    %v2148 = vsel %vm471, %v2147, 0.0
    %2149 = vadd.xlane.f32.xlu0 %v2148
    %v2150 = vpop.xlane.xlu0 %2149
    %v2151 = vrcp.pop %v2150
    %v2152 = vmul.f32 %v2147, %v2151
    %2153 = vrot.lane.b32.xlu0 %v360, 32
    %v2154 = vpop.permute.xlu0 %2153
    %v2157 = vsel %vm471, %v2152, 0
    %2159 = vmatprep.subr.mxu0 0.0
    %2160 = vmatpush1.msra.mxu0 0.0
    %2161 = vmatprep.subr.mxu0 0.0
    %2162 = vmatpush1.msra.mxu0 0.0
    %2163 = vmatprep.subr.mxu0 0.0
    %2164 = vmatpush1.msra.mxu0 0.0
    %2165 = vmatprep.subr.mxu0 0.0
    %2166 = vmatpush1.msra.mxu0 0.0
    %2167 = vmatprep.subr.mxu0 0.0
    %2168 = vmatpush1.msra.mxu0 0.0
    %2169 = vmatprep.subr.mxu0 0.0
    %2170 = vmatpush1.msra.mxu0 0.0
    %2171 = vmatprep.subr.mxu0 0.0
    %2172 = vmatpush1.msra.mxu0 0.0
    %2173 = vmatprep.subr.mxu0 0.0
    %2174 = vmatpush1.msra.mxu0 0.0
    %2175 = vmatprep.subr.mxu0 0.0
    %2176 = vmatpush1.msra.mxu0 0.0
    %2177 = vmatprep.subr.mxu0 0.0
    %2178 = vmatpush1.msra.mxu0 0.0
    %2179 = vmatprep.subr.mxu0 0.0
    %2180 = vmatpush1.msra.mxu0 0.0
    %2181 = vmatprep.subr.mxu0 0.0
    %2182 = vmatpush1.msra.mxu0 0.0
    %2183 = vmatprep.subr.mxu0 0.0
    %2184 = vmatpush1.msra.mxu0 0.0
    %2185 = vmatprep.subr.mxu0 0.0
    %2186 = vmatpush1.msra.mxu0 0.0
    %2187 = vmatprep.subr.mxu0 0.0
    %2188 = vmatpush1.msra.mxu0 0.0
    %2189 = vmatprep.subr.mxu0 0.0
    %2190 = vmatpush1.msra.mxu0 %v2154
    %2191 = vmatprep.subr.mxu0 0.0
    %2192 = vmatpush2.msra.mxu0 0.0
    %2193 = vmatprep.subr.mxu0 0.0
    %2194 = vmatpush2.msra.mxu0 0.0
    %2195 = vmatprep.subr.mxu0 0.0
    %2196 = vmatpush2.msra.mxu0 0.0
    %2197 = vmatprep.subr.mxu0 0.0
    %2198 = vmatpush2.msra.mxu0 0.0
    %2199 = vmatprep.subr.mxu0 0.0
    %2200 = vmatpush2.msra.mxu0 0.0
    %2201 = vmatprep.subr.mxu0 0.0
    %2202 = vmatpush2.msra.mxu0 0.0
    %2203 = vmatprep.subr.mxu0 0.0
    %2204 = vmatpush2.msra.mxu0 0.0
    %2205 = vmatprep.subr.mxu0 0.0
    %2206 = vmatpush2.msra.mxu0 0.0
    %2207 = vmatprep.subr.mxu0 0.0
    %2208 = vmatpush2.msra.mxu0 0.0
    %2209 = vmatprep.subr.mxu0 0.0
    %2210 = vmatpush2.msra.mxu0 0.0
    %2211 = vmatprep.subr.mxu0 0.0
    %2212 = vmatpush2.msra.mxu0 0.0
    %2213 = vmatprep.subr.mxu0 0.0
    %2214 = vmatpush2.msra.mxu0 0.0
    %2215 = vmatprep.subr.mxu0 0.0
    %2216 = vmatpush2.msra.mxu0 0.0
    %2217 = vmatprep.subr.mxu0 0.0
    %2218 = vmatpush2.msra.mxu0 0.0
    %2219 = vmatprep.subr.mxu0 0.0
    %2220 = vmatpush2.msra.mxu0 0.0
    %2221 = vmatprep.subr.mxu0 0.0
    %2222 = vmatpush2.msra.mxu0 0.0
    %2223 = vmatprep.mubr.f32.mxu0 0.0
    %2224 = vmatmul.mubr.f32.gmra.mxu0 %v2157
    %v2225 = vpop.f32.mrf.mxu0
    %v2226 = vadd.f32 0.0, %v2225
    %v2227 = vpop.f32.mrf.mxu0
    %2228 = vdwg.mxu0
    %v2230 = vsel %vm393, %v2226, 0
    %2232 = vmatprep.subr.mxu0 0.0
    %2233 = vmatpush1.msra.mxu0 0.0
    %2234 = vmatprep.subr.mxu0 0.0
    %2235 = vmatpush1.msra.mxu0 0.0
    %2236 = vmatprep.subr.mxu0 0.0
    %2237 = vmatpush1.msra.mxu0 0.0
    %2238 = vmatprep.subr.mxu0 0.0
    %2239 = vmatpush1.msra.mxu0 0.0
    %2240 = vmatprep.subr.mxu0 0.0
    %2241 = vmatpush1.msra.mxu0 0.0
    %2242 = vmatprep.subr.mxu0 0.0
    %2243 = vmatpush1.msra.mxu0 0.0
    %2244 = vmatprep.subr.mxu0 0.0
    %2245 = vmatpush1.msra.mxu0 0.0
    %2246 = vmatprep.subr.mxu0 0.0
    %2247 = vmatpush1.msra.mxu0 0.0
    %2248 = vmatprep.subr.mxu0 0.0
    %2249 = vmatpush1.msra.mxu0 0.0
    %2250 = vmatprep.subr.mxu0 0.0
    %2251 = vmatpush1.msra.mxu0 0.0
    %2252 = vmatprep.subr.mxu0 0.0
    %2253 = vmatpush1.msra.mxu0 0.0
    %2254 = vmatprep.subr.mxu0 0.0
    %2255 = vmatpush1.msra.mxu0 0.0
    %2256 = vmatprep.subr.mxu0 0.0
    %2257 = vmatpush1.msra.mxu0 %v392
    %2258 = vmatprep.subr.mxu0 0.0
    %2259 = vmatpush1.msra.mxu0 %v391
    %2260 = vmatprep.subr.mxu0 0.0
    %2261 = vmatpush1.msra.mxu0 %v390
    %2262 = vmatprep.subr.mxu0 0.0
    %2263 = vmatpush1.msra.mxu0 %v389
    %2264 = vmatprep.subr.mxu0 0.0
    %2265 = vmatpush2.msra.mxu0 0.0
    %2266 = vmatprep.subr.mxu0 0.0
    %2267 = vmatpush2.msra.mxu0 0.0
    %2268 = vmatprep.subr.mxu0 0.0
    %2269 = vmatpush2.msra.mxu0 0.0
    %2270 = vmatprep.subr.mxu0 0.0
    %2271 = vmatpush2.msra.mxu0 0.0
    %2272 = vmatprep.subr.mxu0 0.0
    %2273 = vmatpush2.msra.mxu0 0.0
    %2274 = vmatprep.subr.mxu0 0.0
    %2275 = vmatpush2.msra.mxu0 0.0
    %2276 = vmatprep.subr.mxu0 0.0
    %2277 = vmatpush2.msra.mxu0 0.0
    %2278 = vmatprep.subr.mxu0 0.0
    %2279 = vmatpush2.msra.mxu0 0.0
    %2280 = vmatprep.subr.mxu0 0.0
    %2281 = vmatpush2.msra.mxu0 0.0
    %2282 = vmatprep.subr.mxu0 0.0
    %2283 = vmatpush2.msra.mxu0 0.0
    %2284 = vmatprep.subr.mxu0 0.0
    %2285 = vmatpush2.msra.mxu0 0.0
    %2286 = vmatprep.subr.mxu0 0.0
    %2287 = vmatpush2.msra.mxu0 0.0
    %2288 = vmatprep.subr.mxu0 0.0
    %2289 = vmatpush2.msra.mxu0 0.0
    %2290 = vmatprep.subr.mxu0 0.0
    %2291 = vmatpush2.msra.mxu0 0.0
    %2292 = vmatprep.subr.mxu0 0.0
    %2293 = vmatpush2.msra.mxu0 0.0
    %2294 = vmatprep.subr.mxu0 0.0
    %2295 = vmatpush2.msra.mxu0 0.0
    %2296 = vmatprep.mubr.f32.mxu0 0.0
    %2297 = vmatmul.mubr.f32.gmra.mxu0 %v2230
    %v2298 = vpop.f32.mrf.mxu0
    %v2299 = vadd.f32 0.0, %v2298
    %v2300 = vpop.f32.mrf.mxu0
    %2301 = vdwg.mxu0
    %v2302 = vadd.f32 %v2062, %v2299
    %v2303 = vlaneseq
    %v2304 = vshrl.u32 %v2303, 7
    %v2305 = vsub.s32 3, %v2304
    %v2306 = vrot.slane %v109, %v2305
    %v2307 = vadd.f32 %v1348, %v2306
    %v2308 = vadd.f32 %v2302, %v2306
    %v2309 = vadd.f32 %v107, %v2307
    %v2310 = vadd.f32 %v108, %v2308
    %2311 = vadd.xlane.f32.xlu0 %v2309
    %v2312 = vpop.xlane.xlu0 %2311
    %2313 = vadd.xlane.f32.xlu0 %v2310
    %v2314 = vpop.xlane.xlu0 %2313
    %v2315 = vrcp.pop 128.0
    %v2316 = vmul.f32 %v2312, %v2315
    %v2317 = vmul.f32 %v2314, %v2315
    %v2318 = vsub.f32 %v2309, %v2316
    %v2319 = vsub.f32 %v2310, %v2317
    %v2320 = vmul.f32 %v2318, %v2318
    %v2321 = vmul.f32 %v2319, %v2319
    %2322 = vadd.xlane.f32.xlu0 %v2320
    %v2323 = vpop.xlane.xlu0 %2322
    %2324 = vadd.xlane.f32.xlu0 %v2321
    %v2325 = vpop.xlane.xlu0 %2324
    %v2326 = vmul.f32 %v2323, %v2315
    %v2327 = vmul.f32 %v2325, %v2315
    %v2328 = vadd.f32 %v2326, 1e-05
    %v2329 = vadd.f32 %v2327, 1e-05
    %v2330 = vrsqrt.pop %v2328
    %v2331 = vrsqrt.pop %v2329
    %v2332 = vmul.f32 %v2318, %v2330
    %v2333 = vmul.f32 %v2319, %v2331
    %v2334 = vlaneseq
    %v2335 = vshrl.u32 %v2334, 7
    %v2336 = vsub.s32 4, %v2335
    %v2337 = vrot.slane %v109, %v2336
    %v2338 = vmul.f32 %v2332, %v2337
    %v2339 = vmul.f32 %v2333, %v2337
    %v2340 = vlaneseq
    %v2341 = vshrl.u32 %v2340, 7
    %v2342 = vsub.s32 5, %v2341
    %v2343 = vrot.slane %v109, %v2342
    %v2344 = vadd.f32 %v2338, %v2343
    %v2345 = vadd.f32 %v2339, %v2343
    %v2346 = vld [vmem:[#allocation8] sm:$0xff]
    %v2347 = vld [vmem:[#allocation8 + $0x8] sm:$0xff]
    %v2348 = vld [vmem:[#allocation8 + $0x10] sm:$0xff]
    %v2349 = vld [vmem:[#allocation8 + $0x18] sm:$0xff]
    %v2350 = vld [vmem:[#allocation8 + $0x20] sm:$0xff]
    %v2351 = vld [vmem:[#allocation8 + $0x28] sm:$0xff]
    %v2352 = vld [vmem:[#allocation8 + $0x30] sm:$0xff]
    %v2353 = vld [vmem:[#allocation8 + $0x38] sm:$0xff]
    %v2354 = vld [vmem:[#allocation8 + $0x40] sm:$0xff]
    %v2355 = vld [vmem:[#allocation8 + $0x48] sm:$0xff]
    %v2356 = vld [vmem:[#allocation8 + $0x50] sm:$0xff]
    %v2357 = vld [vmem:[#allocation8 + $0x58] sm:$0xff]
    %v2358 = vld [vmem:[#allocation8 + $0x60] sm:$0xff]
    %v2359 = vld [vmem:[#allocation8 + $0x68] sm:$0xff]
    %v2360 = vld [vmem:[#allocation8 + $0x70] sm:$0xff]
    %v2361 = vld [vmem:[#allocation8 + $0x78] sm:$0xff]
    %v2362 = vunpack.c.l.bf16 %v2346
    %v2363 = vunpack.c.h.bf16 %v2346
    %v2364 = vunpack.c.l.bf16 %v2347
    %v2365 = vunpack.c.h.bf16 %v2347
    %v2366 = vunpack.c.l.bf16 %v2348
    %v2367 = vunpack.c.h.bf16 %v2348
    %v2368 = vunpack.c.l.bf16 %v2349
    %v2369 = vunpack.c.h.bf16 %v2349
    %v2370 = vunpack.c.l.bf16 %v2350
    %v2371 = vunpack.c.h.bf16 %v2350
    %v2372 = vunpack.c.l.bf16 %v2351
    %v2373 = vunpack.c.h.bf16 %v2351
    %v2374 = vunpack.c.l.bf16 %v2352
    %v2375 = vunpack.c.h.bf16 %v2352
    %v2376 = vunpack.c.l.bf16 %v2353
    %v2377 = vunpack.c.h.bf16 %v2353
    %v2378 = vunpack.c.l.bf16 %v2354
    %v2379 = vunpack.c.h.bf16 %v2354
    %v2380 = vunpack.c.l.bf16 %v2355
    %v2381 = vunpack.c.h.bf16 %v2355
    %v2382 = vunpack.c.l.bf16 %v2356
    %v2383 = vunpack.c.h.bf16 %v2356
    %v2384 = vunpack.c.l.bf16 %v2357
    %v2385 = vunpack.c.h.bf16 %v2357
    %v2386 = vunpack.c.l.bf16 %v2358
    %v2387 = vunpack.c.h.bf16 %v2358
    %v2388 = vunpack.c.l.bf16 %v2359
    %v2389 = vunpack.c.h.bf16 %v2359
    %v2390 = vunpack.c.l.bf16 %v2360
    %v2391 = vunpack.c.h.bf16 %v2360
    %v2392 = vunpack.c.l.bf16 %v2361
    %v2393 = vunpack.c.h.bf16 %v2361
    %v2394 = vld [vmem:[#allocation10] sm:$0xf]
    %v2395 = vld [vmem:[#allocation10 + $0x4] sm:$0xf]
    %v2396 = vld [vmem:[#allocation10 + $0x8] sm:$0xf]
    %v2397 = vld [vmem:[#allocation10 + $0xc] sm:$0xf]
    %v2398 = vld [vmem:[#allocation10 + $0x10] sm:$0xf]
    %v2399 = vld [vmem:[#allocation10 + $0x14] sm:$0xf]
    %v2400 = vld [vmem:[#allocation10 + $0x18] sm:$0xf]
    %v2401 = vld [vmem:[#allocation10 + $0x1c] sm:$0xf]
    %v2402 = vld [vmem:[#allocation10 + $0x20] sm:$0xf]
    %v2403 = vld [vmem:[#allocation10 + $0x24] sm:$0xf]
    %v2404 = vld [vmem:[#allocation10 + $0x28] sm:$0xf]
    %v2405 = vld [vmem:[#allocation10 + $0x2c] sm:$0xf]
    %v2406 = vld [vmem:[#allocation10 + $0x30] sm:$0xf]
    %v2407 = vld [vmem:[#allocation10 + $0x34] sm:$0xf]
    %v2408 = vld [vmem:[#allocation10 + $0x38] sm:$0xf]
    %v2409 = vld [vmem:[#allocation10 + $0x3c] sm:$0xf]
    %v2410 = vld [vmem:[#allocation10 + $0x40] sm:$0xf]
    %v2411 = vld [vmem:[#allocation10 + $0x44] sm:$0xf]
    %v2412 = vld [vmem:[#allocation10 + $0x48] sm:$0xf]
    %v2413 = vld [vmem:[#allocation10 + $0x4c] sm:$0xf]
    %v2414 = vld [vmem:[#allocation10 + $0x50] sm:$0xf]
    %v2415 = vld [vmem:[#allocation10 + $0x54] sm:$0xf]
    %v2416 = vld [vmem:[#allocation10 + $0x58] sm:$0xf]
    %v2417 = vld [vmem:[#allocation10 + $0x5c] sm:$0xf]
    %v2418 = vld [vmem:[#allocation10 + $0x60] sm:$0xf]
    %v2419 = vld [vmem:[#allocation10 + $0x64] sm:$0xf]
    %v2420 = vld [vmem:[#allocation10 + $0x68] sm:$0xf]
    %v2421 = vld [vmem:[#allocation10 + $0x6c] sm:$0xf]
    %v2422 = vld [vmem:[#allocation10 + $0x70] sm:$0xf]
    %v2423 = vld [vmem:[#allocation10 + $0x74] sm:$0xf]
    %v2424 = vld [vmem:[#allocation10 + $0x78] sm:$0xf]
    %v2425 = vld [vmem:[#allocation10 + $0x7c] sm:$0xf]
    %v2426 = vunpack.c.l.bf16 %v2394
    %v2427 = vunpack.c.l.bf16 %v2395
    %v2428 = vunpack.c.l.bf16 %v2396
    %v2429 = vunpack.c.l.bf16 %v2397
    %v2430 = vunpack.c.l.bf16 %v2398
    %v2431 = vunpack.c.l.bf16 %v2399
    %v2432 = vunpack.c.l.bf16 %v2400
    %v2433 = vunpack.c.l.bf16 %v2401
    %v2434 = vunpack.c.l.bf16 %v2402
    %v2435 = vunpack.c.l.bf16 %v2403
    %v2436 = vunpack.c.l.bf16 %v2404
    %v2437 = vunpack.c.l.bf16 %v2405
    %v2438 = vunpack.c.l.bf16 %v2406
    %v2439 = vunpack.c.l.bf16 %v2407
    %v2440 = vunpack.c.l.bf16 %v2408
    %v2441 = vunpack.c.l.bf16 %v2409
    %v2442 = vunpack.c.l.bf16 %v2410
    %v2443 = vunpack.c.l.bf16 %v2411
    %v2444 = vunpack.c.l.bf16 %v2412
    %v2445 = vunpack.c.l.bf16 %v2413
    %v2446 = vunpack.c.l.bf16 %v2414
    %v2447 = vunpack.c.l.bf16 %v2415
    %v2448 = vunpack.c.l.bf16 %v2416
    %v2449 = vunpack.c.l.bf16 %v2417
    %v2450 = vunpack.c.l.bf16 %v2418
    %v2451 = vunpack.c.l.bf16 %v2419
    %v2452 = vunpack.c.l.bf16 %v2420
    %v2453 = vunpack.c.l.bf16 %v2421
    %v2454 = vunpack.c.l.bf16 %v2422
    %v2455 = vunpack.c.l.bf16 %v2423
    %v2456 = vunpack.c.l.bf16 %v2424
    %v2457 = vunpack.c.l.bf16 %v2425
    %v2459 = vlaneseq
    %v2460 = vshrl.u32 %v2459, 7
    %v2461 = vsub.s32 0, %v2460
    %v2462 = vrot.slane %v110, %v2461
    %v2463 = vlaneseq
    %v2464 = vshrl.u32 %v2463, 7
    %v2465 = vsub.s32 2, %v2464
    %v2466 = vrot.slane %v110, %v2465
    %v2469 = vlaneseq
    %v2470 = vshrl.u32 %v2469, 7
    %v2471 = vsub.s32 0, %v2470
    %v2472 = vrot.slane %v2462, %v2471
    %v2473 = vlaneseq
    %v2474 = vshrl.u32 %v2473, 7
    %v2475 = vsub.s32 0, %v2474
    %v2476 = vrot.slane %v2466, %v2475
    %2477 = vmatprep.subr.mxu0 %v2393
    %2478 = vmatpush1.msra.mxu0 %v2392
    %2479 = vmatprep.subr.mxu0 %v2391
    %2480 = vmatpush1.msra.mxu0 %v2390
    %2481 = vmatprep.subr.mxu0 %v2389
    %2482 = vmatpush1.msra.mxu0 %v2388
    %2483 = vmatprep.subr.mxu0 %v2387
    %2484 = vmatpush1.msra.mxu0 %v2386
    %2485 = vmatprep.subr.mxu0 %v2385
    %2486 = vmatpush1.msra.mxu0 %v2384
    %2487 = vmatprep.subr.mxu0 %v2383
    %2488 = vmatpush1.msra.mxu0 %v2382
    %2489 = vmatprep.subr.mxu0 %v2381
    %2490 = vmatpush1.msra.mxu0 %v2380
    %2491 = vmatprep.subr.mxu0 %v2379
    %2492 = vmatpush1.msra.mxu0 %v2378
    %2493 = vmatprep.subr.mxu0 %v2377
    %2494 = vmatpush1.msra.mxu0 %v2376
    %2495 = vmatprep.subr.mxu0 %v2375
    %2496 = vmatpush1.msra.mxu0 %v2374
    %2497 = vmatprep.subr.mxu0 %v2373
    %2498 = vmatpush1.msra.mxu0 %v2372
    %2499 = vmatprep.subr.mxu0 %v2371
    %2500 = vmatpush1.msra.mxu0 %v2370
    %2501 = vmatprep.subr.mxu0 %v2369
    %2502 = vmatpush1.msra.mxu0 %v2368
    %2503 = vmatprep.subr.mxu0 %v2367
    %2504 = vmatpush1.msra.mxu0 %v2366
    %2505 = vmatprep.subr.mxu0 %v2365
    %2506 = vmatpush1.msra.mxu0 %v2364
    %2507 = vmatprep.subr.mxu0 %v2363
    %2508 = vmatpush1.msra.mxu0 %v2362
    %2509 = vmatprep.subr.mxu0 0.0
    %2510 = vmatpush2.msra.mxu0 0.0
    %2511 = vmatprep.subr.mxu0 0.0
    %2512 = vmatpush2.msra.mxu0 0.0
    %2513 = vmatprep.subr.mxu0 0.0
    %2514 = vmatpush2.msra.mxu0 0.0
    %2515 = vmatprep.subr.mxu0 0.0
    %2516 = vmatpush2.msra.mxu0 0.0
    %2517 = vmatprep.subr.mxu0 0.0
    %2518 = vmatpush2.msra.mxu0 0.0
    %2519 = vmatprep.subr.mxu0 0.0
    %2520 = vmatpush2.msra.mxu0 0.0
    %2521 = vmatprep.subr.mxu0 0.0
    %2522 = vmatpush2.msra.mxu0 0.0
    %2523 = vmatprep.subr.mxu0 0.0
    %2524 = vmatpush2.msra.mxu0 0.0
    %2525 = vmatprep.subr.mxu0 0.0
    %2526 = vmatpush2.msra.mxu0 0.0
    %2527 = vmatprep.subr.mxu0 0.0
    %2528 = vmatpush2.msra.mxu0 0.0
    %2529 = vmatprep.subr.mxu0 0.0
    %2530 = vmatpush2.msra.mxu0 0.0
    %2531 = vmatprep.subr.mxu0 0.0
    %2532 = vmatpush2.msra.mxu0 0.0
    %2533 = vmatprep.subr.mxu0 0.0
    %2534 = vmatpush2.msra.mxu0 0.0
    %2535 = vmatprep.subr.mxu0 0.0
    %2536 = vmatpush2.msra.mxu0 0.0
    %2537 = vmatprep.subr.mxu0 0.0
    %2538 = vmatpush2.msra.mxu0 0.0
    %2539 = vmatprep.subr.mxu0 0.0
    %2540 = vmatpush2.msra.mxu0 0.0
    %2541 = vmatprep.mubr.f32.mxu0 0.0
    %2542 = vmatmul.mubr.f32.gmra.mxu0 %v2344
    %v2543 = vpop.f32.mrf.mxu0
    %v2544 = vadd.f32 %v2472, %v2543
    %v2545 = vpop.f32.mrf.mxu0
    %v2546 = vadd.f32 %v2476, %v2545
    %2547 = vmatprep.mubr.f32.mxu0 0.0
    %2548 = vmatmul.mubr.f32.gmra.mxu0 %v2345
    %v2549 = vpop.f32.mrf.mxu0
    %v2550 = vadd.f32 %v2472, %v2549
    %v2551 = vpop.f32.mrf.mxu0
    %v2552 = vadd.f32 %v2476, %v2551
    %2553 = vdwg.mxu0
    %v2554 = vmax.f32 %v2544, 0.0
    %v2555 = vmax.f32 %v2546, 0.0
    %v2556 = vmax.f32 %v2550, 0.0
    %v2557 = vmax.f32 %v2552, 0.0
    %v2558 = vlaneseq
    %v2559 = vshrl.u32 %v2558, 7
    %v2560 = vsub.s32 1, %v2559
    %v2561 = vrot.slane %v110, %v2560
    %2562 = vmatprep.subr.mxu0 0.0
    %2563 = vmatpush1.msra.mxu0 %v2441
    %2564 = vmatprep.subr.mxu0 0.0
    %2565 = vmatpush1.msra.mxu0 %v2440
    %2566 = vmatprep.subr.mxu0 0.0
    %2567 = vmatpush1.msra.mxu0 %v2439
    %2568 = vmatprep.subr.mxu0 0.0
    %2569 = vmatpush1.msra.mxu0 %v2438
    %2570 = vmatprep.subr.mxu0 0.0
    %2571 = vmatpush1.msra.mxu0 %v2437
    %2572 = vmatprep.subr.mxu0 0.0
    %2573 = vmatpush1.msra.mxu0 %v2436
    %2574 = vmatprep.subr.mxu0 0.0
    %2575 = vmatpush1.msra.mxu0 %v2435
    %2576 = vmatprep.subr.mxu0 0.0
    %2577 = vmatpush1.msra.mxu0 %v2434
    %2578 = vmatprep.subr.mxu0 0.0
    %2579 = vmatpush1.msra.mxu0 %v2433
    %2580 = vmatprep.subr.mxu0 0.0
    %2581 = vmatpush1.msra.mxu0 %v2432
    %2582 = vmatprep.subr.mxu0 0.0
    %2583 = vmatpush1.msra.mxu0 %v2431
    %2584 = vmatprep.subr.mxu0 0.0
    %2585 = vmatpush1.msra.mxu0 %v2430
    %2586 = vmatprep.subr.mxu0 0.0
    %2587 = vmatpush1.msra.mxu0 %v2429
    %2588 = vmatprep.subr.mxu0 0.0
    %2589 = vmatpush1.msra.mxu0 %v2428
    %2590 = vmatprep.subr.mxu0 0.0
    %2591 = vmatpush1.msra.mxu0 %v2427
    %2592 = vmatprep.subr.mxu0 0.0
    %2593 = vmatpush1.msra.mxu0 %v2426
    %2594 = vmatprep.subr.mxu0 0.0
    %2595 = vmatpush2.msra.mxu0 %v2457
    %2596 = vmatprep.subr.mxu0 0.0
    %2597 = vmatpush2.msra.mxu0 %v2456
    %2598 = vmatprep.subr.mxu0 0.0
    %2599 = vmatpush2.msra.mxu0 %v2455
    %2600 = vmatprep.subr.mxu0 0.0
    %2601 = vmatpush2.msra.mxu0 %v2454
    %2602 = vmatprep.subr.mxu0 0.0
    %2603 = vmatpush2.msra.mxu0 %v2453
    %2604 = vmatprep.subr.mxu0 0.0
    %2605 = vmatpush2.msra.mxu0 %v2452
    %2606 = vmatprep.subr.mxu0 0.0
    %2607 = vmatpush2.msra.mxu0 %v2451
    %2608 = vmatprep.subr.mxu0 0.0
    %2609 = vmatpush2.msra.mxu0 %v2450
    %2610 = vmatprep.subr.mxu0 0.0
    %2611 = vmatpush2.msra.mxu0 %v2449
    %2612 = vmatprep.subr.mxu0 0.0
    %2613 = vmatpush2.msra.mxu0 %v2448
    %2614 = vmatprep.subr.mxu0 0.0
    %2615 = vmatpush2.msra.mxu0 %v2447
    %2616 = vmatprep.subr.mxu0 0.0
    %2617 = vmatpush2.msra.mxu0 %v2446
    %2618 = vmatprep.subr.mxu0 0.0
    %2619 = vmatpush2.msra.mxu0 %v2445
    %2620 = vmatprep.subr.mxu0 0.0
    %2621 = vmatpush2.msra.mxu0 %v2444
    %2622 = vmatprep.subr.mxu0 0.0
    %2623 = vmatpush2.msra.mxu0 %v2443
    %2624 = vmatprep.subr.mxu0 0.0
    %2625 = vmatpush2.msra.mxu0 %v2442
    %2626 = vmatprep.mubr.f32.mxu0 %v2555
    %2627 = vmatmul.mubr.f32.gmra.mxu0 %v2554
    %v2628 = vpop.f32.mrf.mxu0
    %v2629 = vadd.f32 %v2561, %v2628
    %v2630 = vpop.f32.mrf.mxu0
    %2631 = vmatprep.mubr.f32.mxu0 %v2557
    %2632 = vmatmul.mubr.f32.gmra.mxu0 %v2556
    %v2633 = vpop.f32.mrf.mxu0
    %v2634 = vadd.f32 %v2561, %v2633
    %v2635 = vpop.f32.mrf.mxu0
    %2636 = vdwg.mxu0
    %v2637 = vadd.f32 %v2344, %v2629
    %v2638 = vadd.f32 %v2345, %v2634
    %2639 = vadd.xlane.f32.xlu0 %v2637
    %v2640 = vpop.xlane.xlu0 %2639
    %2641 = vadd.xlane.f32.xlu0 %v2638
    %v2642 = vpop.xlane.xlu0 %2641
    %v2643 = vmul.f32 %v2640, %v2315
    %v2644 = vmul.f32 %v2642, %v2315
    %v2645 = vsub.f32 %v2637, %v2643
    %v2646 = vsub.f32 %v2638, %v2644
    %v2647 = vmul.f32 %v2645, %v2645
    %v2648 = vmul.f32 %v2646, %v2646
    %2649 = vadd.xlane.f32.xlu0 %v2647
    %v2650 = vpop.xlane.xlu0 %2649
    %2651 = vadd.xlane.f32.xlu0 %v2648
    %v2652 = vpop.xlane.xlu0 %2651
    %v2653 = vmul.f32 %v2650, %v2315
    %v2654 = vmul.f32 %v2652, %v2315
    %v2655 = vadd.f32 %v2653, 1e-05
    %v2656 = vadd.f32 %v2654, 1e-05
    %v2657 = vrsqrt.pop %v2655
    %v2658 = vrsqrt.pop %v2656
    %v2659 = vmul.f32 %v2645, %v2657
    %v2660 = vmul.f32 %v2646, %v2658
    %v2661 = vlaneseq
    %v2662 = vshrl.u32 %v2661, 7
    %v2663 = vsub.s32 6, %v2662
    %v2664 = vrot.slane %v109, %v2663
    %v2665 = vmul.f32 %v2659, %v2664
    %v2666 = vmul.f32 %v2660, %v2664
    %v2667 = vlaneseq
    %v2668 = vshrl.u32 %v2667, 7
    %v2669 = vsub.s32 7, %v2668
    %v2670 = vrot.slane %v109, %v2669
    %v2671 = vadd.f32 %v2665, %v2670
    %v2672 = vadd.f32 %v2666, %v2670
    %2673 = vst [vmem:[#allocation13] sm:$0xff] %v2671
    %2674 = vst [vmem:[#allocation13 + $0x8] sm:$0xff] %v2672
    // Predicated region
    $region54: #{tpu_custom_call.1} parent=1 // pred_check
      _
    $region55: #{tpu_custom_call.1} parent=1 // pred_check_branch
      %2676 = sbr.rel (0) target = $region57
    $region56: #{tpu_custom_call.1} parent=1 // pred_region
      %s2678 = ssub.s32 256, 256
      %2679 = vsyncadd [#allocation4], %s2678
      %s2680 = sshll.u32 [#allocation13], 4
      %s2681 = int_to_ptr.vmem [resolvable:$true] %s2680
      %2686 = dma.vmem_to_hbm [thread:$0]  %s2681, 256, %s7, [#allocation4], 128, 128, 8
    $region57: #{tpu_custom_call.1} parent=1 // pred_fallthru
      _
    // Predicated region
    $region58: #{tpu_custom_call.1} parent=1 // pred_check
      _
    $region59: #{tpu_custom_call.1} parent=1 // pred_check_branch
      %2688 = sbr.rel (0) target = $region61
    $region60: #{tpu_custom_call.1} parent=1 // pred_region
      %2689 = dma.done [#allocation4], 256
    $region61: #{tpu_custom_call.1} parent=1 // pred_fallthru
      _
    %2690 = vsyncpa [#allocation3], 1
    %2691 = vsyncpa [#allocation6], 1
    %2692 = vsyncpa [#allocation9], 1
    %2693 = vsyncpa [#allocation12], 1
    %2694 = vsyncpa [#allocation4], 1

</llo_original>
